<compile_context>
chip_gen: v7x
topology: tpu7x:2x2x1
jax: 0.10.0
libtpu: 0.0.40
codegen_flags: <defaults>
</compile_context>

<pallas_src>
import functools
import math

import jax
import jax.numpy as jnp
from jax.experimental import pallas as pl
from jax.experimental.pallas import tpu as pltpu


def _layernorm(x, gamma, beta, eps=1e-6):
    # One-pass statistics: mean and E[x^2] (independent reductions),
    # var = E[x^2] - mean^2 (clamped for numerical safety).
    mean = jnp.mean(x, axis=-1, keepdims=True)
    ex2 = jnp.mean(x * x, axis=-1, keepdims=True)
    var = jnp.maximum(ex2 - mean * mean, 0.0)
    return (x - mean) * jax.lax.rsqrt(var + eps) * gamma + beta


def _erf(x):
    # Abramowitz & Stegun 7.1.26 rational approximation, |err| < ~1.5e-7
    # (exact-erf parity with nn.GELU).  Reciprocal goes to the EUP slot;
    # the sign handling is a single select instead of jnp.sign.
    a1, a2, a3, a4, a5 = 0.254829592, -0.284496736, 1.421413741, -1.453152027, 1.061405429
    p = 0.3275911
    ax = jnp.abs(x)
    t = pl.reciprocal(1.0 + p * ax, approx=True)
    poly = ((((a5 * t + a4) * t + a3) * t + a2) * t + a1) * t
    r = 1.0 - poly * jnp.exp(-ax * ax)
    return jnp.where(x < 0.0, -r, r)


def _gelu_exact(x):
    # nn.GELU default = exact erf-based GELU
    return 0.5 * x * (1.0 + _erf(x * (1.0 / math.sqrt(2.0))))


def encoder_block_kernel(num_heads, s_valid, mlp_chunk, return_attn,
                         x_ref,
                         g1_ref, b1_ref,
                         wqkv_ref, bqkv_ref,
                         wo_ref, bo_ref,
                         g2_ref, b2_ref,
                         w1_ref, bm1_ref, w2_ref, bm2_ref,
                         out_ref, *rest):
    if return_attn:
        attn_ref, hv_ref = rest
    else:
        (hv_ref,) = rest
        attn_ref = None

    x = x_ref[0]                      # (S, D) f32 (S possibly padded)
    S, D = x.shape
    hd = D // num_heads
    bf16 = jnp.bfloat16

    # ---- ln_1 ----
    h = _layernorm(x, g1_ref[...], b1_ref[...])

    # ---- self-attention: fused QKV projection (one wide bf16 matmul) ----
    # 1/sqrt(hd) is already folded into the q slice of wqkv / bqkv.
    qkv = jnp.dot(h.astype(bf16), wqkv_ref[...],
                  preferred_element_type=jnp.float32) + bqkv_ref[...]
    # Cast ONCE to bf16; only this copy stays live across the head loop.
    qkv = qkv.astype(bf16)

    # Mask padded key columns out of the softmax (static: s_valid known at trace).
    if s_valid < S:
        col = jax.lax.broadcasted_iota(jnp.int32, (1, S), 1)
        key_bias = jnp.where(col < s_valid, 0.0, -1e30).astype(jnp.float32)
    else:
        key_bias = None

    if return_attn:
        attn_ref[0] = jnp.zeros((S, S), jnp.float32)

    # ---- per-head attention; head outputs go into a VMEM scratch (Ref, not a
    #      live value), out-projection done once after the loop.
    for i in range(num_heads):
        qh = qkv[:, i * hd:(i + 1) * hd]
        kh = qkv[:, D + i * hd:D + (i + 1) * hd]
        vh = qkv[:, 2 * D + i * hd:2 * D + (i + 1) * hd]
        s = jnp.dot(qh, kh.T, preferred_element_type=jnp.float32)    # (S, S)
        if key_bias is not None:
            s = s + key_bias
        s = s - jnp.max(s, axis=-1, keepdims=True)
        e = jnp.exp(s)
        denom = jnp.sum(e, axis=-1, keepdims=True)
        # exact reciprocal when the weights are returned (x1000 parity),
        # approx (EUP vrcp) otherwise.
        p = e * pl.reciprocal(denom, approx=not return_attn)
        if return_attn:
            attn_ref[0] += p
        hv_ref[:, i * hd:(i + 1) * hd] = jnp.dot(
            p.astype(bf16), vh, preferred_element_type=jnp.float32)  # (S, hd)

    # Single dense output projection: full K=D contraction fills the MXU.
    attn_out = jnp.dot(hv_ref[...].astype(bf16), wo_ref[...],
                       preferred_element_type=jnp.float32)

    # dropout layers are identity in eval mode
    x2 = attn_out + bo_ref[...] + x                                   # residual 1

    if return_attn:
        # Averaged-over-heads attention weights, *1000 as in the reference.
        attn_ref[0] *= (1000.0 / num_heads)

    # ---- ln_2 + MLP, tiled over the M axis (no full (S, M) live tensor) ----
    y = _layernorm(x2, g2_ref[...], b2_ref[...]).astype(bf16)
    M = w1_ref.shape[1]
    acc = jnp.zeros((S, D), jnp.float32)
    for m0 in range(0, M, mlp_chunk):
        c = min(mlp_chunk, M - m0)
        t = jnp.dot(y, w1_ref[:, m0:m0 + c],
                    preferred_element_type=jnp.float32) + bm1_ref[:, m0:m0 + c]
        t = _gelu_exact(t)
        acc = acc + jnp.dot(t.astype(bf16), w2_ref[m0:m0 + c, :],
                            preferred_element_type=jnp.float32)

    out_ref[0] = x2 + acc + bm2_ref[...]                              # residual 2


def _vmem_limit_bytes():
    # Cap at 64 MiB (fine on v5e/v6e, 128 MiB physical) but never request more
    # than ~3/4 of the physical per-core VMEM (v7x has only 64 MiB/TC), leaving
    # headroom for Mosaic internal scratch and spills.
    cap = 128 * 1024 * 1024
    try:
        info = pltpu.get_tpu_info()
        cap = int(getattr(info, "vmem_capacity_bytes", cap))
    except Exception:
        pass
    return min(64 * 1024 * 1024, (cap * 3) // 4)


def encoder_block(x, params, num_heads, *, return_attn_weights=True,
                  mlp_chunk=512, seq_pad_multiple=8):
    B, S, D = x.shape
    M = params["w1"].shape[1]
    hd = D // num_heads
    scale = 1.0 / math.sqrt(hd)
    bf16 = jnp.bfloat16

    # Pad S to a sublane multiple for clean tiling (pad keys masked in-kernel,
    # pad rows sliced off below).
    S_pad = -(-S // seq_pad_multiple) * seq_pad_multiple
    x_in = x if S_pad == S else jnp.pad(x, ((0, 0), (0, S_pad - S), (0, 0)))

    # Fuse q/k/v weights into a single (D, 3D) bf16 matrix, folding the
    # softmax scale into the q portion (and its bias).
    wqkv = jnp.concatenate(
        [params["wq"] * scale, params["wk"], params["wv"]], axis=1).astype(bf16)
    bqkv = jnp.concatenate(
        [params["bq"] * scale, params["bk"], params["bv"]], axis=1)   # f32 (1, 3D)
    wo = params["wo"].astype(bf16)
    w1 = params["w1"].astype(bf16)
    w2 = params["w2"].astype(bf16)

    mlp_chunk = min(mlp_chunk, M)

    kernel = functools.partial(encoder_block_kernel, num_heads, S, mlp_chunk,
                               return_attn_weights)

    args = (x_in,
            params["g1"], params["b1"],
            wqkv, bqkv,
            wo, params["bo"],
            params["g2"], params["b2"],
            w1, params["bm1"], w2, params["bm2"])

    if return_attn_weights:
        out_shape = (jax.ShapeDtypeStruct((B, S_pad, D), jnp.float32),
                     jax.ShapeDtypeStruct((B, S_pad, S_pad), jnp.float32))
        out_specs = (pl.BlockSpec((1, S_pad, D), lambda b: (b, 0, 0)),
                     pl.BlockSpec((1, S_pad, S_pad), lambda b: (b, 0, 0)))
    else:
        out_shape = jax.ShapeDtypeStruct((B, S_pad, D), jnp.float32)
        out_specs = pl.BlockSpec((1, S_pad, D), lambda b: (b, 0, 0))

    scratch_shapes = [pltpu.VMEM((S_pad, D), jnp.float32)]   # per-head attn outputs

    def run(single_buffer_weights):
        def wspec(shape):
            # Replicated (weight) operand: same block every grid step.
            # Single-buffered when supported: constant index_map means double
            # buffering only doubles weight-resident VMEM.
            if single_buffer_weights:
                return pl.BlockSpec(shape, lambda b: (0, 0),
                                    pipeline_mode=pl.Buffered(1))
            return pl.BlockSpec(shape, lambda b: (0, 0))

        in_specs = [
            pl.BlockSpec((1, S_pad, D), lambda b: (b, 0, 0)),   # x
            wspec((1, D)), wspec((1, D)),                       # ln_1 gamma / beta
            wspec((D, 3 * D)), wspec((1, 3 * D)),               # fused Wqkv, bqkv
            wspec((D, D)), wspec((1, D)),                       # Wo, bo
            wspec((1, D)), wspec((1, D)),                       # ln_2 gamma / beta
            wspec((D, M)), wspec((1, M)),                       # MLP W1, b1
            wspec((M, D)), wspec((1, D)),                       # MLP W2, b2
        ]
        return pl.pallas_call(
            kernel,
            out_shape=out_shape,
            grid=(B,),
            in_specs=in_specs,
            out_specs=out_specs,
            scratch_shapes=scratch_shapes,
            compiler_params=pltpu.CompilerParams(
                dimension_semantics=("parallel",),
                vmem_limit_bytes=_vmem_limit_bytes()),
        )(*args)

    try:
        res = run(True)
    except Exception:
        # Fallback for jax builds where BlockSpec.pipeline_mode / pl.Buffered(1)
        # is not supported: default (double-buffered) weight specs.
        res = run(False)

    if return_attn_weights:
        out, attn = res
        if S_pad != S:
            out = out[:, :S, :]
            attn = attn[:, :S, :S]
        return out, attn
    out = res
    if S_pad != S:
        out = out[:, :S, :]
    return out


def init_params(key, hidden_dim, mlp_dim):
    D, M = hidden_dim, mlp_dim
    keys = jax.random.split(key, 8)

    def xavier(k, shape):
        fan_in, fan_out = shape
        lim = math.sqrt(6.0 / (fan_in + fan_out))
        return jax.random.uniform(k, shape, jnp.float32, -lim, lim)

    return {
        # LayerNorm init (ones / zeros), stored as (1, D) for 2-D VMEM layout
        "g1": jnp.ones((1, D), jnp.float32),
        "b1": jnp.zeros((1, D), jnp.float32),
        "g2": jnp.ones((1, D), jnp.float32),
        "b2": jnp.zeros((1, D), jnp.float32),
        # attention in-projection (split into q/k/v, math-oriented: x @ W)
        "wq": xavier(keys[0], (D, D)),
        "wk": xavier(keys[1], (D, D)),
        "wv": xavier(keys[2], (D, D)),
        "bq": jnp.zeros((1, D), jnp.float32),
        "bk": jnp.zeros((1, D), jnp.float32),
        "bv": jnp.zeros((1, D), jnp.float32),
        # attention out-projection
        "wo": xavier(keys[3], (D, D)),
        "bo": jnp.zeros((1, D), jnp.float32),
        # MLP (xavier weights, small-normal biases like MLPBlock init)
        "w1": xavier(keys[4], (D, M)),
        "bm1": 1e-6 * jax.random.normal(keys[5], (1, M), jnp.float32),
        "w2": xavier(keys[6], (M, D)),
        "bm2": 1e-6 * jax.random.normal(keys[7], (1, D), jnp.float32),
    }


if __name__ == "__main__":
    B, S, D, M, H = 2, 8, 32, 64, 4   # batch, seq, hidden_dim, mlp_dim, heads

    root = jax.random.PRNGKey(0)
    k_x, k_p = jax.random.split(root)
    x = jax.random.normal(k_x, (B, S, D), jnp.float32)
    params = init_params(k_p, D, M)

    # Full path: block output + averaged attention weights (*1000).
    out, attn_weights = encoder_block(x, params, H, return_attn_weights=True)
    jax.block_until_ready(out)
    jax.block_until_ready(attn_weights)

    assert out.shape == (B, S, D)
    assert attn_weights.shape == (B, S, S)
    assert bool(jnp.all(jnp.isfinite(out)))
    assert bool(jnp.all(jnp.isfinite(attn_weights)))

    # Fast path: attention-weights output dropped (no O(S^2) HBM writeback).
    out_only = encoder_block(x, params, H, return_attn_weights=False)
    jax.block_until_ready(out_only)
    assert out_only.shape == (B, S, D)
    assert bool(jnp.all(jnp.isfinite(out_only)))

    print("KERNEL_OK")
</pallas_src>

<mosaic_0001>
module attributes {stable_mosaic.version = 11 : i64} {
  func.func @encoder_block_kernel(%arg0: i32, %arg1: memref<1x8x32xf32, #tpu.memory_space<vmem>>, %arg2: memref<1x32xf32, #tpu.memory_space<vmem>>, %arg3: memref<1x32xf32, #tpu.memory_space<vmem>>, %arg4: memref<32x96xbf16, #tpu.memory_space<vmem>>, %arg5: memref<1x96xf32, #tpu.memory_space<vmem>>, %arg6: memref<32x32xbf16, #tpu.memory_space<vmem>>, %arg7: memref<1x32xf32, #tpu.memory_space<vmem>>, %arg8: memref<1x32xf32, #tpu.memory_space<vmem>>, %arg9: memref<1x32xf32, #tpu.memory_space<vmem>>, %arg10: memref<32x64xbf16, #tpu.memory_space<vmem>>, %arg11: memref<1x64xf32, #tpu.memory_space<vmem>>, %arg12: memref<64x32xbf16, #tpu.memory_space<vmem>>, %arg13: memref<1x32xf32, #tpu.memory_space<vmem>>, %arg14: memref<1x8x32xf32, #tpu.memory_space<vmem>>, %arg15: memref<1x8x8xf32, #tpu.memory_space<vmem>>, %arg16: memref<8x32xf32, #tpu.memory_space<vmem>>) attributes {dimension_semantics = [#tpu.dimension_semantics<parallel>], iteration_bounds = array<i64: 2>, scalar_prefetch = 0 : i64, scratch_operands = 1 : i64, tpu.core_type = #tpu.core_type<tc>, window_params = [{transform_indices = @transform_0, window_bounds = array<i64: 1, 8, 32>}, {pipeline_mode = #tpu.pipeline_mode<synchronous>, transform_indices = @transform_1, window_bounds = array<i64: 1, 32>}, {pipeline_mode = #tpu.pipeline_mode<synchronous>, transform_indices = @transform_2, window_bounds = array<i64: 1, 32>}, {pipeline_mode = #tpu.pipeline_mode<synchronous>, transform_indices = @transform_3, window_bounds = array<i64: 32, 96>}, {pipeline_mode = #tpu.pipeline_mode<synchronous>, transform_indices = @transform_4, window_bounds = array<i64: 1, 96>}, {pipeline_mode = #tpu.pipeline_mode<synchronous>, transform_indices = @transform_5, window_bounds = array<i64: 32, 32>}, {pipeline_mode = #tpu.pipeline_mode<synchronous>, transform_indices = @transform_6, window_bounds = array<i64: 1, 32>}, {pipeline_mode = #tpu.pipeline_mode<synchronous>, transform_indices = @transform_7, window_bounds = array<i64: 1, 32>}, {pipeline_mode = #tpu.pipeline_mode<synchronous>, transform_indices = @transform_8, window_bounds = array<i64: 1, 32>}, {pipeline_mode = #tpu.pipeline_mode<synchronous>, transform_indices = @transform_9, window_bounds = array<i64: 32, 64>}, {pipeline_mode = #tpu.pipeline_mode<synchronous>, transform_indices = @transform_10, window_bounds = array<i64: 1, 64>}, {pipeline_mode = #tpu.pipeline_mode<synchronous>, transform_indices = @transform_11, window_bounds = array<i64: 64, 32>}, {pipeline_mode = #tpu.pipeline_mode<synchronous>, transform_indices = @transform_12, window_bounds = array<i64: 1, 32>}, {transform_indices = @transform_13, window_bounds = array<i64: 1, 8, 32>}, {transform_indices = @transform_14, window_bounds = array<i64: 1, 8, 8>}]} {
    %c0 = arith.constant 0 : index
    %c0_0 = arith.constant 0 : index
    %c0_1 = arith.constant 0 : index
    %0 = vector.load %arg1[%c0, %c0_0, %c0_1] : memref<1x8x32xf32, #tpu.memory_space<vmem>>, vector<1x8x32xf32>
    %1 = vector.shape_cast %0 : vector<1x8x32xf32> to vector<8x32xf32>
    %c0_2 = arith.constant 0 : index
    %c0_3 = arith.constant 0 : index
    %2 = vector.load %arg2[%c0_2, %c0_3] : memref<1x32xf32, #tpu.memory_space<vmem>>, vector<1x32xf32>
    %c0_4 = arith.constant 0 : index
    %c0_5 = arith.constant 0 : index
    %3 = vector.load %arg3[%c0_4, %c0_5] : memref<1x32xf32, #tpu.memory_space<vmem>>, vector<1x32xf32>
    %cst = arith.constant dense<0.000000e+00> : vector<8xf32>
    %4 = vector.multi_reduction <add>, %1, %cst [1] : vector<8x32xf32> to vector<8xf32>
    %5 = vector.shape_cast %4 : vector<8xf32> to vector<8x1xf32>
    %cst_6 = arith.constant 3.200000e+01 : f32
    %6 = vector.broadcast %cst_6 : f32 to vector<8x1xf32>
    %7 = arith.divf %5, %6 : vector<8x1xf32>
    %8 = arith.mulf %1, %1 : vector<8x32xf32>
    %cst_7 = arith.constant dense<0.000000e+00> : vector<8xf32>
    %9 = vector.multi_reduction <add>, %8, %cst_7 [1] : vector<8x32xf32> to vector<8xf32>
    %10 = vector.shape_cast %9 : vector<8xf32> to vector<8x1xf32>
    %cst_8 = arith.constant 3.200000e+01 : f32
    %11 = vector.broadcast %cst_8 : f32 to vector<8x1xf32>
    %12 = arith.divf %10, %11 : vector<8x1xf32>
    %13 = arith.mulf %7, %7 : vector<8x1xf32>
    %14 = arith.subf %12, %13 : vector<8x1xf32>
    %cst_9 = arith.constant 0.000000e+00 : f32
    %15 = vector.broadcast %cst_9 : f32 to vector<8x1xf32>
    %16 = arith.maximumf %14, %15 : vector<8x1xf32>
    %17 = vector.broadcast %7 : vector<8x1xf32> to vector<8x32xf32>
    %18 = arith.subf %1, %17 : vector<8x32xf32>
    %cst_10 = arith.constant 9.99999997E-7 : f32
    %19 = vector.broadcast %cst_10 : f32 to vector<8x1xf32>
    %20 = arith.addf %16, %19 : vector<8x1xf32>
    %21 = math.rsqrt %20 : vector<8x1xf32>
    %22 = vector.broadcast %21 : vector<8x1xf32> to vector<8x32xf32>
    %23 = arith.mulf %18, %22 : vector<8x32xf32>
    %24 = vector.broadcast %2 : vector<1x32xf32> to vector<8x32xf32>
    %25 = arith.mulf %23, %24 : vector<8x32xf32>
    %26 = vector.broadcast %3 : vector<1x32xf32> to vector<8x32xf32>
    %27 = arith.addf %25, %26 : vector<8x32xf32>
    %28 = arith.truncf %27 : vector<8x32xf32> to vector<8x32xbf16>
    %c0_11 = arith.constant 0 : index
    %c0_12 = arith.constant 0 : index
    %29 = vector.load %arg4[%c0_11, %c0_12] : memref<32x96xbf16, #tpu.memory_space<vmem>>, vector<32x96xbf16>
    %cst_13 = arith.constant dense<0.000000e+00> : vector<8x96xf32>
    %30 = tpu.matmul %28, %29, %cst_13 {dimension_numbers = #tpu.dot_dimension_numbers<[1], [0], [0], [1], [0, 0, 1, 1], [], []>} : vector<8x32xbf16>, vector<32x96xbf16>, vector<8x96xf32> -> vector<8x96xf32>
    %c0_14 = arith.constant 0 : index
    %c0_15 = arith.constant 0 : index
    %31 = vector.load %arg5[%c0_14, %c0_15] : memref<1x96xf32, #tpu.memory_space<vmem>>, vector<1x96xf32>
    %32 = vector.broadcast %31 : vector<1x96xf32> to vector<8x96xf32>
    %33 = arith.addf %30, %32 : vector<8x96xf32>
    %34 = arith.truncf %33 : vector<8x96xf32> to vector<8x96xbf16>
    %cst_16 = arith.constant 0.000000e+00 : f32
    %35 = vector.broadcast %cst_16 : f32 to vector<8x8xf32>
    %c0_17 = arith.constant 0 : index
    %c0_18 = arith.constant 0 : index
    %c0_19 = arith.constant 0 : index
    %36 = vector.load %arg15[%c0_17, %c0_18, %c0_19] : memref<1x8x8xf32, #tpu.memory_space<vmem>>, vector<1x8x8xf32>
    %37 = vector.shape_cast %36 : vector<1x8x8xf32> to vector<8x8xf32>
    %38 = vector.shape_cast %35 : vector<8x8xf32> to vector<1x8x8xf32>
    tpu.vector_store %arg15[%c0_17, %c0_18, %c0_19], %38 {strides = array<i32>} : memref<1x8x8xf32, #tpu.memory_space<vmem>>, vector<1x8x8xf32>,
    %39 = vector.extract_strided_slice %34 {offsets = [0, 0], sizes = [8, 8], strides = [1, 1]} : vector<8x96xbf16> to vector<8x8xbf16>
    %40 = vector.extract_strided_slice %34 {offsets = [0, 32], sizes = [8, 8], strides = [1, 1]} : vector<8x96xbf16> to vector<8x8xbf16>
    %41 = vector.extract_strided_slice %34 {offsets = [0, 64], sizes = [8, 8], strides = [1, 1]} : vector<8x96xbf16> to vector<8x8xbf16>
    %42 = tpu.transpose %40, [1, 0] : vector<8x8xbf16> -> vector<8x8xbf16>
    %cst_20 = arith.constant dense<0.000000e+00> : vector<8x8xf32>
    %43 = tpu.matmul %39, %42, %cst_20 {dimension_numbers = #tpu.dot_dimension_numbers<[1], [0], [0], [1], [0, 0, 1, 1], [], []>} : vector<8x8xbf16>, vector<8x8xbf16>, vector<8x8xf32> -> vector<8x8xf32>
    %cst_21 = arith.constant dense<0xFF800000> : vector<8xf32>
    %44 = vector.multi_reduction <maximumf>, %43, %cst_21 [1] : vector<8x8xf32> to vector<8xf32>
    %45 = vector.shape_cast %44 : vector<8xf32> to vector<8x1xf32>
    %46 = vector.broadcast %45 : vector<8x1xf32> to vector<8x8xf32>
    %47 = arith.subf %43, %46 : vector<8x8xf32>
    %48 = math.exp %47 : vector<8x8xf32>
    %cst_22 = arith.constant dense<0.000000e+00> : vector<8xf32>
    %49 = vector.multi_reduction <add>, %48, %cst_22 [1] : vector<8x8xf32> to vector<8xf32>
    %50 = vector.shape_cast %49 : vector<8xf32> to vector<8x1xf32>
    %51 = tpu.reciprocal %50 : vector<8x1xf32> -> vector<8x1xf32>
    %52 = vector.broadcast %51 : vector<8x1xf32> to vector<8x8xf32>
    %53 = arith.mulf %48, %52 : vector<8x8xf32>
    %c0_23 = arith.constant 0 : index
    %c0_24 = arith.constant 0 : index
    %c0_25 = arith.constant 0 : index
    %54 = vector.load %arg15[%c0_23, %c0_24, %c0_25] : memref<1x8x8xf32, #tpu.memory_space<vmem>>, vector<1x8x8xf32>
    %55 = vector.shape_cast %54 : vector<1x8x8xf32> to vector<8x8xf32>
    %56 = arith.addf %55, %53 : vector<8x8xf32>
    %c0_26 = arith.constant 0 : index
    %c0_27 = arith.constant 0 : index
    %c0_28 = arith.constant 0 : index
    %57 = vector.load %arg15[%c0_26, %c0_27, %c0_28] : memref<1x8x8xf32, #tpu.memory_space<vmem>>, vector<1x8x8xf32>
    %58 = vector.shape_cast %57 : vector<1x8x8xf32> to vector<8x8xf32>
    %59 = vector.shape_cast %56 : vector<8x8xf32> to vector<1x8x8xf32>
    tpu.vector_store %arg15[%c0_26, %c0_27, %c0_28], %59 {strides = array<i32>} : memref<1x8x8xf32, #tpu.memory_space<vmem>>, vector<1x8x8xf32>,
    %60 = arith.truncf %53 : vector<8x8xf32> to vector<8x8xbf16>
    %cst_29 = arith.constant dense<0.000000e+00> : vector<8x8xf32>
    %61 = tpu.matmul %60, %41, %cst_29 {dimension_numbers = #tpu.dot_dimension_numbers<[1], [0], [0], [1], [0, 0, 1, 1], [], []>} : vector<8x8xbf16>, vector<8x8xbf16>, vector<8x8xf32> -> vector<8x8xf32>
    %c0_30 = arith.constant 0 : index
    %c0_31 = arith.constant 0 : index
    %62 = vector.load %arg16[%c0_30, %c0_31] : memref<8x32xf32, #tpu.memory_space<vmem>>, vector<8x8xf32>
    tpu.vector_store %arg16[%c0_30, %c0_31], %61 {strides = array<i32>} : memref<8x32xf32, #tpu.memory_space<vmem>>, vector<8x8xf32>,
    %63 = vector.extract_strided_slice %34 {offsets = [0, 8], sizes = [8, 8], strides = [1, 1]} : vector<8x96xbf16> to vector<8x8xbf16>
    %64 = vector.extract_strided_slice %34 {offsets = [0, 40], sizes = [8, 8], strides = [1, 1]} : vector<8x96xbf16> to vector<8x8xbf16>
    %65 = vector.extract_strided_slice %34 {offsets = [0, 72], sizes = [8, 8], strides = [1, 1]} : vector<8x96xbf16> to vector<8x8xbf16>
    %66 = tpu.transpose %64, [1, 0] : vector<8x8xbf16> -> vector<8x8xbf16>
    %cst_32 = arith.constant dense<0.000000e+00> : vector<8x8xf32>
    %67 = tpu.matmul %63, %66, %cst_32 {dimension_numbers = #tpu.dot_dimension_numbers<[1], [0], [0], [1], [0, 0, 1, 1], [], []>} : vector<8x8xbf16>, vector<8x8xbf16>, vector<8x8xf32> -> vector<8x8xf32>
    %cst_33 = arith.constant dense<0xFF800000> : vector<8xf32>
    %68 = vector.multi_reduction <maximumf>, %67, %cst_33 [1] : vector<8x8xf32> to vector<8xf32>
    %69 = vector.shape_cast %68 : vector<8xf32> to vector<8x1xf32>
    %70 = vector.broadcast %69 : vector<8x1xf32> to vector<8x8xf32>
    %71 = arith.subf %67, %70 : vector<8x8xf32>
    %72 = math.exp %71 : vector<8x8xf32>
    %cst_34 = arith.constant dense<0.000000e+00> : vector<8xf32>
    %73 = vector.multi_reduction <add>, %72, %cst_34 [1] : vector<8x8xf32> to vector<8xf32>
    %74 = vector.shape_cast %73 : vector<8xf32> to vector<8x1xf32>
    %75 = tpu.reciprocal %74 : vector<8x1xf32> -> vector<8x1xf32>
    %76 = vector.broadcast %75 : vector<8x1xf32> to vector<8x8xf32>
    %77 = arith.mulf %72, %76 : vector<8x8xf32>
    %c0_35 = arith.constant 0 : index
    %c0_36 = arith.constant 0 : index
    %c0_37 = arith.constant 0 : index
    %78 = vector.load %arg15[%c0_35, %c0_36, %c0_37] : memref<1x8x8xf32, #tpu.memory_space<vmem>>, vector<1x8x8xf32>
    %79 = vector.shape_cast %78 : vector<1x8x8xf32> to vector<8x8xf32>
    %80 = arith.addf %79, %77 : vector<8x8xf32>
    %c0_38 = arith.constant 0 : index
    %c0_39 = arith.constant 0 : index
    %c0_40 = arith.constant 0 : index
    %81 = vector.load %arg15[%c0_38, %c0_39, %c0_40] : memref<1x8x8xf32, #tpu.memory_space<vmem>>, vector<1x8x8xf32>
    %82 = vector.shape_cast %81 : vector<1x8x8xf32> to vector<8x8xf32>
    %83 = vector.shape_cast %80 : vector<8x8xf32> to vector<1x8x8xf32>
    tpu.vector_store %arg15[%c0_38, %c0_39, %c0_40], %83 {strides = array<i32>} : memref<1x8x8xf32, #tpu.memory_space<vmem>>, vector<1x8x8xf32>,
    %84 = arith.truncf %77 : vector<8x8xf32> to vector<8x8xbf16>
    %cst_41 = arith.constant dense<0.000000e+00> : vector<8x8xf32>
    %85 = tpu.matmul %84, %65, %cst_41 {dimension_numbers = #tpu.dot_dimension_numbers<[1], [0], [0], [1], [0, 0, 1, 1], [], []>} : vector<8x8xbf16>, vector<8x8xbf16>, vector<8x8xf32> -> vector<8x8xf32>
    %c0_42 = arith.constant 0 : index
    %c8 = arith.constant 8 : index
    %86 = vector.load %arg16[%c0_42, %c8] : memref<8x32xf32, #tpu.memory_space<vmem>>, vector<8x8xf32>
    tpu.vector_store %arg16[%c0_42, %c8], %85 {strides = array<i32>} : memref<8x32xf32, #tpu.memory_space<vmem>>, vector<8x8xf32>,
    %87 = vector.extract_strided_slice %34 {offsets = [0, 16], sizes = [8, 8], strides = [1, 1]} : vector<8x96xbf16> to vector<8x8xbf16>
    %88 = vector.extract_strided_slice %34 {offsets = [0, 48], sizes = [8, 8], strides = [1, 1]} : vector<8x96xbf16> to vector<8x8xbf16>
    %89 = vector.extract_strided_slice %34 {offsets = [0, 80], sizes = [8, 8], strides = [1, 1]} : vector<8x96xbf16> to vector<8x8xbf16>
    %90 = tpu.transpose %88, [1, 0] : vector<8x8xbf16> -> vector<8x8xbf16>
    %cst_43 = arith.constant dense<0.000000e+00> : vector<8x8xf32>
    %91 = tpu.matmul %87, %90, %cst_43 {dimension_numbers = #tpu.dot_dimension_numbers<[1], [0], [0], [1], [0, 0, 1, 1], [], []>} : vector<8x8xbf16>, vector<8x8xbf16>, vector<8x8xf32> -> vector<8x8xf32>
    %cst_44 = arith.constant dense<0xFF800000> : vector<8xf32>
    %92 = vector.multi_reduction <maximumf>, %91, %cst_44 [1] : vector<8x8xf32> to vector<8xf32>
    %93 = vector.shape_cast %92 : vector<8xf32> to vector<8x1xf32>
    %94 = vector.broadcast %93 : vector<8x1xf32> to vector<8x8xf32>
    %95 = arith.subf %91, %94 : vector<8x8xf32>
    %96 = math.exp %95 : vector<8x8xf32>
    %cst_45 = arith.constant dense<0.000000e+00> : vector<8xf32>
    %97 = vector.multi_reduction <add>, %96, %cst_45 [1] : vector<8x8xf32> to vector<8xf32>
    %98 = vector.shape_cast %97 : vector<8xf32> to vector<8x1xf32>
    %99 = tpu.reciprocal %98 : vector<8x1xf32> -> vector<8x1xf32>
    %100 = vector.broadcast %99 : vector<8x1xf32> to vector<8x8xf32>
    %101 = arith.mulf %96, %100 : vector<8x8xf32>
    %c0_46 = arith.constant 0 : index
    %c0_47 = arith.constant 0 : index
    %c0_48 = arith.constant 0 : index
    %102 = vector.load %arg15[%c0_46, %c0_47, %c0_48] : memref<1x8x8xf32, #tpu.memory_space<vmem>>, vector<1x8x8xf32>
    %103 = vector.shape_cast %102 : vector<1x8x8xf32> to vector<8x8xf32>
    %104 = arith.addf %103, %101 : vector<8x8xf32>
    %c0_49 = arith.constant 0 : index
    %c0_50 = arith.constant 0 : index
    %c0_51 = arith.constant 0 : index
    %105 = vector.load %arg15[%c0_49, %c0_50, %c0_51] : memref<1x8x8xf32, #tpu.memory_space<vmem>>, vector<1x8x8xf32>
    %106 = vector.shape_cast %105 : vector<1x8x8xf32> to vector<8x8xf32>
    %107 = vector.shape_cast %104 : vector<8x8xf32> to vector<1x8x8xf32>
    tpu.vector_store %arg15[%c0_49, %c0_50, %c0_51], %107 {strides = array<i32>} : memref<1x8x8xf32, #tpu.memory_space<vmem>>, vector<1x8x8xf32>,
    %108 = arith.truncf %101 : vector<8x8xf32> to vector<8x8xbf16>
    %cst_52 = arith.constant dense<0.000000e+00> : vector<8x8xf32>
    %109 = tpu.matmul %108, %89, %cst_52 {dimension_numbers = #tpu.dot_dimension_numbers<[1], [0], [0], [1], [0, 0, 1, 1], [], []>} : vector<8x8xbf16>, vector<8x8xbf16>, vector<8x8xf32> -> vector<8x8xf32>
    %c0_53 = arith.constant 0 : index
    %c16 = arith.constant 16 : index
    %110 = vector.load %arg16[%c0_53, %c16] : memref<8x32xf32, #tpu.memory_space<vmem>>, vector<8x8xf32>
    tpu.vector_store %arg16[%c0_53, %c16], %109 {strides = array<i32>} : memref<8x32xf32, #tpu.memory_space<vmem>>, vector<8x8xf32>,
    %111 = vector.extract_strided_slice %34 {offsets = [0, 24], sizes = [8, 8], strides = [1, 1]} : vector<8x96xbf16> to vector<8x8xbf16>
    %112 = vector.extract_strided_slice %34 {offsets = [0, 56], sizes = [8, 8], strides = [1, 1]} : vector<8x96xbf16> to vector<8x8xbf16>
    %113 = vector.extract_strided_slice %34 {offsets = [0, 88], sizes = [8, 8], strides = [1, 1]} : vector<8x96xbf16> to vector<8x8xbf16>
    %114 = tpu.transpose %112, [1, 0] : vector<8x8xbf16> -> vector<8x8xbf16>
    %cst_54 = arith.constant dense<0.000000e+00> : vector<8x8xf32>
    %115 = tpu.matmul %111, %114, %cst_54 {dimension_numbers = #tpu.dot_dimension_numbers<[1], [0], [0], [1], [0, 0, 1, 1], [], []>} : vector<8x8xbf16>, vector<8x8xbf16>, vector<8x8xf32> -> vector<8x8xf32>
    %cst_55 = arith.constant dense<0xFF800000> : vector<8xf32>
    %116 = vector.multi_reduction <maximumf>, %115, %cst_55 [1] : vector<8x8xf32> to vector<8xf32>
    %117 = vector.shape_cast %116 : vector<8xf32> to vector<8x1xf32>
    %118 = vector.broadcast %117 : vector<8x1xf32> to vector<8x8xf32>
    %119 = arith.subf %115, %118 : vector<8x8xf32>
    %120 = math.exp %119 : vector<8x8xf32>
    %cst_56 = arith.constant dense<0.000000e+00> : vector<8xf32>
    %121 = vector.multi_reduction <add>, %120, %cst_56 [1] : vector<8x8xf32> to vector<8xf32>
    %122 = vector.shape_cast %121 : vector<8xf32> to vector<8x1xf32>
    %123 = tpu.reciprocal %122 : vector<8x1xf32> -> vector<8x1xf32>
    %124 = vector.broadcast %123 : vector<8x1xf32> to vector<8x8xf32>
    %125 = arith.mulf %120, %124 : vector<8x8xf32>
    %c0_57 = arith.constant 0 : index
    %c0_58 = arith.constant 0 : index
    %c0_59 = arith.constant 0 : index
    %126 = vector.load %arg15[%c0_57, %c0_58, %c0_59] : memref<1x8x8xf32, #tpu.memory_space<vmem>>, vector<1x8x8xf32>
    %127 = vector.shape_cast %126 : vector<1x8x8xf32> to vector<8x8xf32>
    %128 = arith.addf %127, %125 : vector<8x8xf32>
    %c0_60 = arith.constant 0 : index
    %c0_61 = arith.constant 0 : index
    %c0_62 = arith.constant 0 : index
    %129 = vector.load %arg15[%c0_60, %c0_61, %c0_62] : memref<1x8x8xf32, #tpu.memory_space<vmem>>, vector<1x8x8xf32>
    %130 = vector.shape_cast %129 : vector<1x8x8xf32> to vector<8x8xf32>
    %131 = vector.shape_cast %128 : vector<8x8xf32> to vector<1x8x8xf32>
    tpu.vector_store %arg15[%c0_60, %c0_61, %c0_62], %131 {strides = array<i32>} : memref<1x8x8xf32, #tpu.memory_space<vmem>>, vector<1x8x8xf32>,
    %132 = arith.truncf %125 : vector<8x8xf32> to vector<8x8xbf16>
    %cst_63 = arith.constant dense<0.000000e+00> : vector<8x8xf32>
    %133 = tpu.matmul %132, %113, %cst_63 {dimension_numbers = #tpu.dot_dimension_numbers<[1], [0], [0], [1], [0, 0, 1, 1], [], []>} : vector<8x8xbf16>, vector<8x8xbf16>, vector<8x8xf32> -> vector<8x8xf32>
    %c0_64 = arith.constant 0 : index
    %c24 = arith.constant 24 : index
    %134 = vector.load %arg16[%c0_64, %c24] : memref<8x32xf32, #tpu.memory_space<vmem>>, vector<8x8xf32>
    tpu.vector_store %arg16[%c0_64, %c24], %133 {strides = array<i32>} : memref<8x32xf32, #tpu.memory_space<vmem>>, vector<8x8xf32>,
    %c0_65 = arith.constant 0 : index
    %c0_66 = arith.constant 0 : index
    %135 = vector.load %arg16[%c0_65, %c0_66] : memref<8x32xf32, #tpu.memory_space<vmem>>, vector<8x32xf32>
    %136 = arith.truncf %135 : vector<8x32xf32> to vector<8x32xbf16>
    %c0_67 = arith.constant 0 : index
    %c0_68 = arith.constant 0 : index
    %137 = vector.load %arg6[%c0_67, %c0_68] : memref<32x32xbf16, #tpu.memory_space<vmem>>, vector<32x32xbf16>
    %cst_69 = arith.constant dense<0.000000e+00> : vector<8x32xf32>
    %138 = tpu.matmul %136, %137, %cst_69 {dimension_numbers = #tpu.dot_dimension_numbers<[1], [0], [0], [1], [0, 0, 1, 1], [], []>} : vector<8x32xbf16>, vector<32x32xbf16>, vector<8x32xf32> -> vector<8x32xf32>
    %c0_70 = arith.constant 0 : index
    %c0_71 = arith.constant 0 : index
    %139 = vector.load %arg7[%c0_70, %c0_71] : memref<1x32xf32, #tpu.memory_space<vmem>>, vector<1x32xf32>
    %140 = vector.broadcast %139 : vector<1x32xf32> to vector<8x32xf32>
    %141 = arith.addf %138, %140 : vector<8x32xf32>
    %142 = arith.addf %141, %1 : vector<8x32xf32>
    %c0_72 = arith.constant 0 : index
    %c0_73 = arith.constant 0 : index
    %c0_74 = arith.constant 0 : index
    %143 = vector.load %arg15[%c0_72, %c0_73, %c0_74] : memref<1x8x8xf32, #tpu.memory_space<vmem>>, vector<1x8x8xf32>
    %144 = vector.shape_cast %143 : vector<1x8x8xf32> to vector<8x8xf32>
    %cst_75 = arith.constant 2.500000e+02 : f32
    %145 = vector.broadcast %cst_75 : f32 to vector<8x8xf32>
    %146 = arith.mulf %144, %145 : vector<8x8xf32>
    %c0_76 = arith.constant 0 : index
    %c0_77 = arith.constant 0 : index
    %c0_78 = arith.constant 0 : index
    %147 = vector.load %arg15[%c0_76, %c0_77, %c0_78] : memref<1x8x8xf32, #tpu.memory_space<vmem>>, vector<1x8x8xf32>
    %148 = vector.shape_cast %147 : vector<1x8x8xf32> to vector<8x8xf32>
    %149 = vector.shape_cast %146 : vector<8x8xf32> to vector<1x8x8xf32>
    tpu.vector_store %arg15[%c0_76, %c0_77, %c0_78], %149 {strides = array<i32>} : memref<1x8x8xf32, #tpu.memory_space<vmem>>, vector<1x8x8xf32>,
    %c0_79 = arith.constant 0 : index
    %c0_80 = arith.constant 0 : index
    %150 = vector.load %arg8[%c0_79, %c0_80] : memref<1x32xf32, #tpu.memory_space<vmem>>, vector<1x32xf32>
    %c0_81 = arith.constant 0 : index
    %c0_82 = arith.constant 0 : index
    %151 = vector.load %arg9[%c0_81, %c0_82] : memref<1x32xf32, #tpu.memory_space<vmem>>, vector<1x32xf32>
    %cst_83 = arith.constant dense<0.000000e+00> : vector<8xf32>
    %152 = vector.multi_reduction <add>, %142, %cst_83 [1] : vector<8x32xf32> to vector<8xf32>
    %153 = vector.shape_cast %152 : vector<8xf32> to vector<8x1xf32>
    %cst_84 = arith.constant 3.200000e+01 : f32
    %154 = vector.broadcast %cst_84 : f32 to vector<8x1xf32>
    %155 = arith.divf %153, %154 : vector<8x1xf32>
    %156 = arith.mulf %142, %142 : vector<8x32xf32>
    %cst_85 = arith.constant dense<0.000000e+00> : vector<8xf32>
    %157 = vector.multi_reduction <add>, %156, %cst_85 [1] : vector<8x32xf32> to vector<8xf32>
    %158 = vector.shape_cast %157 : vector<8xf32> to vector<8x1xf32>
    %cst_86 = arith.constant 3.200000e+01 : f32
    %159 = vector.broadcast %cst_86 : f32 to vector<8x1xf32>
    %160 = arith.divf %158, %159 : vector<8x1xf32>
    %161 = arith.mulf %155, %155 : vector<8x1xf32>
    %162 = arith.subf %160, %161 : vector<8x1xf32>
    %cst_87 = arith.constant 0.000000e+00 : f32
    %163 = vector.broadcast %cst_87 : f32 to vector<8x1xf32>
    %164 = arith.maximumf %162, %163 : vector<8x1xf32>
    %165 = vector.broadcast %155 : vector<8x1xf32> to vector<8x32xf32>
    %166 = arith.subf %142, %165 : vector<8x32xf32>
    %cst_88 = arith.constant 9.99999997E-7 : f32
    %167 = vector.broadcast %cst_88 : f32 to vector<8x1xf32>
    %168 = arith.addf %164, %167 : vector<8x1xf32>
    %169 = math.rsqrt %168 : vector<8x1xf32>
    %170 = vector.broadcast %169 : vector<8x1xf32> to vector<8x32xf32>
    %171 = arith.mulf %166, %170 : vector<8x32xf32>
    %172 = vector.broadcast %150 : vector<1x32xf32> to vector<8x32xf32>
    %173 = arith.mulf %171, %172 : vector<8x32xf32>
    %174 = vector.broadcast %151 : vector<1x32xf32> to vector<8x32xf32>
    %175 = arith.addf %173, %174 : vector<8x32xf32>
    %176 = arith.truncf %175 : vector<8x32xf32> to vector<8x32xbf16>
    %cst_89 = arith.constant 0.000000e+00 : f32
    %177 = vector.broadcast %cst_89 : f32 to vector<8x32xf32>
    %c0_90 = arith.constant 0 : index
    %c0_91 = arith.constant 0 : index
    %178 = vector.load %arg10[%c0_90, %c0_91] : memref<32x64xbf16, #tpu.memory_space<vmem>>, vector<32x64xbf16>
    %cst_92 = arith.constant dense<0.000000e+00> : vector<8x64xf32>
    %179 = tpu.matmul %176, %178, %cst_92 {dimension_numbers = #tpu.dot_dimension_numbers<[1], [0], [0], [1], [0, 0, 1, 1], [], []>} : vector<8x32xbf16>, vector<32x64xbf16>, vector<8x64xf32> -> vector<8x64xf32>
    %c0_93 = arith.constant 0 : index
    %c0_94 = arith.constant 0 : index
    %180 = vector.load %arg11[%c0_93, %c0_94] : memref<1x64xf32, #tpu.memory_space<vmem>>, vector<1x64xf32>
    %181 = vector.broadcast %180 : vector<1x64xf32> to vector<8x64xf32>
    %182 = arith.addf %179, %181 : vector<8x64xf32>
    %cst_95 = arith.constant 5.000000e-01 : f32
    %183 = vector.broadcast %cst_95 : f32 to vector<8x64xf32>
    %184 = arith.mulf %183, %182 : vector<8x64xf32>
    %cst_96 = arith.constant 0.707106769 : f32
    %185 = vector.broadcast %cst_96 : f32 to vector<8x64xf32>
    %186 = arith.mulf %182, %185 : vector<8x64xf32>
    %187 = math.absf %186 : vector<8x64xf32>
    %cst_97 = arith.constant 0.327591091 : f32
    %188 = vector.broadcast %cst_97 : f32 to vector<8x64xf32>
    %189 = arith.mulf %188, %187 : vector<8x64xf32>
    %cst_98 = arith.constant 1.000000e+00 : f32
    %190 = vector.broadcast %cst_98 : f32 to vector<8x64xf32>
    %191 = arith.addf %190, %189 : vector<8x64xf32>
    %192 = tpu.reciprocal %191 {approx = true} : vector<8x64xf32> -> vector<8x64xf32>
    %cst_99 = arith.constant 1.06140542 : f32
    %193 = vector.broadcast %cst_99 : f32 to vector<8x64xf32>
    %194 = arith.mulf %193, %192 : vector<8x64xf32>
    %cst_100 = arith.constant -1.45315206 : f32
    %195 = vector.broadcast %cst_100 : f32 to vector<8x64xf32>
    %196 = arith.addf %194, %195 : vector<8x64xf32>
    %197 = arith.mulf %196, %192 : vector<8x64xf32>
    %cst_101 = arith.constant 1.42141378 : f32
    %198 = vector.broadcast %cst_101 : f32 to vector<8x64xf32>
    %199 = arith.addf %197, %198 : vector<8x64xf32>
    %200 = arith.mulf %199, %192 : vector<8x64xf32>
    %cst_102 = arith.constant -0.284496725 : f32
    %201 = vector.broadcast %cst_102 : f32 to vector<8x64xf32>
    %202 = arith.addf %200, %201 : vector<8x64xf32>
    %203 = arith.mulf %202, %192 : vector<8x64xf32>
    %cst_103 = arith.constant 0.254829586 : f32
    %204 = vector.broadcast %cst_103 : f32 to vector<8x64xf32>
    %205 = arith.addf %203, %204 : vector<8x64xf32>
    %206 = arith.mulf %205, %192 : vector<8x64xf32>
    %cst_104 = arith.constant 0.000000e+00 : f32
    %207 = vector.broadcast %cst_104 : f32 to vector<8x64xf32>
    %208 = arith.subf %207, %187 : vector<8x64xf32>
    %209 = arith.mulf %208, %187 : vector<8x64xf32>
    %210 = math.exp %209 : vector<8x64xf32>
    %211 = arith.mulf %206, %210 : vector<8x64xf32>
    %cst_105 = arith.constant 1.000000e+00 : f32
    %212 = vector.broadcast %cst_105 : f32 to vector<8x64xf32>
    %213 = arith.subf %212, %211 : vector<8x64xf32>
    %cst_106 = arith.constant 0.000000e+00 : f32
    %214 = vector.broadcast %cst_106 : f32 to vector<8x64xf32>
    %215 = arith.cmpf olt, %186, %214 : vector<8x64xf32>
    %cst_107 = arith.constant 0.000000e+00 : f32
    %216 = vector.broadcast %cst_107 : f32 to vector<8x64xf32>
    %217 = arith.subf %216, %213 : vector<8x64xf32>
    %218 = arith.select %215, %217, %213 : vector<8x64xi1>, vector<8x64xf32>
    %cst_108 = arith.constant 1.000000e+00 : f32
    %219 = vector.broadcast %cst_108 : f32 to vector<8x64xf32>
    %220 = arith.addf %219, %218 : vector<8x64xf32>
    %221 = arith.mulf %184, %220 : vector<8x64xf32>
    %222 = arith.truncf %221 : vector<8x64xf32> to vector<8x64xbf16>
    %c0_109 = arith.constant 0 : index
    %c0_110 = arith.constant 0 : index
    %223 = vector.load %arg12[%c0_109, %c0_110] : memref<64x32xbf16, #tpu.memory_space<vmem>>, vector<64x32xbf16>
    %cst_111 = arith.constant dense<0.000000e+00> : vector<8x32xf32>
    %224 = tpu.matmul %222, %223, %cst_111 {dimension_numbers = #tpu.dot_dimension_numbers<[1], [0], [0], [1], [0, 0, 1, 1], [], []>} : vector<8x64xbf16>, vector<64x32xbf16>, vector<8x32xf32> -> vector<8x32xf32>
    %225 = arith.addf %177, %224 : vector<8x32xf32>
    %226 = arith.addf %142, %225 : vector<8x32xf32>
    %c0_112 = arith.constant 0 : index
    %c0_113 = arith.constant 0 : index
    %227 = vector.load %arg13[%c0_112, %c0_113] : memref<1x32xf32, #tpu.memory_space<vmem>>, vector<1x32xf32>
    %228 = vector.broadcast %227 : vector<1x32xf32> to vector<8x32xf32>
    %229 = arith.addf %226, %228 : vector<8x32xf32>
    %c0_114 = arith.constant 0 : index
    %c0_115 = arith.constant 0 : index
    %c0_116 = arith.constant 0 : index
    %230 = vector.load %arg14[%c0_114, %c0_115, %c0_116] : memref<1x8x32xf32, #tpu.memory_space<vmem>>, vector<1x8x32xf32>
    %231 = vector.shape_cast %230 : vector<1x8x32xf32> to vector<8x32xf32>
    %232 = vector.shape_cast %229 : vector<8x32xf32> to vector<1x8x32xf32>
    tpu.vector_store %arg14[%c0_114, %c0_115, %c0_116], %232 {strides = array<i32>} : memref<1x8x32xf32, #tpu.memory_space<vmem>>, vector<1x8x32xf32>,
    return
  }
  func.func @transform_0(%arg0: i32) -> (i32, i32, i32) {
    %c0_i32 = arith.constant 0 : i32
    %c0_i32_0 = arith.constant 0 : i32
    %c0_i32_1 = arith.constant 0 : i32
    return %arg0, %c0_i32, %c0_i32_0 : i32, i32, i32
  }
  func.func @transform_1(%arg0: i32) -> (i32, i32) {
    %c0_i32 = arith.constant 0 : i32
    %c0_i32_0 = arith.constant 0 : i32
    %c0_i32_1 = arith.constant 0 : i32
    return %c0_i32, %c0_i32_0 : i32, i32
  }
  func.func @transform_2(%arg0: i32) -> (i32, i32) {
    %c0_i32 = arith.constant 0 : i32
    %c0_i32_0 = arith.constant 0 : i32
    %c0_i32_1 = arith.constant 0 : i32
    return %c0_i32, %c0_i32_0 : i32, i32
  }
  func.func @transform_3(%arg0: i32) -> (i32, i32) {
    %c0_i32 = arith.constant 0 : i32
    %c0_i32_0 = arith.constant 0 : i32
    %c0_i32_1 = arith.constant 0 : i32
    return %c0_i32, %c0_i32_0 : i32, i32
  }
  func.func @transform_4(%arg0: i32) -> (i32, i32) {
    %c0_i32 = arith.constant 0 : i32
    %c0_i32_0 = arith.constant 0 : i32
    %c0_i32_1 = arith.constant 0 : i32
    return %c0_i32, %c0_i32_0 : i32, i32
  }
  func.func @transform_5(%arg0: i32) -> (i32, i32) {
    %c0_i32 = arith.constant 0 : i32
    %c0_i32_0 = arith.constant 0 : i32
    %c0_i32_1 = arith.constant 0 : i32
    return %c0_i32, %c0_i32_0 : i32, i32
  }
  func.func @transform_6(%arg0: i32) -> (i32, i32) {
    %c0_i32 = arith.constant 0 : i32
    %c0_i32_0 = arith.constant 0 : i32
    %c0_i32_1 = arith.constant 0 : i32
    return %c0_i32, %c0_i32_0 : i32, i32
  }
  func.func @transform_7(%arg0: i32) -> (i32, i32) {
    %c0_i32 = arith.constant 0 : i32
    %c0_i32_0 = arith.constant 0 : i32
    %c0_i32_1 = arith.constant 0 : i32
    return %c0_i32, %c0_i32_0 : i32, i32
  }
  func.func @transform_8(%arg0: i32) -> (i32, i32) {
    %c0_i32 = arith.constant 0 : i32
    %c0_i32_0 = arith.constant 0 : i32
    %c0_i32_1 = arith.constant 0 : i32
    return %c0_i32, %c0_i32_0 : i32, i32
  }
  func.func @transform_9(%arg0: i32) -> (i32, i32) {
    %c0_i32 = arith.constant 0 : i32
    %c0_i32_0 = arith.constant 0 : i32
    %c0_i32_1 = arith.constant 0 : i32
    return %c0_i32, %c0_i32_0 : i32, i32
  }
  func.func @transform_10(%arg0: i32) -> (i32, i32) {
    %c0_i32 = arith.constant 0 : i32
    %c0_i32_0 = arith.constant 0 : i32
    %c0_i32_1 = arith.constant 0 : i32
    return %c0_i32, %c0_i32_0 : i32, i32
  }
  func.func @transform_11(%arg0: i32) -> (i32, i32) {
    %c0_i32 = arith.constant 0 : i32
    %c0_i32_0 = arith.constant 0 : i32
    %c0_i32_1 = arith.constant 0 : i32
    return %c0_i32, %c0_i32_0 : i32, i32
  }
  func.func @transform_12(%arg0: i32) -> (i32, i32) {
    %c0_i32 = arith.constant 0 : i32
    %c0_i32_0 = arith.constant 0 : i32
    %c0_i32_1 = arith.constant 0 : i32
    return %c0_i32, %c0_i32_0 : i32, i32
  }
  func.func @transform_13(%arg0: i32) -> (i32, i32, i32) {
    %c0_i32 = arith.constant 0 : i32
    %c0_i32_0 = arith.constant 0 : i32
    %c0_i32_1 = arith.constant 0 : i32
    return %arg0, %c0_i32, %c0_i32_0 : i32, i32, i32
  }
  func.func @transform_14(%arg0: i32) -> (i32, i32, i32) {
    %c0_i32 = arith.constant 0 : i32
    %c0_i32_0 = arith.constant 0 : i32
    %c0_i32_1 = arith.constant 0 : i32
    return %arg0, %c0_i32, %c0_i32_0 : i32, i32, i32
  }
}

module attributes {stable_mosaic.version = 11 : i64} {
  func.func @encoder_block_kernel(%arg0: i32, %arg1: memref<1x8x32xf32, #tpu.memory_space<vmem>>, %arg2: memref<1x32xf32, #tpu.memory_space<vmem>>, %arg3: memref<1x32xf32, #tpu.memory_space<vmem>>, %arg4: memref<32x96xbf16, #tpu.memory_space<vmem>>, %arg5: memref<1x96xf32, #tpu.memory_space<vmem>>, %arg6: memref<32x32xbf16, #tpu.memory_space<vmem>>, %arg7: memref<1x32xf32, #tpu.memory_space<vmem>>, %arg8: memref<1x32xf32, #tpu.memory_space<vmem>>, %arg9: memref<1x32xf32, #tpu.memory_space<vmem>>, %arg10: memref<32x64xbf16, #tpu.memory_space<vmem>>, %arg11: memref<1x64xf32, #tpu.memory_space<vmem>>, %arg12: memref<64x32xbf16, #tpu.memory_space<vmem>>, %arg13: memref<1x32xf32, #tpu.memory_space<vmem>>, %arg14: memref<1x8x32xf32, #tpu.memory_space<vmem>>, %arg15: memref<1x8x8xf32, #tpu.memory_space<vmem>>, %arg16: memref<8x32xf32, #tpu.memory_space<vmem>>) attributes {dimension_semantics = [#tpu.dimension_semantics<parallel>], iteration_bounds = array<i64: 2>, scalar_prefetch = 0 : i64, scratch_operands = 1 : i64, tpu.core_type = #tpu.core_type<tc>, window_params = [{transform_indices = @transform_0, window_bounds = array<i64: 1, 8, 32>}, {pipeline_mode = #tpu.pipeline_mode<synchronous>, transform_indices = @transform_1, window_bounds = array<i64: 1, 32>}, {pipeline_mode = #tpu.pipeline_mode<synchronous>, transform_indices = @transform_2, window_bounds = array<i64: 1, 32>}, {pipeline_mode = #tpu.pipeline_mode<synchronous>, transform_indices = @transform_3, window_bounds = array<i64: 32, 96>}, {pipeline_mode = #tpu.pipeline_mode<synchronous>, transform_indices = @transform_4, window_bounds = array<i64: 1, 96>}, {pipeline_mode = #tpu.pipeline_mode<synchronous>, transform_indices = @transform_5, window_bounds = array<i64: 32, 32>}, {pipeline_mode = #tpu.pipeline_mode<synchronous>, transform_indices = @transform_6, window_bounds = array<i64: 1, 32>}, {pipeline_mode = #tpu.pipeline_mode<synchronous>, transform_indices = @transform_7, window_bounds = array<i64: 1, 32>}, {pipeline_mode = #tpu.pipeline_mode<synchronous>, transform_indices = @transform_8, window_bounds = array<i64: 1, 32>}, {pipeline_mode = #tpu.pipeline_mode<synchronous>, transform_indices = @transform_9, window_bounds = array<i64: 32, 64>}, {pipeline_mode = #tpu.pipeline_mode<synchronous>, transform_indices = @transform_10, window_bounds = array<i64: 1, 64>}, {pipeline_mode = #tpu.pipeline_mode<synchronous>, transform_indices = @transform_11, window_bounds = array<i64: 64, 32>}, {pipeline_mode = #tpu.pipeline_mode<synchronous>, transform_indices = @transform_12, window_bounds = array<i64: 1, 32>}, {transform_indices = @transform_13, window_bounds = array<i64: 1, 8, 32>}, {transform_indices = @transform_14, window_bounds = array<i64: 1, 8, 8>}]} {
    %c0 = arith.constant 0 : index
    %c0_0 = arith.constant 0 : index
    %c0_1 = arith.constant 0 : index
    %0 = vector.load %arg1[%c0, %c0_0, %c0_1] : memref<1x8x32xf32, #tpu.memory_space<vmem>>, vector<1x8x32xf32>
    %1 = vector.shape_cast %0 : vector<1x8x32xf32> to vector<8x32xf32>
    %c0_2 = arith.constant 0 : index
    %c0_3 = arith.constant 0 : index
    %2 = vector.load %arg2[%c0_2, %c0_3] : memref<1x32xf32, #tpu.memory_space<vmem>>, vector<1x32xf32>
    %c0_4 = arith.constant 0 : index
    %c0_5 = arith.constant 0 : index
    %3 = vector.load %arg3[%c0_4, %c0_5] : memref<1x32xf32, #tpu.memory_space<vmem>>, vector<1x32xf32>
    %cst = arith.constant dense<0.000000e+00> : vector<8xf32>
    %4 = vector.multi_reduction <add>, %1, %cst [1] : vector<8x32xf32> to vector<8xf32>
    %5 = vector.shape_cast %4 : vector<8xf32> to vector<8x1xf32>
    %cst_6 = arith.constant 3.200000e+01 : f32
    %6 = vector.broadcast %cst_6 : f32 to vector<8x1xf32>
    %7 = arith.divf %5, %6 : vector<8x1xf32>
    %8 = arith.mulf %1, %1 : vector<8x32xf32>
    %cst_7 = arith.constant dense<0.000000e+00> : vector<8xf32>
    %9 = vector.multi_reduction <add>, %8, %cst_7 [1] : vector<8x32xf32> to vector<8xf32>
    %10 = vector.shape_cast %9 : vector<8xf32> to vector<8x1xf32>
    %cst_8 = arith.constant 3.200000e+01 : f32
    %11 = vector.broadcast %cst_8 : f32 to vector<8x1xf32>
    %12 = arith.divf %10, %11 : vector<8x1xf32>
    %13 = arith.mulf %7, %7 : vector<8x1xf32>
    %14 = arith.subf %12, %13 : vector<8x1xf32>
    %cst_9 = arith.constant 0.000000e+00 : f32
    %15 = vector.broadcast %cst_9 : f32 to vector<8x1xf32>
    %16 = arith.maximumf %14, %15 : vector<8x1xf32>
    %17 = vector.broadcast %7 : vector<8x1xf32> to vector<8x32xf32>
    %18 = arith.subf %1, %17 : vector<8x32xf32>
    %cst_10 = arith.constant 9.99999997E-7 : f32
    %19 = vector.broadcast %cst_10 : f32 to vector<8x1xf32>
    %20 = arith.addf %16, %19 : vector<8x1xf32>
    %21 = math.rsqrt %20 : vector<8x1xf32>
    %22 = vector.broadcast %21 : vector<8x1xf32> to vector<8x32xf32>
    %23 = arith.mulf %18, %22 : vector<8x32xf32>
    %24 = vector.broadcast %2 : vector<1x32xf32> to vector<8x32xf32>
    %25 = arith.mulf %23, %24 : vector<8x32xf32>
    %26 = vector.broadcast %3 : vector<1x32xf32> to vector<8x32xf32>
    %27 = arith.addf %25, %26 : vector<8x32xf32>
    %28 = arith.truncf %27 : vector<8x32xf32> to vector<8x32xbf16>
    %c0_11 = arith.constant 0 : index
    %c0_12 = arith.constant 0 : index
    %29 = vector.load %arg4[%c0_11, %c0_12] : memref<32x96xbf16, #tpu.memory_space<vmem>>, vector<32x96xbf16>
    %cst_13 = arith.constant dense<0.000000e+00> : vector<8x96xf32>
    %30 = tpu.matmul %28, %29, %cst_13 {dimension_numbers = #tpu.dot_dimension_numbers<[1], [0], [0], [1], [0, 0, 1, 1], [], []>} : vector<8x32xbf16>, vector<32x96xbf16>, vector<8x96xf32> -> vector<8x96xf32>
    %c0_14 = arith.constant 0 : index
    %c0_15 = arith.constant 0 : index
    %31 = vector.load %arg5[%c0_14, %c0_15] : memref<1x96xf32, #tpu.memory_space<vmem>>, vector<1x96xf32>
    %32 = vector.broadcast %31 : vector<1x96xf32> to vector<8x96xf32>
    %33 = arith.addf %30, %32 : vector<8x96xf32>
    %34 = arith.truncf %33 : vector<8x96xf32> to vector<8x96xbf16>
    %cst_16 = arith.constant 0.000000e+00 : f32
    %35 = vector.broadcast %cst_16 : f32 to vector<8x8xf32>
    %c0_17 = arith.constant 0 : index
    %c0_18 = arith.constant 0 : index
    %c0_19 = arith.constant 0 : index
    %36 = vector.load %arg15[%c0_17, %c0_18, %c0_19] : memref<1x8x8xf32, #tpu.memory_space<vmem>>, vector<1x8x8xf32>
    %37 = vector.shape_cast %36 : vector<1x8x8xf32> to vector<8x8xf32>
    %38 = vector.shape_cast %35 : vector<8x8xf32> to vector<1x8x8xf32>
    tpu.vector_store %arg15[%c0_17, %c0_18, %c0_19], %38 {strides = array<i32>} : memref<1x8x8xf32, #tpu.memory_space<vmem>>, vector<1x8x8xf32>,
    %39 = vector.extract_strided_slice %34 {offsets = [0, 0], sizes = [8, 8], strides = [1, 1]} : vector<8x96xbf16> to vector<8x8xbf16>
    %40 = vector.extract_strided_slice %34 {offsets = [0, 32], sizes = [8, 8], strides = [1, 1]} : vector<8x96xbf16> to vector<8x8xbf16>
    %41 = vector.extract_strided_slice %34 {offsets = [0, 64], sizes = [8, 8], strides = [1, 1]} : vector<8x96xbf16> to vector<8x8xbf16>
    %42 = tpu.transpose %40, [1, 0] : vector<8x8xbf16> -> vector<8x8xbf16>
    %cst_20 = arith.constant dense<0.000000e+00> : vector<8x8xf32>
    %43 = tpu.matmul %39, %42, %cst_20 {dimension_numbers = #tpu.dot_dimension_numbers<[1], [0], [0], [1], [0, 0, 1, 1], [], []>} : vector<8x8xbf16>, vector<8x8xbf16>, vector<8x8xf32> -> vector<8x8xf32>
    %cst_21 = arith.constant dense<0xFF800000> : vector<8xf32>
    %44 = vector.multi_reduction <maximumf>, %43, %cst_21 [1] : vector<8x8xf32> to vector<8xf32>
    %45 = vector.shape_cast %44 : vector<8xf32> to vector<8x1xf32>
    %46 = vector.broadcast %45 : vector<8x1xf32> to vector<8x8xf32>
    %47 = arith.subf %43, %46 : vector<8x8xf32>
    %48 = math.exp %47 : vector<8x8xf32>
    %cst_22 = arith.constant dense<0.000000e+00> : vector<8xf32>
    %49 = vector.multi_reduction <add>, %48, %cst_22 [1] : vector<8x8xf32> to vector<8xf32>
    %50 = vector.shape_cast %49 : vector<8xf32> to vector<8x1xf32>
    %51 = tpu.reciprocal %50 : vector<8x1xf32> -> vector<8x1xf32>
    %52 = vector.broadcast %51 : vector<8x1xf32> to vector<8x8xf32>
    %53 = arith.mulf %48, %52 : vector<8x8xf32>
    %c0_23 = arith.constant 0 : index
    %c0_24 = arith.constant 0 : index
    %c0_25 = arith.constant 0 : index
    %54 = vector.load %arg15[%c0_23, %c0_24, %c0_25] : memref<1x8x8xf32, #tpu.memory_space<vmem>>, vector<1x8x8xf32>
    %55 = vector.shape_cast %54 : vector<1x8x8xf32> to vector<8x8xf32>
    %56 = arith.addf %55, %53 : vector<8x8xf32>
    %c0_26 = arith.constant 0 : index
    %c0_27 = arith.constant 0 : index
    %c0_28 = arith.constant 0 : index
    %57 = vector.load %arg15[%c0_26, %c0_27, %c0_28] : memref<1x8x8xf32, #tpu.memory_space<vmem>>, vector<1x8x8xf32>
    %58 = vector.shape_cast %57 : vector<1x8x8xf32> to vector<8x8xf32>
    %59 = vector.shape_cast %56 : vector<8x8xf32> to vector<1x8x8xf32>
    tpu.vector_store %arg15[%c0_26, %c0_27, %c0_28], %59 {strides = array<i32>} : memref<1x8x8xf32, #tpu.memory_space<vmem>>, vector<1x8x8xf32>,
    %60 = arith.truncf %53 : vector<8x8xf32> to vector<8x8xbf16>
    %cst_29 = arith.constant dense<0.000000e+00> : vector<8x8xf32>
    %61 = tpu.matmul %60, %41, %cst_29 {dimension_numbers = #tpu.dot_dimension_numbers<[1], [0], [0], [1], [0, 0, 1, 1], [], []>} : vector<8x8xbf16>, vector<8x8xbf16>, vector<8x8xf32> -> vector<8x8xf32>
    %c0_30 = arith.constant 0 : index
    %c0_31 = arith.constant 0 : index
    %62 = vector.load %arg16[%c0_30, %c0_31] : memref<8x32xf32, #tpu.memory_space<vmem>>, vector<8x8xf32>
    tpu.vector_store %arg16[%c0_30, %c0_31], %61 {strides = array<i32>} : memref<8x32xf32, #tpu.memory_space<vmem>>, vector<8x8xf32>,
    %63 = vector.extract_strided_slice %34 {offsets = [0, 8], sizes = [8, 8], strides = [1, 1]} : vector<8x96xbf16> to vector<8x8xbf16>
    %64 = vector.extract_strided_slice %34 {offsets = [0, 40], sizes = [8, 8], strides = [1, 1]} : vector<8x96xbf16> to vector<8x8xbf16>
    %65 = vector.extract_strided_slice %34 {offsets = [0, 72], sizes = [8, 8], strides = [1, 1]} : vector<8x96xbf16> to vector<8x8xbf16>
    %66 = tpu.transpose %64, [1, 0] : vector<8x8xbf16> -> vector<8x8xbf16>
    %cst_32 = arith.constant dense<0.000000e+00> : vector<8x8xf32>
    %67 = tpu.matmul %63, %66, %cst_32 {dimension_numbers = #tpu.dot_dimension_numbers<[1], [0], [0], [1], [0, 0, 1, 1], [], []>} : vector<8x8xbf16>, vector<8x8xbf16>, vector<8x8xf32> -> vector<8x8xf32>
    %cst_33 = arith.constant dense<0xFF800000> : vector<8xf32>
    %68 = vector.multi_reduction <maximumf>, %67, %cst_33 [1] : vector<8x8xf32> to vector<8xf32>
    %69 = vector.shape_cast %68 : vector<8xf32> to vector<8x1xf32>
    %70 = vector.broadcast %69 : vector<8x1xf32> to vector<8x8xf32>
    %71 = arith.subf %67, %70 : vector<8x8xf32>
    %72 = math.exp %71 : vector<8x8xf32>
    %cst_34 = arith.constant dense<0.000000e+00> : vector<8xf32>
    %73 = vector.multi_reduction <add>, %72, %cst_34 [1] : vector<8x8xf32> to vector<8xf32>
    %74 = vector.shape_cast %73 : vector<8xf32> to vector<8x1xf32>
    %75 = tpu.reciprocal %74 : vector<8x1xf32> -> vector<8x1xf32>
    %76 = vector.broadcast %75 : vector<8x1xf32> to vector<8x8xf32>
    %77 = arith.mulf %72, %76 : vector<8x8xf32>
    %c0_35 = arith.constant 0 : index
    %c0_36 = arith.constant 0 : index
    %c0_37 = arith.constant 0 : index
    %78 = vector.load %arg15[%c0_35, %c0_36, %c0_37] : memref<1x8x8xf32, #tpu.memory_space<vmem>>, vector<1x8x8xf32>
    %79 = vector.shape_cast %78 : vector<1x8x8xf32> to vector<8x8xf32>
    %80 = arith.addf %79, %77 : vector<8x8xf32>
    %c0_38 = arith.constant 0 : index
    %c0_39 = arith.constant 0 : index
    %c0_40 = arith.constant 0 : index
    %81 = vector.load %arg15[%c0_38, %c0_39, %c0_40] : memref<1x8x8xf32, #tpu.memory_space<vmem>>, vector<1x8x8xf32>
    %82 = vector.shape_cast %81 : vector<1x8x8xf32> to vector<8x8xf32>
    %83 = vector.shape_cast %80 : vector<8x8xf32> to vector<1x8x8xf32>
    tpu.vector_store %arg15[%c0_38, %c0_39, %c0_40], %83 {strides = array<i32>} : memref<1x8x8xf32, #tpu.memory_space<vmem>>, vector<1x8x8xf32>,
    %84 = arith.truncf %77 : vector<8x8xf32> to vector<8x8xbf16>
    %cst_41 = arith.constant dense<0.000000e+00> : vector<8x8xf32>
    %85 = tpu.matmul %84, %65, %cst_41 {dimension_numbers = #tpu.dot_dimension_numbers<[1], [0], [0], [1], [0, 0, 1, 1], [], []>} : vector<8x8xbf16>, vector<8x8xbf16>, vector<8x8xf32> -> vector<8x8xf32>
    %c0_42 = arith.constant 0 : index
    %c8 = arith.constant 8 : index
    %86 = vector.load %arg16[%c0_42, %c8] : memref<8x32xf32, #tpu.memory_space<vmem>>, vector<8x8xf32>
    tpu.vector_store %arg16[%c0_42, %c8], %85 {strides = array<i32>} : memref<8x32xf32, #tpu.memory_space<vmem>>, vector<8x8xf32>,
    %87 = vector.extract_strided_slice %34 {offsets = [0, 16], sizes = [8, 8], strides = [1, 1]} : vector<8x96xbf16> to vector<8x8xbf16>
    %88 = vector.extract_strided_slice %34 {offsets = [0, 48], sizes = [8, 8], strides = [1, 1]} : vector<8x96xbf16> to vector<8x8xbf16>
    %89 = vector.extract_strided_slice %34 {offsets = [0, 80], sizes = [8, 8], strides = [1, 1]} : vector<8x96xbf16> to vector<8x8xbf16>
    %90 = tpu.transpose %88, [1, 0] : vector<8x8xbf16> -> vector<8x8xbf16>
    %cst_43 = arith.constant dense<0.000000e+00> : vector<8x8xf32>
    %91 = tpu.matmul %87, %90, %cst_43 {dimension_numbers = #tpu.dot_dimension_numbers<[1], [0], [0], [1], [0, 0, 1, 1], [], []>} : vector<8x8xbf16>, vector<8x8xbf16>, vector<8x8xf32> -> vector<8x8xf32>
    %cst_44 = arith.constant dense<0xFF800000> : vector<8xf32>
    %92 = vector.multi_reduction <maximumf>, %91, %cst_44 [1] : vector<8x8xf32> to vector<8xf32>
    %93 = vector.shape_cast %92 : vector<8xf32> to vector<8x1xf32>
    %94 = vector.broadcast %93 : vector<8x1xf32> to vector<8x8xf32>
    %95 = arith.subf %91, %94 : vector<8x8xf32>
    %96 = math.exp %95 : vector<8x8xf32>
    %cst_45 = arith.constant dense<0.000000e+00> : vector<8xf32>
    %97 = vector.multi_reduction <add>, %96, %cst_45 [1] : vector<8x8xf32> to vector<8xf32>
    %98 = vector.shape_cast %97 : vector<8xf32> to vector<8x1xf32>
    %99 = tpu.reciprocal %98 : vector<8x1xf32> -> vector<8x1xf32>
    %100 = vector.broadcast %99 : vector<8x1xf32> to vector<8x8xf32>
    %101 = arith.mulf %96, %100 : vector<8x8xf32>
    %c0_46 = arith.constant 0 : index
    %c0_47 = arith.constant 0 : index
    %c0_48 = arith.constant 0 : index
    %102 = vector.load %arg15[%c0_46, %c0_47, %c0_48] : memref<1x8x8xf32, #tpu.memory_space<vmem>>, vector<1x8x8xf32>
    %103 = vector.shape_cast %102 : vector<1x8x8xf32> to vector<8x8xf32>
    %104 = arith.addf %103, %101 : vector<8x8xf32>
    %c0_49 = arith.constant 0 : index
    %c0_50 = arith.constant 0 : index
    %c0_51 = arith.constant 0 : index
    %105 = vector.load %arg15[%c0_49, %c0_50, %c0_51] : memref<1x8x8xf32, #tpu.memory_space<vmem>>, vector<1x8x8xf32>
    %106 = vector.shape_cast %105 : vector<1x8x8xf32> to vector<8x8xf32>
    %107 = vector.shape_cast %104 : vector<8x8xf32> to vector<1x8x8xf32>
    tpu.vector_store %arg15[%c0_49, %c0_50, %c0_51], %107 {strides = array<i32>} : memref<1x8x8xf32, #tpu.memory_space<vmem>>, vector<1x8x8xf32>,
    %108 = arith.truncf %101 : vector<8x8xf32> to vector<8x8xbf16>
    %cst_52 = arith.constant dense<0.000000e+00> : vector<8x8xf32>
    %109 = tpu.matmul %108, %89, %cst_52 {dimension_numbers = #tpu.dot_dimension_numbers<[1], [0], [0], [1], [0, 0, 1, 1], [], []>} : vector<8x8xbf16>, vector<8x8xbf16>, vector<8x8xf32> -> vector<8x8xf32>
    %c0_53 = arith.constant 0 : index
    %c16 = arith.constant 16 : index
    %110 = vector.load %arg16[%c0_53, %c16] : memref<8x32xf32, #tpu.memory_space<vmem>>, vector<8x8xf32>
    tpu.vector_store %arg16[%c0_53, %c16], %109 {strides = array<i32>} : memref<8x32xf32, #tpu.memory_space<vmem>>, vector<8x8xf32>,
    %111 = vector.extract_strided_slice %34 {offsets = [0, 24], sizes = [8, 8], strides = [1, 1]} : vector<8x96xbf16> to vector<8x8xbf16>
    %112 = vector.extract_strided_slice %34 {offsets = [0, 56], sizes = [8, 8], strides = [1, 1]} : vector<8x96xbf16> to vector<8x8xbf16>
    %113 = vector.extract_strided_slice %34 {offsets = [0, 88], sizes = [8, 8], strides = [1, 1]} : vector<8x96xbf16> to vector<8x8xbf16>
    %114 = tpu.transpose %112, [1, 0] : vector<8x8xbf16> -> vector<8x8xbf16>
    %cst_54 = arith.constant dense<0.000000e+00> : vector<8x8xf32>
    %115 = tpu.matmul %111, %114, %cst_54 {dimension_numbers = #tpu.dot_dimension_numbers<[1], [0], [0], [1], [0, 0, 1, 1], [], []>} : vector<8x8xbf16>, vector<8x8xbf16>, vector<8x8xf32> -> vector<8x8xf32>
    %cst_55 = arith.constant dense<0xFF800000> : vector<8xf32>
    %116 = vector.multi_reduction <maximumf>, %115, %cst_55 [1] : vector<8x8xf32> to vector<8xf32>
    %117 = vector.shape_cast %116 : vector<8xf32> to vector<8x1xf32>
    %118 = vector.broadcast %117 : vector<8x1xf32> to vector<8x8xf32>
    %119 = arith.subf %115, %118 : vector<8x8xf32>
    %120 = math.exp %119 : vector<8x8xf32>
    %cst_56 = arith.constant dense<0.000000e+00> : vector<8xf32>
    %121 = vector.multi_reduction <add>, %120, %cst_56 [1] : vector<8x8xf32> to vector<8xf32>
    %122 = vector.shape_cast %121 : vector<8xf32> to vector<8x1xf32>
    %123 = tpu.reciprocal %122 : vector<8x1xf32> -> vector<8x1xf32>
    %124 = vector.broadcast %123 : vector<8x1xf32> to vector<8x8xf32>
    %125 = arith.mulf %120, %124 : vector<8x8xf32>
    %c0_57 = arith.constant 0 : index
    %c0_58 = arith.constant 0 : index
    %c0_59 = arith.constant 0 : index
    %126 = vector.load %arg15[%c0_57, %c0_58, %c0_59] : memref<1x8x8xf32, #tpu.memory_space<vmem>>, vector<1x8x8xf32>
    %127 = vector.shape_cast %126 : vector<1x8x8xf32> to vector<8x8xf32>
    %128 = arith.addf %127, %125 : vector<8x8xf32>
    %c0_60 = arith.constant 0 : index
    %c0_61 = arith.constant 0 : index
    %c0_62 = arith.constant 0 : index
    %129 = vector.load %arg15[%c0_60, %c0_61, %c0_62] : memref<1x8x8xf32, #tpu.memory_space<vmem>>, vector<1x8x8xf32>
    %130 = vector.shape_cast %129 : vector<1x8x8xf32> to vector<8x8xf32>
    %131 = vector.shape_cast %128 : vector<8x8xf32> to vector<1x8x8xf32>
    tpu.vector_store %arg15[%c0_60, %c0_61, %c0_62], %131 {strides = array<i32>} : memref<1x8x8xf32, #tpu.memory_space<vmem>>, vector<1x8x8xf32>,
    %132 = arith.truncf %125 : vector<8x8xf32> to vector<8x8xbf16>
    %cst_63 = arith.constant dense<0.000000e+00> : vector<8x8xf32>
    %133 = tpu.matmul %132, %113, %cst_63 {dimension_numbers = #tpu.dot_dimension_numbers<[1], [0], [0], [1], [0, 0, 1, 1], [], []>} : vector<8x8xbf16>, vector<8x8xbf16>, vector<8x8xf32> -> vector<8x8xf32>
    %c0_64 = arith.constant 0 : index
    %c24 = arith.constant 24 : index
    %134 = vector.load %arg16[%c0_64, %c24] : memref<8x32xf32, #tpu.memory_space<vmem>>, vector<8x8xf32>
    tpu.vector_store %arg16[%c0_64, %c24], %133 {strides = array<i32>} : memref<8x32xf32, #tpu.memory_space<vmem>>, vector<8x8xf32>,
    %c0_65 = arith.constant 0 : index
    %c0_66 = arith.constant 0 : index
    %135 = vector.load %arg16[%c0_65, %c0_66] : memref<8x32xf32, #tpu.memory_space<vmem>>, vector<8x32xf32>
    %136 = arith.truncf %135 : vector<8x32xf32> to vector<8x32xbf16>
    %c0_67 = arith.constant 0 : index
    %c0_68 = arith.constant 0 : index
    %137 = vector.load %arg6[%c0_67, %c0_68] : memref<32x32xbf16, #tpu.memory_space<vmem>>, vector<32x32xbf16>
    %cst_69 = arith.constant dense<0.000000e+00> : vector<8x32xf32>
    %138 = tpu.matmul %136, %137, %cst_69 {dimension_numbers = #tpu.dot_dimension_numbers<[1], [0], [0], [1], [0, 0, 1, 1], [], []>} : vector<8x32xbf16>, vector<32x32xbf16>, vector<8x32xf32> -> vector<8x32xf32>
    %c0_70 = arith.constant 0 : index
    %c0_71 = arith.constant 0 : index
    %139 = vector.load %arg7[%c0_70, %c0_71] : memref<1x32xf32, #tpu.memory_space<vmem>>, vector<1x32xf32>
    %140 = vector.broadcast %139 : vector<1x32xf32> to vector<8x32xf32>
    %141 = arith.addf %138, %140 : vector<8x32xf32>
    %142 = arith.addf %141, %1 : vector<8x32xf32>
    %c0_72 = arith.constant 0 : index
    %c0_73 = arith.constant 0 : index
    %c0_74 = arith.constant 0 : index
    %143 = vector.load %arg15[%c0_72, %c0_73, %c0_74] : memref<1x8x8xf32, #tpu.memory_space<vmem>>, vector<1x8x8xf32>
    %144 = vector.shape_cast %143 : vector<1x8x8xf32> to vector<8x8xf32>
    %cst_75 = arith.constant 2.500000e+02 : f32
    %145 = vector.broadcast %cst_75 : f32 to vector<8x8xf32>
    %146 = arith.mulf %144, %145 : vector<8x8xf32>
    %c0_76 = arith.constant 0 : index
    %c0_77 = arith.constant 0 : index
    %c0_78 = arith.constant 0 : index
    %147 = vector.load %arg15[%c0_76, %c0_77, %c0_78] : memref<1x8x8xf32, #tpu.memory_space<vmem>>, vector<1x8x8xf32>
    %148 = vector.shape_cast %147 : vector<1x8x8xf32> to vector<8x8xf32>
    %149 = vector.shape_cast %146 : vector<8x8xf32> to vector<1x8x8xf32>
    tpu.vector_store %arg15[%c0_76, %c0_77, %c0_78], %149 {strides = array<i32>} : memref<1x8x8xf32, #tpu.memory_space<vmem>>, vector<1x8x8xf32>,
    %c0_79 = arith.constant 0 : index
    %c0_80 = arith.constant 0 : index
    %150 = vector.load %arg8[%c0_79, %c0_80] : memref<1x32xf32, #tpu.memory_space<vmem>>, vector<1x32xf32>
    %c0_81 = arith.constant 0 : index
    %c0_82 = arith.constant 0 : index
    %151 = vector.load %arg9[%c0_81, %c0_82] : memref<1x32xf32, #tpu.memory_space<vmem>>, vector<1x32xf32>
    %cst_83 = arith.constant dense<0.000000e+00> : vector<8xf32>
    %152 = vector.multi_reduction <add>, %142, %cst_83 [1] : vector<8x32xf32> to vector<8xf32>
    %153 = vector.shape_cast %152 : vector<8xf32> to vector<8x1xf32>
    %cst_84 = arith.constant 3.200000e+01 : f32
    %154 = vector.broadcast %cst_84 : f32 to vector<8x1xf32>
    %155 = arith.divf %153, %154 : vector<8x1xf32>
    %156 = arith.mulf %142, %142 : vector<8x32xf32>
    %cst_85 = arith.constant dense<0.000000e+00> : vector<8xf32>
    %157 = vector.multi_reduction <add>, %156, %cst_85 [1] : vector<8x32xf32> to vector<8xf32>
    %158 = vector.shape_cast %157 : vector<8xf32> to vector<8x1xf32>
    %cst_86 = arith.constant 3.200000e+01 : f32
    %159 = vector.broadcast %cst_86 : f32 to vector<8x1xf32>
    %160 = arith.divf %158, %159 : vector<8x1xf32>
    %161 = arith.mulf %155, %155 : vector<8x1xf32>
    %162 = arith.subf %160, %161 : vector<8x1xf32>
    %cst_87 = arith.constant 0.000000e+00 : f32
    %163 = vector.broadcast %cst_87 : f32 to vector<8x1xf32>
    %164 = arith.maximumf %162, %163 : vector<8x1xf32>
    %165 = vector.broadcast %155 : vector<8x1xf32> to vector<8x32xf32>
    %166 = arith.subf %142, %165 : vector<8x32xf32>
    %cst_88 = arith.constant 9.99999997E-7 : f32
    %167 = vector.broadcast %cst_88 : f32 to vector<8x1xf32>
    %168 = arith.addf %164, %167 : vector<8x1xf32>
    %169 = math.rsqrt %168 : vector<8x1xf32>
    %170 = vector.broadcast %169 : vector<8x1xf32> to vector<8x32xf32>
    %171 = arith.mulf %166, %170 : vector<8x32xf32>
    %172 = vector.broadcast %150 : vector<1x32xf32> to vector<8x32xf32>
    %173 = arith.mulf %171, %172 : vector<8x32xf32>
    %174 = vector.broadcast %151 : vector<1x32xf32> to vector<8x32xf32>
    %175 = arith.addf %173, %174 : vector<8x32xf32>
    %176 = arith.truncf %175 : vector<8x32xf32> to vector<8x32xbf16>
    %cst_89 = arith.constant 0.000000e+00 : f32
    %177 = vector.broadcast %cst_89 : f32 to vector<8x32xf32>
    %c0_90 = arith.constant 0 : index
    %c0_91 = arith.constant 0 : index
    %178 = vector.load %arg10[%c0_90, %c0_91] : memref<32x64xbf16, #tpu.memory_space<vmem>>, vector<32x64xbf16>
    %cst_92 = arith.constant dense<0.000000e+00> : vector<8x64xf32>
    %179 = tpu.matmul %176, %178, %cst_92 {dimension_numbers = #tpu.dot_dimension_numbers<[1], [0], [0], [1], [0, 0, 1, 1], [], []>} : vector<8x32xbf16>, vector<32x64xbf16>, vector<8x64xf32> -> vector<8x64xf32>
    %c0_93 = arith.constant 0 : index
    %c0_94 = arith.constant 0 : index
    %180 = vector.load %arg11[%c0_93, %c0_94] : memref<1x64xf32, #tpu.memory_space<vmem>>, vector<1x64xf32>
    %181 = vector.broadcast %180 : vector<1x64xf32> to vector<8x64xf32>
    %182 = arith.addf %179, %181 : vector<8x64xf32>
    %cst_95 = arith.constant 5.000000e-01 : f32
    %183 = vector.broadcast %cst_95 : f32 to vector<8x64xf32>
    %184 = arith.mulf %183, %182 : vector<8x64xf32>
    %cst_96 = arith.constant 0.707106769 : f32
    %185 = vector.broadcast %cst_96 : f32 to vector<8x64xf32>
    %186 = arith.mulf %182, %185 : vector<8x64xf32>
    %187 = math.absf %186 : vector<8x64xf32>
    %cst_97 = arith.constant 0.327591091 : f32
    %188 = vector.broadcast %cst_97 : f32 to vector<8x64xf32>
    %189 = arith.mulf %188, %187 : vector<8x64xf32>
    %cst_98 = arith.constant 1.000000e+00 : f32
    %190 = vector.broadcast %cst_98 : f32 to vector<8x64xf32>
    %191 = arith.addf %190, %189 : vector<8x64xf32>
    %192 = tpu.reciprocal %191 {approx = true} : vector<8x64xf32> -> vector<8x64xf32>
    %cst_99 = arith.constant 1.06140542 : f32
    %193 = vector.broadcast %cst_99 : f32 to vector<8x64xf32>
    %194 = arith.mulf %193, %192 : vector<8x64xf32>
    %cst_100 = arith.constant -1.45315206 : f32
    %195 = vector.broadcast %cst_100 : f32 to vector<8x64xf32>
    %196 = arith.addf %194, %195 : vector<8x64xf32>
    %197 = arith.mulf %196, %192 : vector<8x64xf32>
    %cst_101 = arith.constant 1.42141378 : f32
    %198 = vector.broadcast %cst_101 : f32 to vector<8x64xf32>
    %199 = arith.addf %197, %198 : vector<8x64xf32>
    %200 = arith.mulf %199, %192 : vector<8x64xf32>
    %cst_102 = arith.constant -0.284496725 : f32
    %201 = vector.broadcast %cst_102 : f32 to vector<8x64xf32>
    %202 = arith.addf %200, %201 : vector<8x64xf32>
    %203 = arith.mulf %202, %192 : vector<8x64xf32>
    %cst_103 = arith.constant 0.254829586 : f32
    %204 = vector.broadcast %cst_103 : f32 to vector<8x64xf32>
    %205 = arith.addf %203, %204 : vector<8x64xf32>
    %206 = arith.mulf %205, %192 : vector<8x64xf32>
    %cst_104 = arith.constant 0.000000e+00 : f32
    %207 = vector.broadcast %cst_104 : f32 to vector<8x64xf32>
    %208 = arith.subf %207, %187 : vector<8x64xf32>
    %209 = arith.mulf %208, %187 : vector<8x64xf32>
    %210 = math.exp %209 : vector<8x64xf32>
    %211 = arith.mulf %206, %210 : vector<8x64xf32>
    %cst_105 = arith.constant 1.000000e+00 : f32
    %212 = vector.broadcast %cst_105 : f32 to vector<8x64xf32>
    %213 = arith.subf %212, %211 : vector<8x64xf32>
    %cst_106 = arith.constant 0.000000e+00 : f32
    %214 = vector.broadcast %cst_106 : f32 to vector<8x64xf32>
    %215 = arith.cmpf olt, %186, %214 : vector<8x64xf32>
    %cst_107 = arith.constant 0.000000e+00 : f32
    %216 = vector.broadcast %cst_107 : f32 to vector<8x64xf32>
    %217 = arith.subf %216, %213 : vector<8x64xf32>
    %218 = arith.select %215, %217, %213 : vector<8x64xi1>, vector<8x64xf32>
    %cst_108 = arith.constant 1.000000e+00 : f32
    %219 = vector.broadcast %cst_108 : f32 to vector<8x64xf32>
    %220 = arith.addf %219, %218 : vector<8x64xf32>
    %221 = arith.mulf %184, %220 : vector<8x64xf32>
    %222 = arith.truncf %221 : vector<8x64xf32> to vector<8x64xbf16>
    %c0_109 = arith.constant 0 : index
    %c0_110 = arith.constant 0 : index
    %223 = vector.load %arg12[%c0_109, %c0_110] : memref<64x32xbf16, #tpu.memory_space<vmem>>, vector<64x32xbf16>
    %cst_111 = arith.constant dense<0.000000e+00> : vector<8x32xf32>
    %224 = tpu.matmul %222, %223, %cst_111 {dimension_numbers = #tpu.dot_dimension_numbers<[1], [0], [0], [1], [0, 0, 1, 1], [], []>} : vector<8x64xbf16>, vector<64x32xbf16>, vector<8x32xf32> -> vector<8x32xf32>
    %225 = arith.addf %177, %224 : vector<8x32xf32>
    %226 = arith.addf %142, %225 : vector<8x32xf32>
    %c0_112 = arith.constant 0 : index
    %c0_113 = arith.constant 0 : index
    %227 = vector.load %arg13[%c0_112, %c0_113] : memref<1x32xf32, #tpu.memory_space<vmem>>, vector<1x32xf32>
    %228 = vector.broadcast %227 : vector<1x32xf32> to vector<8x32xf32>
    %229 = arith.addf %226, %228 : vector<8x32xf32>
    %c0_114 = arith.constant 0 : index
    %c0_115 = arith.constant 0 : index
    %c0_116 = arith.constant 0 : index
    %230 = vector.load %arg14[%c0_114, %c0_115, %c0_116] : memref<1x8x32xf32, #tpu.memory_space<vmem>>, vector<1x8x32xf32>
    %231 = vector.shape_cast %230 : vector<1x8x32xf32> to vector<8x32xf32>
    %232 = vector.shape_cast %229 : vector<8x32xf32> to vector<1x8x32xf32>
    tpu.vector_store %arg14[%c0_114, %c0_115, %c0_116], %232 {strides = array<i32>} : memref<1x8x32xf32, #tpu.memory_space<vmem>>, vector<1x8x32xf32>,
    return
  }
  func.func @transform_0(%arg0: i32) -> (i32, i32, i32) {
    %c0_i32 = arith.constant 0 : i32
    %c0_i32_0 = arith.constant 0 : i32
    %c0_i32_1 = arith.constant 0 : i32
    return %arg0, %c0_i32, %c0_i32_0 : i32, i32, i32
  }
  func.func @transform_1(%arg0: i32) -> (i32, i32) {
    %c0_i32 = arith.constant 0 : i32
    %c0_i32_0 = arith.constant 0 : i32
    %c0_i32_1 = arith.constant 0 : i32
    return %c0_i32, %c0_i32_0 : i32, i32
  }
  func.func @transform_2(%arg0: i32) -> (i32, i32) {
    %c0_i32 = arith.constant 0 : i32
    %c0_i32_0 = arith.constant 0 : i32
    %c0_i32_1 = arith.constant 0 : i32
    return %c0_i32, %c0_i32_0 : i32, i32
  }
  func.func @transform_3(%arg0: i32) -> (i32, i32) {
    %c0_i32 = arith.constant 0 : i32
    %c0_i32_0 = arith.constant 0 : i32
    %c0_i32_1 = arith.constant 0 : i32
    return %c0_i32, %c0_i32_0 : i32, i32
  }
  func.func @transform_4(%arg0: i32) -> (i32, i32) {
    %c0_i32 = arith.constant 0 : i32
    %c0_i32_0 = arith.constant 0 : i32
    %c0_i32_1 = arith.constant 0 : i32
    return %c0_i32, %c0_i32_0 : i32, i32
  }
  func.func @transform_5(%arg0: i32) -> (i32, i32) {
    %c0_i32 = arith.constant 0 : i32
    %c0_i32_0 = arith.constant 0 : i32
    %c0_i32_1 = arith.constant 0 : i32
    return %c0_i32, %c0_i32_0 : i32, i32
  }
  func.func @transform_6(%arg0: i32) -> (i32, i32) {
    %c0_i32 = arith.constant 0 : i32
    %c0_i32_0 = arith.constant 0 : i32
    %c0_i32_1 = arith.constant 0 : i32
    return %c0_i32, %c0_i32_0 : i32, i32
  }
  func.func @transform_7(%arg0: i32) -> (i32, i32) {
    %c0_i32 = arith.constant 0 : i32
    %c0_i32_0 = arith.constant 0 : i32
    %c0_i32_1 = arith.constant 0 : i32
    return %c0_i32, %c0_i32_0 : i32, i32
  }
  func.func @transform_8(%arg0: i32) -> (i32, i32) {
    %c0_i32 = arith.constant 0 : i32
    %c0_i32_0 = arith.constant 0 : i32
    %c0_i32_1 = arith.constant 0 : i32
    return %c0_i32, %c0_i32_0 : i32, i32
  }
  func.func @transform_9(%arg0: i32) -> (i32, i32) {
    %c0_i32 = arith.constant 0 : i32
    %c0_i32_0 = arith.constant 0 : i32
    %c0_i32_1 = arith.constant 0 : i32
    return %c0_i32, %c0_i32_0 : i32, i32
  }
  func.func @transform_10(%arg0: i32) -> (i32, i32) {
    %c0_i32 = arith.constant 0 : i32
    %c0_i32_0 = arith.constant 0 : i32
    %c0_i32_1 = arith.constant 0 : i32
    return %c0_i32, %c0_i32_0 : i32, i32
  }
  func.func @transform_11(%arg0: i32) -> (i32, i32) {
    %c0_i32 = arith.constant 0 : i32
    %c0_i32_0 = arith.constant 0 : i32
    %c0_i32_1 = arith.constant 0 : i32
    return %c0_i32, %c0_i32_0 : i32, i32
  }
  func.func @transform_12(%arg0: i32) -> (i32, i32) {
    %c0_i32 = arith.constant 0 : i32
    %c0_i32_0 = arith.constant 0 : i32
    %c0_i32_1 = arith.constant 0 : i32
    return %c0_i32, %c0_i32_0 : i32, i32
  }
  func.func @transform_13(%arg0: i32) -> (i32, i32, i32) {
    %c0_i32 = arith.constant 0 : i32
    %c0_i32_0 = arith.constant 0 : i32
    %c0_i32_1 = arith.constant 0 : i32
    return %arg0, %c0_i32, %c0_i32_0 : i32, i32, i32
  }
  func.func @transform_14(%arg0: i32) -> (i32, i32, i32) {
    %c0_i32 = arith.constant 0 : i32
    %c0_i32_0 = arith.constant 0 : i32
    %c0_i32_1 = arith.constant 0 : i32
    return %arg0, %c0_i32, %c0_i32_0 : i32, i32, i32
  }
}

</mosaic_0001>

<llo_original>
// kernel: tpu_custom_call.1
$region0: #{tpu_custom_call.1}
  #allocation0 [shape = 'u32[]', space=smem, size = 0x4, offset = 0x4, fixed_abs, tag = 'smem constant byte address 0x4 - core index']
  #allocation1 [shape = 'u32[144,128]{1,0:T(1,128)}', space=vmem, size = 0x12000, scoped, tag = 'internal scratch']
  #allocation2 [shape = 'f32[8,32]{1,0:T(8,128)}', space=vmem, size = 0x1000, scoped, tag = 'scratch operand']
  %s0 = inlined_call_operand.hbm [shape: f32[2,8,32], index: 0, kind: input, shape index: {}]
  %s1 = inlined_call_operand.hbm [shape: f32[1,32], index: 1, kind: input, shape index: {}]
  %s2 = inlined_call_operand.hbm [shape: f32[1,32], index: 2, kind: input, shape index: {}]
  %s3 = inlined_call_operand.hbm [shape: bf16[32,96], index: 3, kind: input, shape index: {}]
  %s4 = inlined_call_operand.hbm [shape: f32[1,96], index: 4, kind: input, shape index: {}]
  %s5 = inlined_call_operand.hbm [shape: bf16[32,32], index: 5, kind: input, shape index: {}]
  %s6 = inlined_call_operand.hbm [shape: f32[1,32], index: 6, kind: input, shape index: {}]
  %s7 = inlined_call_operand.hbm [shape: f32[1,32], index: 7, kind: input, shape index: {}]
  %s8 = inlined_call_operand.hbm [shape: f32[1,32], index: 8, kind: input, shape index: {}]
  %s9 = inlined_call_operand.hbm [shape: bf16[32,64], index: 9, kind: input, shape index: {}]
  %s10 = inlined_call_operand.hbm [shape: f32[1,64], index: 10, kind: input, shape index: {}]
  %s11 = inlined_call_operand.hbm [shape: bf16[64,32], index: 11, kind: input, shape index: {}]
  %s12 = inlined_call_operand.hbm [shape: f32[1,32], index: 12, kind: input, shape index: {}]
  %s13 = inlined_call_operand.hbm [shape: f32[2,8,32], index: 13, kind: output, shape index: {0}]
  %s14 = inlined_call_operand.hbm [shape: f32[2,8,8], index: 14, kind: output, shape index: {1}]
  %15 = xla_tuple %s13, %s14
  %s16 = sld [smem:[#allocation0]]
  $region145: #{tpu_custom_call.1} parent=0
    _
  %s18 = ssub.s32 1, %s16
  %s19 = scalar_select 0, %s18, %s16
  $region1: #{tpu_custom_call.1} parent=0
    #allocation3 [shape = 'u8[8192]{0}', space=vmem, size = 0x2000, scoped, tag = 'input window, operand 0']
    #allocation4 [shape = 's32[2]{0}', space=sflag, size = 0x8, scoped, tag = 'scoped memory for tpu_custom_call.1']
    #allocation5 [shape = 's32[2]{0}', space=sflag, size = 0x8, scoped, tag = 'scoped memory for tpu_custom_call.1']
    #allocation6 [shape = 'u8[512]{0}', space=vmem, size = 0x400, scoped, tag = 'input window, operand 1, single buffered']
    #allocation7 [shape = 's32[1]{0}', space=sflag, size = 0x4, scoped, tag = 'scoped memory for tpu_custom_call.1']
    #allocation8 [shape = 'u8[512]{0}', space=vmem, size = 0x400, scoped, tag = 'input window, operand 2, single buffered']
    #allocation9 [shape = 'u8[8192]{0}', space=vmem, size = 0x2000, scoped, tag = 'input window, operand 3, single buffered']
    #allocation10 [shape = 's32[1]{0}', space=sflag, size = 0x4, scoped, tag = 'scoped memory for tpu_custom_call.1']
    #allocation11 [shape = 'u8[512]{0}', space=vmem, size = 0x400, scoped, tag = 'input window, operand 4, single buffered']
    #allocation12 [shape = 'u8[8192]{0}', space=vmem, size = 0x2000, scoped, tag = 'input window, operand 5, single buffered']
    #allocation13 [shape = 's32[1]{0}', space=sflag, size = 0x4, scoped, tag = 'scoped memory for tpu_custom_call.1']
    #allocation14 [shape = 'u8[512]{0}', space=vmem, size = 0x400, scoped, tag = 'input window, operand 6, single buffered']
    #allocation15 [shape = 'u8[512]{0}', space=vmem, size = 0x400, scoped, tag = 'input window, operand 7, single buffered']
    #allocation16 [shape = 's32[1]{0}', space=sflag, size = 0x4, scoped, tag = 'scoped memory for tpu_custom_call.1']
    #allocation17 [shape = 'u8[512]{0}', space=vmem, size = 0x400, scoped, tag = 'input window, operand 8, single buffered']
    #allocation18 [shape = 'u8[8192]{0}', space=vmem, size = 0x2000, scoped, tag = 'input window, operand 9, single buffered']
    #allocation19 [shape = 's32[1]{0}', space=sflag, size = 0x4, scoped, tag = 'scoped memory for tpu_custom_call.1']
    #allocation20 [shape = 'u8[512]{0}', space=vmem, size = 0x400, scoped, tag = 'input window, operand 10, single buffered']
    #allocation21 [shape = 'u8[16384]{0}', space=vmem, size = 0x4000, scoped, tag = 'input window, operand 11, single buffered']
    #allocation22 [shape = 's32[1]{0}', space=sflag, size = 0x4, scoped, tag = 'scoped memory for tpu_custom_call.1']
    #allocation23 [shape = 'u8[512]{0}', space=vmem, size = 0x400, scoped, tag = 'input window, operand 12, single buffered']
    #allocation24 [shape = 'u8[8192]{0}', space=vmem, size = 0x2000, scoped, tag = 'output window, operand 0']
    #allocation25 [shape = 'u8[8192]{0}', space=vmem, size = 0x2000, scoped, tag = 'output window, operand 1']
    #allocation26 [shape = 's32[2]{0}', space=sflag, size = 0x8, scoped, tag = 'scoped memory for tpu_custom_call.1']
    %20 = vsyncpa [#allocation4], 0
    %s21 = scalar_lea.sflag [#allocation4], 1
    %22 = vsyncpa %s21, 0
    %23 = vsyncpa [#allocation7], 0
    %24 = vsyncpa [#allocation10], 0
    %25 = vsyncpa [#allocation13], 0
    %26 = vsyncpa [#allocation16], 0
    %27 = vsyncpa [#allocation19], 0
    %28 = vsyncpa [#allocation22], 0
    %29 = vsyncpa [#allocation5], 0
    %s30 = scalar_lea.sflag [#allocation5], 1
    %31 = vsyncpa %s30, 0
    %32 = vsyncpa [#allocation26], 0
    %s33 = scalar_lea.sflag [#allocation26], 1
    %34 = vsyncpa %s33, 0
    loop: start=0, step=1, limit=4
    $region2: #{tpu_custom_call.1} parent=1 // loop_pre_header
      _
    $region3: #{tpu_custom_call.1} parent=1 // loop_header
      %s36 = sphi 0, %s40
      %p37 = scmp.ge.s32.totalorder %s36, 4
      %s46 = sphi 0, %s48
      %s49 = sphi 0, %s46
      %s50 = sphi 0, %s49
      %s66 = sphi 0, %s50
      %s70 = sphi 0, %s70
      %s72 = sphi 0, %s70
      %s73 = sphi 0, %s72
      %s87 = sphi 0, %s73
      %s91 = sphi 0, %s91
      %s93 = sphi 0, %s91
      %s94 = sphi 0, %s93
      %s108 = sphi 0, %s94
      %s112 = sphi 0, %s112
      %s114 = sphi 0, %s112
      %s115 = sphi 0, %s114
      %s129 = sphi 0, %s115
      %s133 = sphi 0, %s133
      %s135 = sphi 0, %s133
      %s136 = sphi 0, %s135
      %s150 = sphi 0, %s136
      %s154 = sphi 0, %s154
      %s156 = sphi 0, %s154
      %s157 = sphi 0, %s156
      %s171 = sphi 0, %s157
      %s175 = sphi 0, %s175
      %s177 = sphi 0, %s175
      %s178 = sphi 0, %s177
      %s192 = sphi 0, %s178
      %s196 = sphi 0, %s196
      %s198 = sphi 0, %s196
      %s199 = sphi 0, %s198
      %s213 = sphi 0, %s199
      %s217 = sphi 0, %s217
      %s219 = sphi 0, %s217
      %s220 = sphi 0, %s219
      %s234 = sphi 0, %s220
      %s238 = sphi 0, %s238
      %s240 = sphi 0, %s238
      %s241 = sphi 0, %s240
      %s255 = sphi 0, %s241
      %s259 = sphi 0, %s259
      %s261 = sphi 0, %s259
      %s262 = sphi 0, %s261
      %s276 = sphi 0, %s262
      %s280 = sphi 0, %s280
      %s282 = sphi 0, %s280
      %s283 = sphi 0, %s282
      %s297 = sphi 0, %s283
      %s301 = sphi 0, %s301
      %s303 = sphi 0, %s301
      %s304 = sphi 0, %s303
      %s318 = sphi 0, %s304
      %s324 = sphi 0, %s326
      %s327 = sphi 0, %s324
      %s328 = sphi 0, %s327
      %s344 = sphi 0, %s328
      %s350 = sphi 0, %s352
      %s353 = sphi 0, %s350
      %s354 = sphi 0, %s353
      %s370 = sphi 0, %s354
    $region4: #{tpu_custom_call.1} parent=1 // loop_header_branch
      %39 = sbr.rel (%p37) target = $region8
    $region5: #{tpu_custom_call.1} parent=1 // loop_body
      %s41 = ssub.s32 %s36, 1
      %s42 = ssub.s32 %s36, 2
      %s43 = sadd.s32 %s36, 1
      %s44 = ssub.s32 %s36, %s43
      %p45 = scmp.eq.s32.totalorder %s44, 0
      %s47 = sadd.s32 %s46, 1
      %s48 = scalar_select %p45, %s46, %s47
      %p51 = pneg %p45
      %p52 = scmp.eq.s32.totalorder %s36, 1
      %p53 = por %p51, %p52
      %p54 = scmp.ne.s32.totalorder %s46, %s49
      %p55 = scmp.eq.s32.totalorder %s36, 0
      %p56 = por %p54, %p55
      %p57 = scmp.ne.s32.totalorder %s46, %s49
      %p58 = scmp.eq.s32.totalorder %s41, 1
      %p59 = por %p57, %p58
      %p60 = scmp.ne.s32.totalorder %s49, %s50
      %p61 = scmp.eq.s32.totalorder %s41, 0
      %p62 = por %p60, %p61
      %p63 = scmp.ne.s32.totalorder %s49, %s50
      %p64 = scmp.eq.s32.totalorder %s42, 1
      %p65 = por %p63, %p64
      %p67 = scmp.ne.s32.totalorder %s50, %s66
      %p68 = scmp.eq.s32.totalorder %s42, 0
      %p69 = por %p67, %p68
      %s71 = sadd.s32 %s70, 1
      %p74 = scmp.eq.s32.totalorder %s36, 1
      %p75 = scmp.ne.s32.totalorder %s70, %s72
      %p76 = scmp.eq.s32.totalorder %s36, 0
      %p77 = por %p75, %p76
      %p78 = scmp.ne.s32.totalorder %s70, %s72
      %p79 = scmp.eq.s32.totalorder %s41, 1
      %p80 = por %p78, %p79
      %p81 = scmp.ne.s32.totalorder %s72, %s73
      %p82 = scmp.eq.s32.totalorder %s41, 0
      %p83 = por %p81, %p82
      %p84 = scmp.ne.s32.totalorder %s72, %s73
      %p85 = scmp.eq.s32.totalorder %s42, 1
      %p86 = por %p84, %p85
      %p88 = scmp.ne.s32.totalorder %s73, %s87
      %p89 = scmp.eq.s32.totalorder %s42, 0
      %p90 = por %p88, %p89
      %s92 = sadd.s32 %s91, 1
      %p95 = scmp.eq.s32.totalorder %s36, 1
      %p96 = scmp.ne.s32.totalorder %s91, %s93
      %p97 = scmp.eq.s32.totalorder %s36, 0
      %p98 = por %p96, %p97
      %p99 = scmp.ne.s32.totalorder %s91, %s93
      %p100 = scmp.eq.s32.totalorder %s41, 1
      %p101 = por %p99, %p100
      %p102 = scmp.ne.s32.totalorder %s93, %s94
      %p103 = scmp.eq.s32.totalorder %s41, 0
      %p104 = por %p102, %p103
      %p105 = scmp.ne.s32.totalorder %s93, %s94
      %p106 = scmp.eq.s32.totalorder %s42, 1
      %p107 = por %p105, %p106
      %p109 = scmp.ne.s32.totalorder %s94, %s108
      %p110 = scmp.eq.s32.totalorder %s42, 0
      %p111 = por %p109, %p110
      %s113 = sadd.s32 %s112, 1
      %p116 = scmp.eq.s32.totalorder %s36, 1
      %p117 = scmp.ne.s32.totalorder %s112, %s114
      %p118 = scmp.eq.s32.totalorder %s36, 0
      %p119 = por %p117, %p118
      %p120 = scmp.ne.s32.totalorder %s112, %s114
      %p121 = scmp.eq.s32.totalorder %s41, 1
      %p122 = por %p120, %p121
      %p123 = scmp.ne.s32.totalorder %s114, %s115
      %p124 = scmp.eq.s32.totalorder %s41, 0
      %p125 = por %p123, %p124
      %p126 = scmp.ne.s32.totalorder %s114, %s115
      %p127 = scmp.eq.s32.totalorder %s42, 1
      %p128 = por %p126, %p127
      %p130 = scmp.ne.s32.totalorder %s115, %s129
      %p131 = scmp.eq.s32.totalorder %s42, 0
      %p132 = por %p130, %p131
      %s134 = sadd.s32 %s133, 1
      %p137 = scmp.eq.s32.totalorder %s36, 1
      %p138 = scmp.ne.s32.totalorder %s133, %s135
      %p139 = scmp.eq.s32.totalorder %s36, 0
      %p140 = por %p138, %p139
      %p141 = scmp.ne.s32.totalorder %s133, %s135
      %p142 = scmp.eq.s32.totalorder %s41, 1
      %p143 = por %p141, %p142
      %p144 = scmp.ne.s32.totalorder %s135, %s136
      %p145 = scmp.eq.s32.totalorder %s41, 0
      %p146 = por %p144, %p145
      %p147 = scmp.ne.s32.totalorder %s135, %s136
      %p148 = scmp.eq.s32.totalorder %s42, 1
      %p149 = por %p147, %p148
      %p151 = scmp.ne.s32.totalorder %s136, %s150
      %p152 = scmp.eq.s32.totalorder %s42, 0
      %p153 = por %p151, %p152
      %s155 = sadd.s32 %s154, 1
      %p158 = scmp.eq.s32.totalorder %s36, 1
      %p159 = scmp.ne.s32.totalorder %s154, %s156
      %p160 = scmp.eq.s32.totalorder %s36, 0
      %p161 = por %p159, %p160
      %p162 = scmp.ne.s32.totalorder %s154, %s156
      %p163 = scmp.eq.s32.totalorder %s41, 1
      %p164 = por %p162, %p163
      %p165 = scmp.ne.s32.totalorder %s156, %s157
      %p166 = scmp.eq.s32.totalorder %s41, 0
      %p167 = por %p165, %p166
      %p168 = scmp.ne.s32.totalorder %s156, %s157
      %p169 = scmp.eq.s32.totalorder %s42, 1
      %p170 = por %p168, %p169
      %p172 = scmp.ne.s32.totalorder %s157, %s171
      %p173 = scmp.eq.s32.totalorder %s42, 0
      %p174 = por %p172, %p173
      %s176 = sadd.s32 %s175, 1
      %p179 = scmp.eq.s32.totalorder %s36, 1
      %p180 = scmp.ne.s32.totalorder %s175, %s177
      %p181 = scmp.eq.s32.totalorder %s36, 0
      %p182 = por %p180, %p181
      %p183 = scmp.ne.s32.totalorder %s175, %s177
      %p184 = scmp.eq.s32.totalorder %s41, 1
      %p185 = por %p183, %p184
      %p186 = scmp.ne.s32.totalorder %s177, %s178
      %p187 = scmp.eq.s32.totalorder %s41, 0
      %p188 = por %p186, %p187
      %p189 = scmp.ne.s32.totalorder %s177, %s178
      %p190 = scmp.eq.s32.totalorder %s42, 1
      %p191 = por %p189, %p190
      %p193 = scmp.ne.s32.totalorder %s178, %s192
      %p194 = scmp.eq.s32.totalorder %s42, 0
      %p195 = por %p193, %p194
      %s197 = sadd.s32 %s196, 1
      %p200 = scmp.eq.s32.totalorder %s36, 1
      %p201 = scmp.ne.s32.totalorder %s196, %s198
      %p202 = scmp.eq.s32.totalorder %s36, 0
      %p203 = por %p201, %p202
      %p204 = scmp.ne.s32.totalorder %s196, %s198
      %p205 = scmp.eq.s32.totalorder %s41, 1
      %p206 = por %p204, %p205
      %p207 = scmp.ne.s32.totalorder %s198, %s199
      %p208 = scmp.eq.s32.totalorder %s41, 0
      %p209 = por %p207, %p208
      %p210 = scmp.ne.s32.totalorder %s198, %s199
      %p211 = scmp.eq.s32.totalorder %s42, 1
      %p212 = por %p210, %p211
      %p214 = scmp.ne.s32.totalorder %s199, %s213
      %p215 = scmp.eq.s32.totalorder %s42, 0
      %p216 = por %p214, %p215
      %s218 = sadd.s32 %s217, 1
      %p221 = scmp.eq.s32.totalorder %s36, 1
      %p222 = scmp.ne.s32.totalorder %s217, %s219
      %p223 = scmp.eq.s32.totalorder %s36, 0
      %p224 = por %p222, %p223
      %p225 = scmp.ne.s32.totalorder %s217, %s219
      %p226 = scmp.eq.s32.totalorder %s41, 1
      %p227 = por %p225, %p226
      %p228 = scmp.ne.s32.totalorder %s219, %s220
      %p229 = scmp.eq.s32.totalorder %s41, 0
      %p230 = por %p228, %p229
      %p231 = scmp.ne.s32.totalorder %s219, %s220
      %p232 = scmp.eq.s32.totalorder %s42, 1
      %p233 = por %p231, %p232
      %p235 = scmp.ne.s32.totalorder %s220, %s234
      %p236 = scmp.eq.s32.totalorder %s42, 0
      %p237 = por %p235, %p236
      %s239 = sadd.s32 %s238, 1
      %p242 = scmp.eq.s32.totalorder %s36, 1
      %p243 = scmp.ne.s32.totalorder %s238, %s240
      %p244 = scmp.eq.s32.totalorder %s36, 0
      %p245 = por %p243, %p244
      %p246 = scmp.ne.s32.totalorder %s238, %s240
      %p247 = scmp.eq.s32.totalorder %s41, 1
      %p248 = por %p246, %p247
      %p249 = scmp.ne.s32.totalorder %s240, %s241
      %p250 = scmp.eq.s32.totalorder %s41, 0
      %p251 = por %p249, %p250
      %p252 = scmp.ne.s32.totalorder %s240, %s241
      %p253 = scmp.eq.s32.totalorder %s42, 1
      %p254 = por %p252, %p253
      %p256 = scmp.ne.s32.totalorder %s241, %s255
      %p257 = scmp.eq.s32.totalorder %s42, 0
      %p258 = por %p256, %p257
      %s260 = sadd.s32 %s259, 1
      %p263 = scmp.eq.s32.totalorder %s36, 1
      %p264 = scmp.ne.s32.totalorder %s259, %s261
      %p265 = scmp.eq.s32.totalorder %s36, 0
      %p266 = por %p264, %p265
      %p267 = scmp.ne.s32.totalorder %s259, %s261
      %p268 = scmp.eq.s32.totalorder %s41, 1
      %p269 = por %p267, %p268
      %p270 = scmp.ne.s32.totalorder %s261, %s262
      %p271 = scmp.eq.s32.totalorder %s41, 0
      %p272 = por %p270, %p271
      %p273 = scmp.ne.s32.totalorder %s261, %s262
      %p274 = scmp.eq.s32.totalorder %s42, 1
      %p275 = por %p273, %p274
      %p277 = scmp.ne.s32.totalorder %s262, %s276
      %p278 = scmp.eq.s32.totalorder %s42, 0
      %p279 = por %p277, %p278
      %s281 = sadd.s32 %s280, 1
      %p284 = scmp.eq.s32.totalorder %s36, 1
      %p285 = scmp.ne.s32.totalorder %s280, %s282
      %p286 = scmp.eq.s32.totalorder %s36, 0
      %p287 = por %p285, %p286
      %p288 = scmp.ne.s32.totalorder %s280, %s282
      %p289 = scmp.eq.s32.totalorder %s41, 1
      %p290 = por %p288, %p289
      %p291 = scmp.ne.s32.totalorder %s282, %s283
      %p292 = scmp.eq.s32.totalorder %s41, 0
      %p293 = por %p291, %p292
      %p294 = scmp.ne.s32.totalorder %s282, %s283
      %p295 = scmp.eq.s32.totalorder %s42, 1
      %p296 = por %p294, %p295
      %p298 = scmp.ne.s32.totalorder %s283, %s297
      %p299 = scmp.eq.s32.totalorder %s42, 0
      %p300 = por %p298, %p299
      %s302 = sadd.s32 %s301, 1
      %p305 = scmp.eq.s32.totalorder %s36, 1
      %p306 = scmp.ne.s32.totalorder %s301, %s303
      %p307 = scmp.eq.s32.totalorder %s36, 0
      %p308 = por %p306, %p307
      %p309 = scmp.ne.s32.totalorder %s301, %s303
      %p310 = scmp.eq.s32.totalorder %s41, 1
      %p311 = por %p309, %p310
      %p312 = scmp.ne.s32.totalorder %s303, %s304
      %p313 = scmp.eq.s32.totalorder %s41, 0
      %p314 = por %p312, %p313
      %p315 = scmp.ne.s32.totalorder %s303, %s304
      %p316 = scmp.eq.s32.totalorder %s42, 1
      %p317 = por %p315, %p316
      %p319 = scmp.ne.s32.totalorder %s304, %s318
      %p320 = scmp.eq.s32.totalorder %s42, 0
      %p321 = por %p319, %p320
      %s322 = ssub.s32 %s36, %s43
      %p323 = scmp.eq.s32.totalorder %s322, 0
      %s325 = sadd.s32 %s324, 1
      %s326 = scalar_select %p323, %s324, %s325
      %p329 = pneg %p323
      %p330 = scmp.eq.s32.totalorder %s36, 1
      %p331 = por %p329, %p330
      %p332 = scmp.ne.s32.totalorder %s324, %s327
      %p333 = scmp.eq.s32.totalorder %s36, 0
      %p334 = por %p332, %p333
      %p335 = scmp.ne.s32.totalorder %s324, %s327
      %p336 = scmp.eq.s32.totalorder %s41, 1
      %p337 = por %p335, %p336
      %p338 = scmp.ne.s32.totalorder %s327, %s328
      %p339 = scmp.eq.s32.totalorder %s41, 0
      %p340 = por %p338, %p339
      %p341 = scmp.ne.s32.totalorder %s327, %s328
      %p342 = scmp.eq.s32.totalorder %s42, 1
      %p343 = por %p341, %p342
      %p345 = scmp.ne.s32.totalorder %s328, %s344
      %p346 = scmp.eq.s32.totalorder %s42, 0
      %p347 = por %p345, %p346
      %s348 = ssub.s32 %s36, %s43
      %p349 = scmp.eq.s32.totalorder %s348, 0
      %s351 = sadd.s32 %s350, 1
      %s352 = scalar_select %p349, %s350, %s351
      %p355 = pneg %p349
      %p356 = scmp.eq.s32.totalorder %s36, 1
      %p357 = por %p355, %p356
      %p358 = scmp.ne.s32.totalorder %s350, %s353
      %p359 = scmp.eq.s32.totalorder %s36, 0
      %p360 = por %p358, %p359
      %p361 = scmp.ne.s32.totalorder %s350, %s353
      %p362 = scmp.eq.s32.totalorder %s41, 1
      %p363 = por %p361, %p362
      %p364 = scmp.ne.s32.totalorder %s353, %s354
      %p365 = scmp.eq.s32.totalorder %s41, 0
      %p366 = por %p364, %p365
      %p367 = scmp.ne.s32.totalorder %s353, %s354
      %p368 = scmp.eq.s32.totalorder %s42, 1
      %p369 = por %p367, %p368
      %p371 = scmp.ne.s32.totalorder %s354, %s370
      %p372 = scmp.eq.s32.totalorder %s42, 0
      %p373 = por %p371, %p372
      %p374 = scmp.le.s32.totalorder 1, %s36
      %p375 = scmp.lt.s32.totalorder %s36, 3
      %p376 = pnand %p374, %p375
      %p377 = pneg %p376
      // Predicated region
      $region9: #{tpu_custom_call.1} parent=5 // pred_check
        _
      $region10: #{tpu_custom_call.1} parent=5 // pred_check_branch
        %379 = sbr.rel (%p376) target = $region12
      $region11: #{tpu_custom_call.1} parent=5 // pred_region
        %s380 = ssub.s32 %s36, 1
        // Predicated region
        $region13: #{tpu_custom_call.1} parent=11 // pred_check
          %p381 = pneg %p83
        $region14: #{tpu_custom_call.1} parent=11 // pred_check_branch
          %383 = sbr.rel (%p381) target = $region16
        $region15: #{tpu_custom_call.1} parent=11 // pred_region
          %s385 = ssub.s32 16, 16
          %386 = vsyncadd [#allocation7], %s385
          %s388 = sshll.u32 [#allocation6], 4
          %s389 = int_to_ptr.vmem [resolvable:$true] %s388
          %391 = dma.hbm_to_vmem [thread:$0]  %s1, 16, %s389, [#allocation7]
        $region16: #{tpu_custom_call.1} parent=11 // pred_fallthru
          _
        // Predicated region
        $region17: #{tpu_custom_call.1} parent=11 // pred_check
          %p392 = pneg %p104
        $region18: #{tpu_custom_call.1} parent=11 // pred_check_branch
          %394 = sbr.rel (%p392) target = $region20
        $region19: #{tpu_custom_call.1} parent=11 // pred_region
          %s396 = ssub.s32 16, 16
          %397 = vsyncadd [#allocation7], %s396
          %s399 = sshll.u32 [#allocation8], 4
          %s400 = int_to_ptr.vmem [resolvable:$true] %s399
          %402 = dma.hbm_to_vmem [thread:$0]  %s2, 16, %s400, [#allocation7]
        $region20: #{tpu_custom_call.1} parent=11 // pred_fallthru
          _
        // Predicated region
        $region21: #{tpu_custom_call.1} parent=11 // pred_check
          %p403 = pneg %p125
        $region22: #{tpu_custom_call.1} parent=11 // pred_check_branch
          %405 = sbr.rel (%p403) target = $region24
        $region23: #{tpu_custom_call.1} parent=11 // pred_region
          %s407 = ssub.s32 256, 256
          %408 = vsyncadd [#allocation10], %s407
          %s409 = sshll.u32 [#allocation9], 4
          %s410 = int_to_ptr.vmem [resolvable:$true] %s409
          %415 = dma.hbm_to_vmem [thread:$0]  %s3, 256, %s410, [#allocation10], 64, 64, 4
        $region24: #{tpu_custom_call.1} parent=11 // pred_fallthru
          _
        // Predicated region
        $region25: #{tpu_custom_call.1} parent=11 // pred_check
          %p416 = pneg %p146
        $region26: #{tpu_custom_call.1} parent=11 // pred_check_branch
          %418 = sbr.rel (%p416) target = $region28
        $region27: #{tpu_custom_call.1} parent=11 // pred_region
          %s420 = ssub.s32 16, 16
          %421 = vsyncadd [#allocation10], %s420
          %s423 = sshll.u32 [#allocation11], 4
          %s424 = int_to_ptr.vmem [resolvable:$true] %s423
          %426 = dma.hbm_to_vmem [thread:$0]  %s4, 16, %s424, [#allocation10]
        $region28: #{tpu_custom_call.1} parent=11 // pred_fallthru
          _
        // Predicated region
        $region29: #{tpu_custom_call.1} parent=11 // pred_check
          %p427 = pneg %p167
        $region30: #{tpu_custom_call.1} parent=11 // pred_check_branch
          %429 = sbr.rel (%p427) target = $region32
        $region31: #{tpu_custom_call.1} parent=11 // pred_region
          %s431 = ssub.s32 256, 256
          %432 = vsyncadd [#allocation13], %s431
          %s433 = sshll.u32 [#allocation12], 4
          %s434 = int_to_ptr.vmem [resolvable:$true] %s433
          %439 = dma.hbm_to_vmem [thread:$0]  %s5, 256, %s434, [#allocation13], 64, 64, 4
        $region32: #{tpu_custom_call.1} parent=11 // pred_fallthru
          _
        // Predicated region
        $region33: #{tpu_custom_call.1} parent=11 // pred_check
          %p440 = pneg %p188
        $region34: #{tpu_custom_call.1} parent=11 // pred_check_branch
          %442 = sbr.rel (%p440) target = $region36
        $region35: #{tpu_custom_call.1} parent=11 // pred_region
          %s444 = ssub.s32 16, 16
          %445 = vsyncadd [#allocation13], %s444
          %s447 = sshll.u32 [#allocation14], 4
          %s448 = int_to_ptr.vmem [resolvable:$true] %s447
          %450 = dma.hbm_to_vmem [thread:$0]  %s6, 16, %s448, [#allocation13]
        $region36: #{tpu_custom_call.1} parent=11 // pred_fallthru
          _
        // Predicated region
        $region37: #{tpu_custom_call.1} parent=11 // pred_check
          %p451 = pneg %p209
        $region38: #{tpu_custom_call.1} parent=11 // pred_check_branch
          %453 = sbr.rel (%p451) target = $region40
        $region39: #{tpu_custom_call.1} parent=11 // pred_region
          %s455 = ssub.s32 16, 16
          %456 = vsyncadd [#allocation16], %s455
          %s458 = sshll.u32 [#allocation15], 4
          %s459 = int_to_ptr.vmem [resolvable:$true] %s458
          %461 = dma.hbm_to_vmem [thread:$0]  %s7, 16, %s459, [#allocation16]
        $region40: #{tpu_custom_call.1} parent=11 // pred_fallthru
          _
        // Predicated region
        $region41: #{tpu_custom_call.1} parent=11 // pred_check
          %p462 = pneg %p230
        $region42: #{tpu_custom_call.1} parent=11 // pred_check_branch
          %464 = sbr.rel (%p462) target = $region44
        $region43: #{tpu_custom_call.1} parent=11 // pred_region
          %s466 = ssub.s32 16, 16
          %467 = vsyncadd [#allocation16], %s466
          %s469 = sshll.u32 [#allocation17], 4
          %s470 = int_to_ptr.vmem [resolvable:$true] %s469
          %472 = dma.hbm_to_vmem [thread:$0]  %s8, 16, %s470, [#allocation16]
        $region44: #{tpu_custom_call.1} parent=11 // pred_fallthru
          _
        // Predicated region
        $region45: #{tpu_custom_call.1} parent=11 // pred_check
          %p473 = pneg %p251
        $region46: #{tpu_custom_call.1} parent=11 // pred_check_branch
          %475 = sbr.rel (%p473) target = $region48
        $region47: #{tpu_custom_call.1} parent=11 // pred_region
          %s477 = ssub.s32 256, 256
          %478 = vsyncadd [#allocation19], %s477
          %s479 = sshll.u32 [#allocation18], 4
          %s480 = int_to_ptr.vmem [resolvable:$true] %s479
          %485 = dma.hbm_to_vmem [thread:$0]  %s9, 256, %s480, [#allocation19], 64, 64, 4
        $region48: #{tpu_custom_call.1} parent=11 // pred_fallthru
          _
        // Predicated region
        $region49: #{tpu_custom_call.1} parent=11 // pred_check
          %p486 = pneg %p272
        $region50: #{tpu_custom_call.1} parent=11 // pred_check_branch
          %488 = sbr.rel (%p486) target = $region52
        $region51: #{tpu_custom_call.1} parent=11 // pred_region
          %s490 = ssub.s32 16, 16
          %491 = vsyncadd [#allocation19], %s490
          %s493 = sshll.u32 [#allocation20], 4
          %s494 = int_to_ptr.vmem [resolvable:$true] %s493
          %496 = dma.hbm_to_vmem [thread:$0]  %s10, 16, %s494, [#allocation19]
        $region52: #{tpu_custom_call.1} parent=11 // pred_fallthru
          _
        // Predicated region
        $region53: #{tpu_custom_call.1} parent=11 // pred_check
          %p497 = pneg %p293
        $region54: #{tpu_custom_call.1} parent=11 // pred_check_branch
          %499 = sbr.rel (%p497) target = $region56
        $region55: #{tpu_custom_call.1} parent=11 // pred_region
          %s501 = ssub.s32 512, 512
          %502 = vsyncadd [#allocation22], %s501
          %s503 = sshll.u32 [#allocation21], 4
          %s504 = int_to_ptr.vmem [resolvable:$true] %s503
          %509 = dma.hbm_to_vmem [thread:$0]  %s11, 512, %s504, [#allocation22], 64, 64, 4
        $region56: #{tpu_custom_call.1} parent=11 // pred_fallthru
          _
        // Predicated region
        $region57: #{tpu_custom_call.1} parent=11 // pred_check
          %p510 = pneg %p314
        $region58: #{tpu_custom_call.1} parent=11 // pred_check_branch
          %512 = sbr.rel (%p510) target = $region60
        $region59: #{tpu_custom_call.1} parent=11 // pred_region
          %s514 = ssub.s32 16, 16
          %515 = vsyncadd [#allocation22], %s514
          %s517 = sshll.u32 [#allocation23], 4
          %s518 = int_to_ptr.vmem [resolvable:$true] %s517
          %520 = dma.hbm_to_vmem [thread:$0]  %s12, 16, %s518, [#allocation22]
        $region60: #{tpu_custom_call.1} parent=11 // pred_fallthru
          _
      $region12: #{tpu_custom_call.1} parent=5 // pred_fallthru
        _
      %p521 = scmp.lt.s32.totalorder %s36, 2
      // Predicated region
      $region61: #{tpu_custom_call.1} parent=5 // pred_check
        %p522 = pneg %p521
      $region62: #{tpu_custom_call.1} parent=5 // pred_check_branch
        %524 = sbr.rel (%p522) target = $region64
      $region63: #{tpu_custom_call.1} parent=5 // pred_region
        // Predicated region
        $region65: #{tpu_custom_call.1} parent=63 // pred_check
          %p525 = pneg %p56
        $region66: #{tpu_custom_call.1} parent=63 // pred_check_branch
          %527 = sbr.rel (%p525) target = $region68
        $region67: #{tpu_custom_call.1} parent=63 // pred_region
          %s528 = sand.u32 %s46, 1
          %s529 = scalar_lea.sflag [#allocation4], %s528
          %s530 = sand.u32 %s46, 1
          %s531 = smul.addr %s530, 8
          %s532 = scalar_lea.vmem [#allocation3], %s531
          %s534 = ssub.s32 128, 128
          %535 = vsyncadd %s529, %s534
          %s536 = smul.addr %s36, 128
          %s537 = scalar_lea.hbm %s0, %s536
          %s539 = sshll.u32 %s532, 4
          %s540 = int_to_ptr.vmem [resolvable:$true] %s539
          %542 = dma.hbm_to_vmem [thread:$0]  %s537, 128, %s540, %s529
        $region68: #{tpu_custom_call.1} parent=63 // pred_fallthru
          _
      $region64: #{tpu_custom_call.1} parent=5 // pred_fallthru
        _
      %p543 = scmp.le.s32.totalorder 1, %s36
      %p544 = scmp.lt.s32.totalorder %s36, 3
      %p545 = pnand %p543, %p544
      %p546 = pneg %p545
      // Predicated region
      $region69: #{tpu_custom_call.1} parent=5 // pred_check
        _
      $region70: #{tpu_custom_call.1} parent=5 // pred_check_branch
        %548 = sbr.rel (%p545) target = $region72
      $region71: #{tpu_custom_call.1} parent=5 // pred_region
        %s549 = ssub.s32 %s36, 1
        %s550 = sand.u32 %s49, 1
        %s551 = scalar_lea.sflag [#allocation4], %s550
        %s552 = sand.u32 %s49, 1
        %s553 = smul.addr %s552, 8
        %s554 = scalar_lea.vmem [#allocation3], %s553
        // Predicated region
        $region73: #{tpu_custom_call.1} parent=71 // pred_check
          %p555 = pneg %p62
        $region74: #{tpu_custom_call.1} parent=71 // pred_check_branch
          %557 = sbr.rel (%p555) target = $region76
        $region75: #{tpu_custom_call.1} parent=71 // pred_region
          %558 = dma.done %s551, 128
        $region76: #{tpu_custom_call.1} parent=71 // pred_fallthru
          _
        // Predicated region
        $region77: #{tpu_custom_call.1} parent=71 // pred_check
          %p559 = pneg %p83
        $region78: #{tpu_custom_call.1} parent=71 // pred_check_branch
          %561 = sbr.rel (%p559) target = $region80
        $region79: #{tpu_custom_call.1} parent=71 // pred_region
          %562 = dma.done [#allocation7], 16
        $region80: #{tpu_custom_call.1} parent=71 // pred_fallthru
          _
        // Predicated region
        $region81: #{tpu_custom_call.1} parent=71 // pred_check
          %p563 = pneg %p104
        $region82: #{tpu_custom_call.1} parent=71 // pred_check_branch
          %565 = sbr.rel (%p563) target = $region84
        $region83: #{tpu_custom_call.1} parent=71 // pred_region
          %566 = dma.done [#allocation7], 16
        $region84: #{tpu_custom_call.1} parent=71 // pred_fallthru
          _
        // Predicated region
        $region85: #{tpu_custom_call.1} parent=71 // pred_check
          %p567 = pneg %p125
        $region86: #{tpu_custom_call.1} parent=71 // pred_check_branch
          %569 = sbr.rel (%p567) target = $region88
        $region87: #{tpu_custom_call.1} parent=71 // pred_region
          %570 = dma.done [#allocation10], 256
        $region88: #{tpu_custom_call.1} parent=71 // pred_fallthru
          _
        // Predicated region
        $region89: #{tpu_custom_call.1} parent=71 // pred_check
          %p571 = pneg %p146
        $region90: #{tpu_custom_call.1} parent=71 // pred_check_branch
          %573 = sbr.rel (%p571) target = $region92
        $region91: #{tpu_custom_call.1} parent=71 // pred_region
          %574 = dma.done [#allocation10], 16
        $region92: #{tpu_custom_call.1} parent=71 // pred_fallthru
          _
        // Predicated region
        $region93: #{tpu_custom_call.1} parent=71 // pred_check
          %p575 = pneg %p167
        $region94: #{tpu_custom_call.1} parent=71 // pred_check_branch
          %577 = sbr.rel (%p575) target = $region96
        $region95: #{tpu_custom_call.1} parent=71 // pred_region
          %578 = dma.done [#allocation13], 256
        $region96: #{tpu_custom_call.1} parent=71 // pred_fallthru
          _
        // Predicated region
        $region97: #{tpu_custom_call.1} parent=71 // pred_check
          %p579 = pneg %p188
        $region98: #{tpu_custom_call.1} parent=71 // pred_check_branch
          %581 = sbr.rel (%p579) target = $region100
        $region99: #{tpu_custom_call.1} parent=71 // pred_region
          %582 = dma.done [#allocation13], 16
        $region100: #{tpu_custom_call.1} parent=71 // pred_fallthru
          _
        // Predicated region
        $region101: #{tpu_custom_call.1} parent=71 // pred_check
          %p583 = pneg %p209
        $region102: #{tpu_custom_call.1} parent=71 // pred_check_branch
          %585 = sbr.rel (%p583) target = $region104
        $region103: #{tpu_custom_call.1} parent=71 // pred_region
          %586 = dma.done [#allocation16], 16
        $region104: #{tpu_custom_call.1} parent=71 // pred_fallthru
          _
        // Predicated region
        $region105: #{tpu_custom_call.1} parent=71 // pred_check
          %p587 = pneg %p230
        $region106: #{tpu_custom_call.1} parent=71 // pred_check_branch
          %589 = sbr.rel (%p587) target = $region108
        $region107: #{tpu_custom_call.1} parent=71 // pred_region
          %590 = dma.done [#allocation16], 16
        $region108: #{tpu_custom_call.1} parent=71 // pred_fallthru
          _
        // Predicated region
        $region109: #{tpu_custom_call.1} parent=71 // pred_check
          %p591 = pneg %p251
        $region110: #{tpu_custom_call.1} parent=71 // pred_check_branch
          %593 = sbr.rel (%p591) target = $region112
        $region111: #{tpu_custom_call.1} parent=71 // pred_region
          %594 = dma.done [#allocation19], 256
        $region112: #{tpu_custom_call.1} parent=71 // pred_fallthru
          _
        // Predicated region
        $region113: #{tpu_custom_call.1} parent=71 // pred_check
          %p595 = pneg %p272
        $region114: #{tpu_custom_call.1} parent=71 // pred_check_branch
          %597 = sbr.rel (%p595) target = $region116
        $region115: #{tpu_custom_call.1} parent=71 // pred_region
          %598 = dma.done [#allocation19], 16
        $region116: #{tpu_custom_call.1} parent=71 // pred_fallthru
          _
        // Predicated region
        $region117: #{tpu_custom_call.1} parent=71 // pred_check
          %p599 = pneg %p293
        $region118: #{tpu_custom_call.1} parent=71 // pred_check_branch
          %601 = sbr.rel (%p599) target = $region120
        $region119: #{tpu_custom_call.1} parent=71 // pred_region
          %602 = dma.done [#allocation22], 512
        $region120: #{tpu_custom_call.1} parent=71 // pred_fallthru
          _
        // Predicated region
        $region121: #{tpu_custom_call.1} parent=71 // pred_check
          %p603 = pneg %p314
        $region122: #{tpu_custom_call.1} parent=71 // pred_check_branch
          %605 = sbr.rel (%p603) target = $region124
        $region123: #{tpu_custom_call.1} parent=71 // pred_region
          %606 = dma.done [#allocation22], 16
        $region124: #{tpu_custom_call.1} parent=71 // pred_fallthru
          _
        %s607 = sand.u32 %s49, 1
        %s608 = scalar_lea.sflag [#allocation4], %s607
        %s609 = sand.u32 %s49, 1
        %s610 = smul.addr %s609, 8
        %s611 = scalar_lea.vmem [#allocation3], %s610
        %p612 = pneg %p62
        %p613 = pneg %p59
        %p614 = pneg %p83
        %p615 = pneg %p80
        %p616 = pneg %p104
        %p617 = pneg %p101
        %p618 = pneg %p125
        %p619 = pneg %p122
        %p620 = pneg %p146
        %p621 = pneg %p143
        %p622 = pneg %p167
        %p623 = pneg %p164
        %p624 = pneg %p188
        %p625 = pneg %p185
        %p626 = pneg %p209
        %p627 = pneg %p206
        %p628 = pneg %p230
        %p629 = pneg %p227
        %p630 = pneg %p251
        %p631 = pneg %p248
        %p632 = pneg %p272
        %p633 = pneg %p269
        %p634 = pneg %p293
        %p635 = pneg %p290
        %p636 = pneg %p314
        %p637 = pneg %p311
        %p638 = pneg %p340
        %p639 = pneg %p337
        %s640 = sand.u32 %s327, 1
        %s641 = scalar_lea.sflag [#allocation5], %s640
        %s642 = sand.u32 %s327, 1
        %s643 = smul.addr %s642, 8
        %s644 = scalar_lea.vmem [#allocation24], %s643
        %p645 = pneg %p366
        %p646 = pneg %p363
        %s647 = sand.u32 %s353, 1
        %s648 = scalar_lea.sflag [#allocation26], %s647
        %s649 = sand.u32 %s353, 1
        %s650 = smul.addr %s649, 8
        %s651 = scalar_lea.vmem [#allocation25], %s650
        %v653 = vld [vmem:[%s554] sm:$0xff]
        %v654 = vld [vmem:[#allocation6] sm:$0x1]
        %v655 = vld [vmem:[#allocation8] sm:$0x1]
        %vm656 = vcmask 261120
        %v657 = vsel %vm656, %v653, 0.0
        %658 = vadd.xlane.f32.xlu0 %v657
        %v659 = vpop.xlane.xlu0 %658
        %v660 = vrcp.pop 32.0
        %v661 = vmul.f32 %v659, %v660
        %v662 = vmul.f32 %v653, %v653
        %v663 = vsel %vm656, %v662, 0.0
        %664 = vadd.xlane.f32.xlu0 %v663
        %v665 = vpop.xlane.xlu0 %664
        %v666 = vmul.f32 %v665, %v660
        %v667 = vmul.f32 %v661, %v661
        %v668 = vsub.f32 %v666, %v667
        %v669 = vmax.f32 %v668, 0.0
        %v670 = vsub.f32 %v653, %v661
        %v671 = vadd.f32 %v669, 1e-06
        %v672 = vrsqrt.pop %v671
        %v673 = vmul.f32 %v670, %v672
        %v675 = vlaneseq
        %v676 = vshrl.u32 %v675, 7
        %v677 = vsub.s32 0, %v676
        %v678 = vrot.slane %v654, %v677
        %v680 = vmul.f32 %v673, %v678
        %v682 = vlaneseq
        %v683 = vshrl.u32 %v682, 7
        %v684 = vsub.s32 0, %v683
        %v685 = vrot.slane %v655, %v684
        %v687 = vadd.f32 %v680, %v685
        %v688 = vpack.c.bf16 %v687, %v687
        %v689 = vld [vmem:[#allocation9] sm:$0xf]
        %v690 = vld [vmem:[#allocation9 + $0x4] sm:$0xf]
        %v691 = vld [vmem:[#allocation9 + $0x8] sm:$0xf]
        %v692 = vld [vmem:[#allocation9 + $0xc] sm:$0xf]
        %v693 = vld [vmem:[#allocation11] sm:$0x1]
        %v695 = vlaneseq
        %v696 = vshrl.u32 %v695, 7
        %v697 = vsub.s32 0, %v696
        %v698 = vrot.slane %v693, %v697
        %v704 = vunpack.c.l.b16 %v689
        %v705 = vunpack.c.l.b16 %v690
        %v706 = vunpack.c.l.b16 %v691
        %v707 = vunpack.c.l.b16 %v692
        %v708 = vpack.c.b16 %v705, %v704
        %v709 = vpack.c.b16 %v707, %v706
        %v713 = vsel %vm656, %v688, 0
        %715 = vmatprep.subr.bf16.mxu0 0
        %716 = vmatpush1.bf16.msra.mxu0 %v708
        %717 = vmatprep.subr.bf16.mxu0 0
        %718 = vmatpush1.bf16.msra.mxu0 %v709
        %719 = vmatprep.subr.bf16.mxu0 0
        %720 = vmatpush1.bf16.msra.mxu0 0
        %721 = vmatprep.subr.bf16.mxu0 0
        %722 = vmatpush1.bf16.msra.mxu0 0
        %723 = vmatprep.subr.bf16.mxu0 0
        %724 = vmatpush1.bf16.msra.mxu0 0
        %725 = vmatprep.subr.bf16.mxu0 0
        %726 = vmatpush1.bf16.msra.mxu0 0
        %727 = vmatprep.subr.bf16.mxu0 0
        %728 = vmatpush1.bf16.msra.mxu0 0
        %729 = vmatprep.subr.bf16.mxu0 0
        %730 = vmatpush1.bf16.msra.mxu0 0
        %731 = vmatprep.subr.bf16.mxu0 0
        %732 = vmatpush1.bf16.msra.mxu0 0
        %733 = vmatprep.subr.bf16.mxu0 0
        %734 = vmatpush1.bf16.msra.mxu0 0
        %735 = vmatprep.subr.bf16.mxu0 0
        %736 = vmatpush1.bf16.msra.mxu0 0
        %737 = vmatprep.subr.bf16.mxu0 0
        %738 = vmatpush1.bf16.msra.mxu0 0
        %739 = vmatprep.subr.bf16.mxu0 0
        %740 = vmatpush1.bf16.msra.mxu0 0
        %741 = vmatprep.subr.bf16.mxu0 0
        %742 = vmatpush1.bf16.msra.mxu0 0
        %743 = vmatprep.subr.bf16.mxu0 0
        %744 = vmatpush1.bf16.msra.mxu0 0
        %745 = vmatprep.subr.bf16.mxu0 0
        %746 = vmatpush1.bf16.msra.mxu0 0
        %747 = vmatprep.mubr.bf16.mxu0 0
        %748 = vmatmul.mubr.bf16.gmra.mrb[0].mxu0 %v713
        %v749 = vpop.f32.mrb[0].mxu0
        %v750 = vadd.f32 %v698, %v749
        %v751 = vpop.f32.mrb[0].mxu0
        %v752 = vpop.f32.mrb[0].mxu0
        %v753 = vpop.f32.mrb[0].mxu0
        %754 = vdwg.mxu0
        %v755 = vpack.c.bf16 %v750, %v750
        %vm756 = vcmask 64512
        %757 = vst.msk [vmem:[%s651] sm:$0xff] %vm756, 0.0
        %759 = vrot.lane.b32.xlu0 %v755, 96
        %v760 = vpop.permute.xlu0 %759
        %v762 = vsel %vm756, %v755, 0
        %v765 = vsel %vm756, %v760, 0
        %767 = vmatprep.subr.bf16.mxu0 0
        %768 = vmatpush1.bf16.xpose.msra.mxu0 %v765
        %769 = vmatprep.subr.bf16.mxu0 0
        %770 = vmatpush1.bf16.xpose.msra.mxu0 0
        %771 = vmatprep.subr.bf16.mxu0 0
        %772 = vmatpush1.bf16.xpose.msra.mxu0 0
        %773 = vmatprep.subr.bf16.mxu0 0
        %774 = vmatpush1.bf16.xpose.msra.mxu0 0
        %775 = vmatprep.subr.bf16.mxu0 0
        %776 = vmatpush1.bf16.xpose.msra.mxu0 0
        %777 = vmatprep.subr.bf16.mxu0 0
        %778 = vmatpush1.bf16.xpose.msra.mxu0 0
        %779 = vmatprep.subr.bf16.mxu0 0
        %780 = vmatpush1.bf16.xpose.msra.mxu0 0
        %781 = vmatprep.subr.bf16.mxu0 0
        %782 = vmatpush1.bf16.xpose.msra.mxu0 0
        %783 = vmatprep.subr.bf16.mxu0 0
        %784 = vmatpush1.bf16.xpose.msra.mxu0 0
        %785 = vmatprep.subr.bf16.mxu0 0
        %786 = vmatpush1.bf16.xpose.msra.mxu0 0
        %787 = vmatprep.subr.bf16.mxu0 0
        %788 = vmatpush1.bf16.xpose.msra.mxu0 0
        %789 = vmatprep.subr.bf16.mxu0 0
        %790 = vmatpush1.bf16.xpose.msra.mxu0 0
        %791 = vmatprep.subr.bf16.mxu0 0
        %792 = vmatpush1.bf16.xpose.msra.mxu0 0
        %793 = vmatprep.subr.bf16.mxu0 0
        %794 = vmatpush1.bf16.xpose.msra.mxu0 0
        %795 = vmatprep.subr.bf16.mxu0 0
        %796 = vmatpush1.bf16.xpose.msra.mxu0 0
        %797 = vmatprep.subr.bf16.mxu0 0
        %798 = vmatpush1.bf16.xpose.msra.mxu0 0
        %799 = vmatprep.mubr.bf16.mxu0 0
        %800 = vmatmul.mubr.bf16.gmra.mrb[0].mxu0 %v762
        %v801 = vpop.f32.mrb[0].mxu0
        %v802 = vadd.f32 0.0, %v801
        %v803 = vpop.f32.mrb[0].mxu0
        %v804 = vpop.f32.mrb[0].mxu0
        %v805 = vpop.f32.mrb[0].mxu0
        %806 = vdwg.mxu0
        %v807 = vsel %vm756, %v802, -inf
        %808 = vmax.xlane.f32.xlu0 %v807
        %v809 = vpop.xlane.xlu0 %808
        %v810 = vsub.f32 %v802, %v809
        %v811 = vmul.f32 %v810, 1.442695
        %v812 = vpow.pop %v811
        %v813 = vsel %vm756, %v812, 0.0
        %814 = vadd.xlane.f32.xlu0 %v813
        %v815 = vpop.xlane.xlu0 %814
        %v816 = vrcp.pop %v815
        %v817 = vmul.f32 %v812, %v816
        %v818 = vld [vmem:[%s651] sm:$0xff]
        %v819 = vadd.f32 %v818, %v817
        %820 = vst.msk [vmem:[%s651] sm:$0xff] %vm756, %v819
        %v821 = vpack.c.bf16 %v817, %v817
        %822 = vrot.lane.b32.xlu0 %v755, 64
        %v823 = vpop.permute.xlu0 %822
        %v825 = vsel %vm756, %v821, 0
        %vm827 = vcmask 1043456
        %v829 = vsel %vm827, %v823, 0
        %831 = vmatprep.subr.bf16.mxu0 0
        %832 = vmatpush1.bf16.msra.mxu0 %v829
        %833 = vmatprep.subr.bf16.mxu0 0
        %834 = vmatpush1.bf16.msra.mxu0 0
        %835 = vmatprep.subr.bf16.mxu0 0
        %836 = vmatpush1.bf16.msra.mxu0 0
        %837 = vmatprep.subr.bf16.mxu0 0
        %838 = vmatpush1.bf16.msra.mxu0 0
        %839 = vmatprep.subr.bf16.mxu0 0
        %840 = vmatpush1.bf16.msra.mxu0 0
        %841 = vmatprep.subr.bf16.mxu0 0
        %842 = vmatpush1.bf16.msra.mxu0 0
        %843 = vmatprep.subr.bf16.mxu0 0
        %844 = vmatpush1.bf16.msra.mxu0 0
        %845 = vmatprep.subr.bf16.mxu0 0
        %846 = vmatpush1.bf16.msra.mxu0 0
        %847 = vmatprep.subr.bf16.mxu0 0
        %848 = vmatpush1.bf16.msra.mxu0 0
        %849 = vmatprep.subr.bf16.mxu0 0
        %850 = vmatpush1.bf16.msra.mxu0 0
        %851 = vmatprep.subr.bf16.mxu0 0
        %852 = vmatpush1.bf16.msra.mxu0 0
        %853 = vmatprep.subr.bf16.mxu0 0
        %854 = vmatpush1.bf16.msra.mxu0 0
        %855 = vmatprep.subr.bf16.mxu0 0
        %856 = vmatpush1.bf16.msra.mxu0 0
        %857 = vmatprep.subr.bf16.mxu0 0
        %858 = vmatpush1.bf16.msra.mxu0 0
        %859 = vmatprep.subr.bf16.mxu0 0
        %860 = vmatpush1.bf16.msra.mxu0 0
        %861 = vmatprep.subr.bf16.mxu0 0
        %862 = vmatpush1.bf16.msra.mxu0 0
        %863 = vmatprep.mubr.bf16.mxu0 0
        %864 = vmatmul.mubr.bf16.gmra.mrb[0].mxu0 %v825
        %v865 = vpop.f32.mrb[0].mxu0
        %v866 = vadd.f32 0.0, %v865
        %v867 = vpop.f32.mrb[0].mxu0
        %v868 = vpop.f32.mrb[0].mxu0
        %v869 = vpop.f32.mrb[0].mxu0
        %870 = vdwg.mxu0
        %871 = vst.msk [vmem:[#allocation2] sm:$0xff] %vm756, %v866
        %872 = vrot.lane.b32.xlu0 %v755, 120
        %v873 = vpop.permute.xlu0 %872
        %874 = vrot.lane.b32.xlu0 %v755, 88
        %v875 = vpop.permute.xlu0 %874
        %v877 = vsel %vm756, %v873, 0
        %v880 = vsel %vm756, %v875, 0
        %882 = vmatprep.subr.bf16.mxu0 0
        %883 = vmatpush1.bf16.xpose.msra.mxu0 %v880
        %884 = vmatprep.subr.bf16.mxu0 0
        %885 = vmatpush1.bf16.xpose.msra.mxu0 0
        %886 = vmatprep.subr.bf16.mxu0 0
        %887 = vmatpush1.bf16.xpose.msra.mxu0 0
        %888 = vmatprep.subr.bf16.mxu0 0
        %889 = vmatpush1.bf16.xpose.msra.mxu0 0
        %890 = vmatprep.subr.bf16.mxu0 0
        %891 = vmatpush1.bf16.xpose.msra.mxu0 0
        %892 = vmatprep.subr.bf16.mxu0 0
        %893 = vmatpush1.bf16.xpose.msra.mxu0 0
        %894 = vmatprep.subr.bf16.mxu0 0
        %895 = vmatpush1.bf16.xpose.msra.mxu0 0
        %896 = vmatprep.subr.bf16.mxu0 0
        %897 = vmatpush1.bf16.xpose.msra.mxu0 0
        %898 = vmatprep.subr.bf16.mxu0 0
        %899 = vmatpush1.bf16.xpose.msra.mxu0 0
        %900 = vmatprep.subr.bf16.mxu0 0
        %901 = vmatpush1.bf16.xpose.msra.mxu0 0
        %902 = vmatprep.subr.bf16.mxu0 0
        %903 = vmatpush1.bf16.xpose.msra.mxu0 0
        %904 = vmatprep.subr.bf16.mxu0 0
        %905 = vmatpush1.bf16.xpose.msra.mxu0 0
        %906 = vmatprep.subr.bf16.mxu0 0
        %907 = vmatpush1.bf16.xpose.msra.mxu0 0
        %908 = vmatprep.subr.bf16.mxu0 0
        %909 = vmatpush1.bf16.xpose.msra.mxu0 0
        %910 = vmatprep.subr.bf16.mxu0 0
        %911 = vmatpush1.bf16.xpose.msra.mxu0 0
        %912 = vmatprep.subr.bf16.mxu0 0
        %913 = vmatpush1.bf16.xpose.msra.mxu0 0
        %914 = vmatprep.mubr.bf16.mxu0 0
        %915 = vmatmul.mubr.bf16.gmra.mrb[0].mxu0 %v877
        %v916 = vpop.f32.mrb[0].mxu0
        %v917 = vadd.f32 0.0, %v916
        %v918 = vpop.f32.mrb[0].mxu0
        %v919 = vpop.f32.mrb[0].mxu0
        %v920 = vpop.f32.mrb[0].mxu0
        %921 = vdwg.mxu0
        %v922 = vsel %vm756, %v917, -inf
        %923 = vmax.xlane.f32.xlu0 %v922
        %v924 = vpop.xlane.xlu0 %923
        %v925 = vsub.f32 %v917, %v924
        %v926 = vmul.f32 %v925, 1.442695
        %v927 = vpow.pop %v926
        %v928 = vsel %vm756, %v927, 0.0
        %929 = vadd.xlane.f32.xlu0 %v928
        %v930 = vpop.xlane.xlu0 %929
        %v931 = vrcp.pop %v930
        %v932 = vmul.f32 %v927, %v931
        %v933 = vld [vmem:[%s651] sm:$0xff]
        %v934 = vadd.f32 %v933, %v932
        %935 = vst.msk [vmem:[%s651] sm:$0xff] %vm756, %v934
        %v936 = vpack.c.bf16 %v932, %v932
        %937 = vrot.lane.b32.xlu0 %v755, 56
        %v938 = vpop.permute.xlu0 %937
        %v940 = vsel %vm756, %v936, 0
        %v943 = vsel %vm827, %v938, 0
        %945 = vmatprep.subr.bf16.mxu0 0
        %946 = vmatpush1.bf16.msra.mxu0 %v943
        %947 = vmatprep.subr.bf16.mxu0 0
        %948 = vmatpush1.bf16.msra.mxu0 0
        %949 = vmatprep.subr.bf16.mxu0 0
        %950 = vmatpush1.bf16.msra.mxu0 0
        %951 = vmatprep.subr.bf16.mxu0 0
        %952 = vmatpush1.bf16.msra.mxu0 0
        %953 = vmatprep.subr.bf16.mxu0 0
        %954 = vmatpush1.bf16.msra.mxu0 0
        %955 = vmatprep.subr.bf16.mxu0 0
        %956 = vmatpush1.bf16.msra.mxu0 0
        %957 = vmatprep.subr.bf16.mxu0 0
        %958 = vmatpush1.bf16.msra.mxu0 0
        %959 = vmatprep.subr.bf16.mxu0 0
        %960 = vmatpush1.bf16.msra.mxu0 0
        %961 = vmatprep.subr.bf16.mxu0 0
        %962 = vmatpush1.bf16.msra.mxu0 0
        %963 = vmatprep.subr.bf16.mxu0 0
        %964 = vmatpush1.bf16.msra.mxu0 0
        %965 = vmatprep.subr.bf16.mxu0 0
        %966 = vmatpush1.bf16.msra.mxu0 0
        %967 = vmatprep.subr.bf16.mxu0 0
        %968 = vmatpush1.bf16.msra.mxu0 0
        %969 = vmatprep.subr.bf16.mxu0 0
        %970 = vmatpush1.bf16.msra.mxu0 0
        %971 = vmatprep.subr.bf16.mxu0 0
        %972 = vmatpush1.bf16.msra.mxu0 0
        %973 = vmatprep.subr.bf16.mxu0 0
        %974 = vmatpush1.bf16.msra.mxu0 0
        %975 = vmatprep.subr.bf16.mxu0 0
        %976 = vmatpush1.bf16.msra.mxu0 0
        %977 = vmatprep.mubr.bf16.mxu0 0
        %978 = vmatmul.mubr.bf16.gmra.mrb[0].mxu0 %v940
        %v979 = vpop.f32.mrb[0].mxu0
        %v980 = vadd.f32 0.0, %v979
        %v981 = vpop.f32.mrb[0].mxu0
        %v982 = vpop.f32.mrb[0].mxu0
        %v983 = vpop.f32.mrb[0].mxu0
        %984 = vdwg.mxu0
        %986 = vrot.lane.b32.xlu0 %v980, 8
        %v987 = vpop.permute.xlu0 %986
        %vm989 = vcmask 130112
        %990 = vst.msk [vmem:[#allocation2] sm:$0xff] %vm989, %v987
        %991 = vrot.lane.b32.xlu0 %v755, 112
        %v992 = vpop.permute.xlu0 %991
        %993 = vrot.lane.b32.xlu0 %v755, 80
        %v994 = vpop.permute.xlu0 %993
        %v996 = vsel %vm756, %v992, 0
        %v999 = vsel %vm756, %v994, 0
        %1001 = vmatprep.subr.bf16.mxu0 0
        %1002 = vmatpush1.bf16.xpose.msra.mxu0 %v999
        %1003 = vmatprep.subr.bf16.mxu0 0
        %1004 = vmatpush1.bf16.xpose.msra.mxu0 0
        %1005 = vmatprep.subr.bf16.mxu0 0
        %1006 = vmatpush1.bf16.xpose.msra.mxu0 0
        %1007 = vmatprep.subr.bf16.mxu0 0
        %1008 = vmatpush1.bf16.xpose.msra.mxu0 0
        %1009 = vmatprep.subr.bf16.mxu0 0
        %1010 = vmatpush1.bf16.xpose.msra.mxu0 0
        %1011 = vmatprep.subr.bf16.mxu0 0
        %1012 = vmatpush1.bf16.xpose.msra.mxu0 0
        %1013 = vmatprep.subr.bf16.mxu0 0
        %1014 = vmatpush1.bf16.xpose.msra.mxu0 0
        %1015 = vmatprep.subr.bf16.mxu0 0
        %1016 = vmatpush1.bf16.xpose.msra.mxu0 0
        %1017 = vmatprep.subr.bf16.mxu0 0
        %1018 = vmatpush1.bf16.xpose.msra.mxu0 0
        %1019 = vmatprep.subr.bf16.mxu0 0
        %1020 = vmatpush1.bf16.xpose.msra.mxu0 0
        %1021 = vmatprep.subr.bf16.mxu0 0
        %1022 = vmatpush1.bf16.xpose.msra.mxu0 0
        %1023 = vmatprep.subr.bf16.mxu0 0
        %1024 = vmatpush1.bf16.xpose.msra.mxu0 0
        %1025 = vmatprep.subr.bf16.mxu0 0
        %1026 = vmatpush1.bf16.xpose.msra.mxu0 0
        %1027 = vmatprep.subr.bf16.mxu0 0
        %1028 = vmatpush1.bf16.xpose.msra.mxu0 0
        %1029 = vmatprep.subr.bf16.mxu0 0
        %1030 = vmatpush1.bf16.xpose.msra.mxu0 0
        %1031 = vmatprep.subr.bf16.mxu0 0
        %1032 = vmatpush1.bf16.xpose.msra.mxu0 0
        %1033 = vmatprep.mubr.bf16.mxu0 0
        %1034 = vmatmul.mubr.bf16.gmra.mrb[0].mxu0 %v996
        %v1035 = vpop.f32.mrb[0].mxu0
        %v1036 = vadd.f32 0.0, %v1035
        %v1037 = vpop.f32.mrb[0].mxu0
        %v1038 = vpop.f32.mrb[0].mxu0
        %v1039 = vpop.f32.mrb[0].mxu0
        %1040 = vdwg.mxu0
        %v1041 = vsel %vm756, %v1036, -inf
        %1042 = vmax.xlane.f32.xlu0 %v1041
        %v1043 = vpop.xlane.xlu0 %1042
        %v1044 = vsub.f32 %v1036, %v1043
        %v1045 = vmul.f32 %v1044, 1.442695
        %v1046 = vpow.pop %v1045
        %v1047 = vsel %vm756, %v1046, 0.0
        %1048 = vadd.xlane.f32.xlu0 %v1047
        %v1049 = vpop.xlane.xlu0 %1048
        %v1050 = vrcp.pop %v1049
        %v1051 = vmul.f32 %v1046, %v1050
        %v1052 = vld [vmem:[%s651] sm:$0xff]
        %v1053 = vadd.f32 %v1052, %v1051
        %1054 = vst.msk [vmem:[%s651] sm:$0xff] %vm756, %v1053
        %v1055 = vpack.c.bf16 %v1051, %v1051
        %1056 = vrot.lane.b32.xlu0 %v755, 48
        %v1057 = vpop.permute.xlu0 %1056
        %v1059 = vsel %vm756, %v1055, 0
        %v1062 = vsel %vm827, %v1057, 0
        %1064 = vmatprep.subr.bf16.mxu0 0
        %1065 = vmatpush1.bf16.msra.mxu0 %v1062
        %1066 = vmatprep.subr.bf16.mxu0 0
        %1067 = vmatpush1.bf16.msra.mxu0 0
        %1068 = vmatprep.subr.bf16.mxu0 0
        %1069 = vmatpush1.bf16.msra.mxu0 0
        %1070 = vmatprep.subr.bf16.mxu0 0
        %1071 = vmatpush1.bf16.msra.mxu0 0
        %1072 = vmatprep.subr.bf16.mxu0 0
        %1073 = vmatpush1.bf16.msra.mxu0 0
        %1074 = vmatprep.subr.bf16.mxu0 0
        %1075 = vmatpush1.bf16.msra.mxu0 0
        %1076 = vmatprep.subr.bf16.mxu0 0
        %1077 = vmatpush1.bf16.msra.mxu0 0
        %1078 = vmatprep.subr.bf16.mxu0 0
        %1079 = vmatpush1.bf16.msra.mxu0 0
        %1080 = vmatprep.subr.bf16.mxu0 0
        %1081 = vmatpush1.bf16.msra.mxu0 0
        %1082 = vmatprep.subr.bf16.mxu0 0
        %1083 = vmatpush1.bf16.msra.mxu0 0
        %1084 = vmatprep.subr.bf16.mxu0 0
        %1085 = vmatpush1.bf16.msra.mxu0 0
        %1086 = vmatprep.subr.bf16.mxu0 0
        %1087 = vmatpush1.bf16.msra.mxu0 0
        %1088 = vmatprep.subr.bf16.mxu0 0
        %1089 = vmatpush1.bf16.msra.mxu0 0
        %1090 = vmatprep.subr.bf16.mxu0 0
        %1091 = vmatpush1.bf16.msra.mxu0 0
        %1092 = vmatprep.subr.bf16.mxu0 0
        %1093 = vmatpush1.bf16.msra.mxu0 0
        %1094 = vmatprep.subr.bf16.mxu0 0
        %1095 = vmatpush1.bf16.msra.mxu0 0
        %1096 = vmatprep.mubr.bf16.mxu0 0
        %1097 = vmatmul.mubr.bf16.gmra.mrb[0].mxu0 %v1059
        %v1098 = vpop.f32.mrb[0].mxu0
        %v1099 = vadd.f32 0.0, %v1098
        %v1100 = vpop.f32.mrb[0].mxu0
        %v1101 = vpop.f32.mrb[0].mxu0
        %v1102 = vpop.f32.mrb[0].mxu0
        %1103 = vdwg.mxu0
        %1105 = vrot.lane.b32.xlu0 %v1099, 16
        %v1106 = vpop.permute.xlu0 %1105
        %vm1108 = vcmask 195712
        %1109 = vst.msk [vmem:[#allocation2] sm:$0xff] %vm1108, %v1106
        %1110 = vrot.lane.b32.xlu0 %v755, 104
        %v1111 = vpop.permute.xlu0 %1110
        %1112 = vrot.lane.b32.xlu0 %v755, 72
        %v1113 = vpop.permute.xlu0 %1112
        %v1115 = vsel %vm756, %v1111, 0
        %v1118 = vsel %vm756, %v1113, 0
        %1120 = vmatprep.subr.bf16.mxu0 0
        %1121 = vmatpush1.bf16.xpose.msra.mxu0 %v1118
        %1122 = vmatprep.subr.bf16.mxu0 0
        %1123 = vmatpush1.bf16.xpose.msra.mxu0 0
        %1124 = vmatprep.subr.bf16.mxu0 0
        %1125 = vmatpush1.bf16.xpose.msra.mxu0 0
        %1126 = vmatprep.subr.bf16.mxu0 0
        %1127 = vmatpush1.bf16.xpose.msra.mxu0 0
        %1128 = vmatprep.subr.bf16.mxu0 0
        %1129 = vmatpush1.bf16.xpose.msra.mxu0 0
        %1130 = vmatprep.subr.bf16.mxu0 0
        %1131 = vmatpush1.bf16.xpose.msra.mxu0 0
        %1132 = vmatprep.subr.bf16.mxu0 0
        %1133 = vmatpush1.bf16.xpose.msra.mxu0 0
        %1134 = vmatprep.subr.bf16.mxu0 0
        %1135 = vmatpush1.bf16.xpose.msra.mxu0 0
        %1136 = vmatprep.subr.bf16.mxu0 0
        %1137 = vmatpush1.bf16.xpose.msra.mxu0 0
        %1138 = vmatprep.subr.bf16.mxu0 0
        %1139 = vmatpush1.bf16.xpose.msra.mxu0 0
        %1140 = vmatprep.subr.bf16.mxu0 0
        %1141 = vmatpush1.bf16.xpose.msra.mxu0 0
        %1142 = vmatprep.subr.bf16.mxu0 0
        %1143 = vmatpush1.bf16.xpose.msra.mxu0 0
        %1144 = vmatprep.subr.bf16.mxu0 0
        %1145 = vmatpush1.bf16.xpose.msra.mxu0 0
        %1146 = vmatprep.subr.bf16.mxu0 0
        %1147 = vmatpush1.bf16.xpose.msra.mxu0 0
        %1148 = vmatprep.subr.bf16.mxu0 0
        %1149 = vmatpush1.bf16.xpose.msra.mxu0 0
        %1150 = vmatprep.subr.bf16.mxu0 0
        %1151 = vmatpush1.bf16.xpose.msra.mxu0 0
        %1152 = vmatprep.mubr.bf16.mxu0 0
        %1153 = vmatmul.mubr.bf16.gmra.mrb[0].mxu0 %v1115
        %v1154 = vpop.f32.mrb[0].mxu0
        %v1155 = vadd.f32 0.0, %v1154
        %v1156 = vpop.f32.mrb[0].mxu0
        %v1157 = vpop.f32.mrb[0].mxu0
        %v1158 = vpop.f32.mrb[0].mxu0
        %1159 = vdwg.mxu0
        %v1160 = vsel %vm756, %v1155, -inf
        %1161 = vmax.xlane.f32.xlu0 %v1160
        %v1162 = vpop.xlane.xlu0 %1161
        %v1163 = vsub.f32 %v1155, %v1162
        %v1164 = vmul.f32 %v1163, 1.442695
        %v1165 = vpow.pop %v1164
        %v1166 = vsel %vm756, %v1165, 0.0
        %1167 = vadd.xlane.f32.xlu0 %v1166
        %v1168 = vpop.xlane.xlu0 %1167
        %v1169 = vrcp.pop %v1168
        %v1170 = vmul.f32 %v1165, %v1169
        %v1171 = vld [vmem:[%s651] sm:$0xff]
        %v1172 = vadd.f32 %v1171, %v1170
        %1173 = vst.msk [vmem:[%s651] sm:$0xff] %vm756, %v1172
        %v1174 = vpack.c.bf16 %v1170, %v1170
        %1175 = vrot.lane.b32.xlu0 %v755, 40
        %v1176 = vpop.permute.xlu0 %1175
        %v1178 = vsel %vm756, %v1174, 0
        %v1181 = vsel %vm827, %v1176, 0
        %1183 = vmatprep.subr.bf16.mxu0 0
        %1184 = vmatpush1.bf16.msra.mxu0 %v1181
        %1185 = vmatprep.subr.bf16.mxu0 0
        %1186 = vmatpush1.bf16.msra.mxu0 0
        %1187 = vmatprep.subr.bf16.mxu0 0
        %1188 = vmatpush1.bf16.msra.mxu0 0
        %1189 = vmatprep.subr.bf16.mxu0 0
        %1190 = vmatpush1.bf16.msra.mxu0 0
        %1191 = vmatprep.subr.bf16.mxu0 0
        %1192 = vmatpush1.bf16.msra.mxu0 0
        %1193 = vmatprep.subr.bf16.mxu0 0
        %1194 = vmatpush1.bf16.msra.mxu0 0
        %1195 = vmatprep.subr.bf16.mxu0 0
        %1196 = vmatpush1.bf16.msra.mxu0 0
        %1197 = vmatprep.subr.bf16.mxu0 0
        %1198 = vmatpush1.bf16.msra.mxu0 0
        %1199 = vmatprep.subr.bf16.mxu0 0
        %1200 = vmatpush1.bf16.msra.mxu0 0
        %1201 = vmatprep.subr.bf16.mxu0 0
        %1202 = vmatpush1.bf16.msra.mxu0 0
        %1203 = vmatprep.subr.bf16.mxu0 0
        %1204 = vmatpush1.bf16.msra.mxu0 0
        %1205 = vmatprep.subr.bf16.mxu0 0
        %1206 = vmatpush1.bf16.msra.mxu0 0
        %1207 = vmatprep.subr.bf16.mxu0 0
        %1208 = vmatpush1.bf16.msra.mxu0 0
        %1209 = vmatprep.subr.bf16.mxu0 0
        %1210 = vmatpush1.bf16.msra.mxu0 0
        %1211 = vmatprep.subr.bf16.mxu0 0
        %1212 = vmatpush1.bf16.msra.mxu0 0
        %1213 = vmatprep.subr.bf16.mxu0 0
        %1214 = vmatpush1.bf16.msra.mxu0 0
        %1215 = vmatprep.mubr.bf16.mxu0 0
        %1216 = vmatmul.mubr.bf16.gmra.mrb[0].mxu0 %v1178
        %v1217 = vpop.f32.mrb[0].mxu0
        %v1218 = vadd.f32 0.0, %v1217
        %v1219 = vpop.f32.mrb[0].mxu0
        %v1220 = vpop.f32.mrb[0].mxu0
        %v1221 = vpop.f32.mrb[0].mxu0
        %1222 = vdwg.mxu0
        %1224 = vrot.lane.b32.xlu0 %v1218, 24
        %v1225 = vpop.permute.xlu0 %1224
        %vm1227 = vcmask 261312
        %1228 = vst.msk [vmem:[#allocation2] sm:$0xff] %vm1227, %v1225
        %v1229 = vld [vmem:[#allocation2] sm:$0xff]
        %v1230 = vpack.c.bf16 %v1229, %v1229
        %v1231 = vld [vmem:[#allocation12] sm:$0xf]
        %v1232 = vld [vmem:[#allocation12 + $0x4] sm:$0xf]
        %v1233 = vld [vmem:[#allocation12 + $0x8] sm:$0xf]
        %v1234 = vld [vmem:[#allocation12 + $0xc] sm:$0xf]
        %v1235 = vld [vmem:[#allocation14] sm:$0x1]
        %v1237 = vlaneseq
        %v1238 = vshrl.u32 %v1237, 7
        %v1239 = vsub.s32 0, %v1238
        %v1240 = vrot.slane %v1235, %v1239
        %v1246 = vunpack.c.l.b16 %v1231
        %v1247 = vunpack.c.l.b16 %v1232
        %v1248 = vunpack.c.l.b16 %v1233
        %v1249 = vunpack.c.l.b16 %v1234
        %v1250 = vpack.c.b16 %v1247, %v1246
        %v1251 = vpack.c.b16 %v1249, %v1248
        %v1255 = vsel %vm656, %v1230, 0
        %1257 = vmatprep.subr.bf16.mxu0 0
        %1258 = vmatpush1.bf16.msra.mxu0 %v1250
        %1259 = vmatprep.subr.bf16.mxu0 0
        %1260 = vmatpush1.bf16.msra.mxu0 %v1251
        %1261 = vmatprep.subr.bf16.mxu0 0
        %1262 = vmatpush1.bf16.msra.mxu0 0
        %1263 = vmatprep.subr.bf16.mxu0 0
        %1264 = vmatpush1.bf16.msra.mxu0 0
        %1265 = vmatprep.subr.bf16.mxu0 0
        %1266 = vmatpush1.bf16.msra.mxu0 0
        %1267 = vmatprep.subr.bf16.mxu0 0
        %1268 = vmatpush1.bf16.msra.mxu0 0
        %1269 = vmatprep.subr.bf16.mxu0 0
        %1270 = vmatpush1.bf16.msra.mxu0 0
        %1271 = vmatprep.subr.bf16.mxu0 0
        %1272 = vmatpush1.bf16.msra.mxu0 0
        %1273 = vmatprep.subr.bf16.mxu0 0
        %1274 = vmatpush1.bf16.msra.mxu0 0
        %1275 = vmatprep.subr.bf16.mxu0 0
        %1276 = vmatpush1.bf16.msra.mxu0 0
        %1277 = vmatprep.subr.bf16.mxu0 0
        %1278 = vmatpush1.bf16.msra.mxu0 0
        %1279 = vmatprep.subr.bf16.mxu0 0
        %1280 = vmatpush1.bf16.msra.mxu0 0
        %1281 = vmatprep.subr.bf16.mxu0 0
        %1282 = vmatpush1.bf16.msra.mxu0 0
        %1283 = vmatprep.subr.bf16.mxu0 0
        %1284 = vmatpush1.bf16.msra.mxu0 0
        %1285 = vmatprep.subr.bf16.mxu0 0
        %1286 = vmatpush1.bf16.msra.mxu0 0
        %1287 = vmatprep.subr.bf16.mxu0 0
        %1288 = vmatpush1.bf16.msra.mxu0 0
        %1289 = vmatprep.mubr.bf16.mxu0 0
        %1290 = vmatmul.mubr.bf16.gmra.mrb[0].mxu0 %v1255
        %v1291 = vpop.f32.mrb[0].mxu0
        %v1292 = vadd.f32 %v1240, %v1291
        %v1293 = vpop.f32.mrb[0].mxu0
        %v1294 = vpop.f32.mrb[0].mxu0
        %v1295 = vpop.f32.mrb[0].mxu0
        %1296 = vdwg.mxu0
        %v1297 = vadd.f32 %v1292, %v653
        %v1298 = vld [vmem:[%s651] sm:$0xff]
        %v1299 = vmul.f32 %v1298, 250.0
        %1300 = vst.msk [vmem:[%s651] sm:$0xff] %vm756, %v1299
        %v1301 = vld [vmem:[#allocation15] sm:$0x1]
        %v1302 = vld [vmem:[#allocation17] sm:$0x1]
        %v1303 = vsel %vm656, %v1297, 0.0
        %1304 = vadd.xlane.f32.xlu0 %v1303
        %v1305 = vpop.xlane.xlu0 %1304
        %v1306 = vmul.f32 %v1305, %v660
        %v1307 = vmul.f32 %v1297, %v1297
        %v1308 = vsel %vm656, %v1307, 0.0
        %1309 = vadd.xlane.f32.xlu0 %v1308
        %v1310 = vpop.xlane.xlu0 %1309
        %v1311 = vmul.f32 %v1310, %v660
        %v1312 = vmul.f32 %v1306, %v1306
        %v1313 = vsub.f32 %v1311, %v1312
        %v1314 = vmax.f32 %v1313, 0.0
        %v1315 = vsub.f32 %v1297, %v1306
        %v1316 = vadd.f32 %v1314, 1e-06
        %v1317 = vrsqrt.pop %v1316
        %v1318 = vmul.f32 %v1315, %v1317
        %v1320 = vlaneseq
        %v1321 = vshrl.u32 %v1320, 7
        %v1322 = vsub.s32 0, %v1321
        %v1323 = vrot.slane %v1301, %v1322
        %v1325 = vmul.f32 %v1318, %v1323
        %v1327 = vlaneseq
        %v1328 = vshrl.u32 %v1327, 7
        %v1329 = vsub.s32 0, %v1328
        %v1330 = vrot.slane %v1302, %v1329
        %v1332 = vadd.f32 %v1325, %v1330
        %v1333 = vpack.c.bf16 %v1332, %v1332
        %v1334 = vld [vmem:[#allocation18] sm:$0xf]
        %v1335 = vld [vmem:[#allocation18 + $0x4] sm:$0xf]
        %v1336 = vld [vmem:[#allocation18 + $0x8] sm:$0xf]
        %v1337 = vld [vmem:[#allocation18 + $0xc] sm:$0xf]
        %v1338 = vld [vmem:[#allocation20] sm:$0x1]
        %v1340 = vlaneseq
        %v1341 = vshrl.u32 %v1340, 7
        %v1342 = vsub.s32 0, %v1341
        %v1343 = vrot.slane %v1338, %v1342
        %v1349 = vunpack.c.l.b16 %v1334
        %v1350 = vunpack.c.l.b16 %v1335
        %v1351 = vunpack.c.l.b16 %v1336
        %v1352 = vunpack.c.l.b16 %v1337
        %v1353 = vpack.c.b16 %v1350, %v1349
        %v1354 = vpack.c.b16 %v1352, %v1351
        %v1358 = vsel %vm656, %v1333, 0
        %1360 = vmatprep.subr.bf16.mxu0 0
        %1361 = vmatpush1.bf16.msra.mxu0 %v1353
        %1362 = vmatprep.subr.bf16.mxu0 0
        %1363 = vmatpush1.bf16.msra.mxu0 %v1354
        %1364 = vmatprep.subr.bf16.mxu0 0
        %1365 = vmatpush1.bf16.msra.mxu0 0
        %1366 = vmatprep.subr.bf16.mxu0 0
        %1367 = vmatpush1.bf16.msra.mxu0 0
        %1368 = vmatprep.subr.bf16.mxu0 0
        %1369 = vmatpush1.bf16.msra.mxu0 0
        %1370 = vmatprep.subr.bf16.mxu0 0
        %1371 = vmatpush1.bf16.msra.mxu0 0
        %1372 = vmatprep.subr.bf16.mxu0 0
        %1373 = vmatpush1.bf16.msra.mxu0 0
        %1374 = vmatprep.subr.bf16.mxu0 0
        %1375 = vmatpush1.bf16.msra.mxu0 0
        %1376 = vmatprep.subr.bf16.mxu0 0
        %1377 = vmatpush1.bf16.msra.mxu0 0
        %1378 = vmatprep.subr.bf16.mxu0 0
        %1379 = vmatpush1.bf16.msra.mxu0 0
        %1380 = vmatprep.subr.bf16.mxu0 0
        %1381 = vmatpush1.bf16.msra.mxu0 0
        %1382 = vmatprep.subr.bf16.mxu0 0
        %1383 = vmatpush1.bf16.msra.mxu0 0
        %1384 = vmatprep.subr.bf16.mxu0 0
        %1385 = vmatpush1.bf16.msra.mxu0 0
        %1386 = vmatprep.subr.bf16.mxu0 0
        %1387 = vmatpush1.bf16.msra.mxu0 0
        %1388 = vmatprep.subr.bf16.mxu0 0
        %1389 = vmatpush1.bf16.msra.mxu0 0
        %1390 = vmatprep.subr.bf16.mxu0 0
        %1391 = vmatpush1.bf16.msra.mxu0 0
        %1392 = vmatprep.mubr.bf16.mxu0 0
        %1393 = vmatmul.mubr.bf16.gmra.mrb[0].mxu0 %v1358
        %v1394 = vpop.f32.mrb[0].mxu0
        %v1395 = vadd.f32 %v1343, %v1394
        %v1396 = vpop.f32.mrb[0].mxu0
        %v1397 = vpop.f32.mrb[0].mxu0
        %v1398 = vpop.f32.mrb[0].mxu0
        %1399 = vdwg.mxu0
        %v1400 = vmul.f32 %v1395, 0.5
        %v1401 = vmul.f32 %v1395, 0.70710677
        %v1402 = vand.u32 2147483647, %v1401
        %v1403 = vmul.f32 %v1402, 0.3275911
        %v1404 = vadd.f32 %v1403, 1.0
        %v1405 = vrcp.pop %v1404
        %v1406 = vmul.f32 %v1405, 1.0614054
        %v1407 = vadd.f32 %v1406, -1.4531521
        %v1408 = vmul.f32 %v1407, %v1405
        %v1409 = vadd.f32 %v1408, 1.4214138
        %v1410 = vmul.f32 %v1409, %v1405
        %v1411 = vadd.f32 %v1410, -0.28449672
        %v1412 = vmul.f32 %v1411, %v1405
        %v1413 = vadd.f32 %v1412, 0.2548296
        %v1414 = vmul.f32 %v1413, %v1405
        %v1415 = vsub.f32 0.0, %v1402
        %v1416 = vmul.f32 %v1415, %v1402
        %v1417 = vmul.f32 %v1416, 1.442695
        %v1418 = vpow.pop %v1417
        %v1419 = vmul.f32 %v1414, %v1418
        %v1420 = vsub.f32 1.0, %v1419
        %vm1421 = vcmp.lt.f32.partialorder %v1401, 0.0
        %v1422 = vsub.f32 0.0, %v1420
        %v1423 = vsel %vm1421, %v1422, %v1420
        %v1424 = vadd.f32 %v1423, 1.0
        %v1425 = vmul.f32 %v1400, %v1424
        %v1426 = vpack.c.bf16 %v1425, %v1425
        %v1427 = vld [vmem:[#allocation21] sm:$0xf]
        %v1428 = vld [vmem:[#allocation21 + $0x4] sm:$0xf]
        %v1429 = vld [vmem:[#allocation21 + $0x8] sm:$0xf]
        %v1430 = vld [vmem:[#allocation21 + $0xc] sm:$0xf]
        %v1431 = vld [vmem:[#allocation21 + $0x10] sm:$0xf]
        %v1432 = vld [vmem:[#allocation21 + $0x14] sm:$0xf]
        %v1433 = vld [vmem:[#allocation21 + $0x18] sm:$0xf]
        %v1434 = vld [vmem:[#allocation21 + $0x1c] sm:$0xf]
        %v1443 = vunpack.c.l.b16 %v1427
        %v1444 = vunpack.c.l.b16 %v1428
        %v1445 = vunpack.c.l.b16 %v1429
        %v1446 = vunpack.c.l.b16 %v1430
        %v1447 = vunpack.c.l.b16 %v1431
        %v1448 = vunpack.c.l.b16 %v1432
        %v1449 = vunpack.c.l.b16 %v1433
        %v1450 = vunpack.c.l.b16 %v1434
        %v1451 = vpack.c.b16 %v1444, %v1443
        %v1452 = vpack.c.b16 %v1446, %v1445
        %v1453 = vpack.c.b16 %v1448, %v1447
        %v1454 = vpack.c.b16 %v1450, %v1449
        %vm1459 = vcmask 523264
        %v1461 = vsel %vm1459, %v1426, 0
        %1463 = vmatprep.subr.bf16.mxu0 0
        %1464 = vmatpush1.bf16.msra.mxu0 %v1451
        %1465 = vmatprep.subr.bf16.mxu0 0
        %1466 = vmatpush1.bf16.msra.mxu0 %v1452
        %1467 = vmatprep.subr.bf16.mxu0 0
        %1468 = vmatpush1.bf16.msra.mxu0 %v1453
        %1469 = vmatprep.subr.bf16.mxu0 0
        %1470 = vmatpush1.bf16.msra.mxu0 %v1454
        %1471 = vmatprep.subr.bf16.mxu0 0
        %1472 = vmatpush1.bf16.msra.mxu0 0
        %1473 = vmatprep.subr.bf16.mxu0 0
        %1474 = vmatpush1.bf16.msra.mxu0 0
        %1475 = vmatprep.subr.bf16.mxu0 0
        %1476 = vmatpush1.bf16.msra.mxu0 0
        %1477 = vmatprep.subr.bf16.mxu0 0
        %1478 = vmatpush1.bf16.msra.mxu0 0
        %1479 = vmatprep.subr.bf16.mxu0 0
        %1480 = vmatpush1.bf16.msra.mxu0 0
        %1481 = vmatprep.subr.bf16.mxu0 0
        %1482 = vmatpush1.bf16.msra.mxu0 0
        %1483 = vmatprep.subr.bf16.mxu0 0
        %1484 = vmatpush1.bf16.msra.mxu0 0
        %1485 = vmatprep.subr.bf16.mxu0 0
        %1486 = vmatpush1.bf16.msra.mxu0 0
        %1487 = vmatprep.subr.bf16.mxu0 0
        %1488 = vmatpush1.bf16.msra.mxu0 0
        %1489 = vmatprep.subr.bf16.mxu0 0
        %1490 = vmatpush1.bf16.msra.mxu0 0
        %1491 = vmatprep.subr.bf16.mxu0 0
        %1492 = vmatpush1.bf16.msra.mxu0 0
        %1493 = vmatprep.subr.bf16.mxu0 0
        %1494 = vmatpush1.bf16.msra.mxu0 0
        %1495 = vmatprep.mubr.bf16.mxu0 0
        %1496 = vmatmul.mubr.bf16.gmra.mrb[0].mxu0 %v1461
        %v1497 = vpop.f32.mrb[0].mxu0
        %v1498 = vadd.f32 0.0, %v1497
        %v1499 = vpop.f32.mrb[0].mxu0
        %v1500 = vpop.f32.mrb[0].mxu0
        %v1501 = vpop.f32.mrb[0].mxu0
        %1502 = vdwg.mxu0
        %v1503 = vadd.f32 %v1297, %v1498
        %v1504 = vld [vmem:[#allocation23] sm:$0x1]
        %v1506 = vlaneseq
        %v1507 = vshrl.u32 %v1506, 7
        %v1508 = vsub.s32 0, %v1507
        %v1509 = vrot.slane %v1504, %v1508
        %v1511 = vadd.f32 %v1503, %v1509
        %1512 = vst.msk [vmem:[%s644] sm:$0xff] %vm656, %v1511
        %s1513 = sand.u32 %s327, 1
        %s1514 = scalar_lea.sflag [#allocation5], %s1513
        %s1515 = sand.u32 %s327, 1
        %s1516 = smul.addr %s1515, 8
        %s1517 = scalar_lea.vmem [#allocation24], %s1516
        %s1518 = sand.u32 %s353, 1
        %s1519 = scalar_lea.sflag [#allocation26], %s1518
        %s1520 = sand.u32 %s353, 1
        %s1521 = smul.addr %s1520, 8
        %s1522 = scalar_lea.vmem [#allocation25], %s1521
        // Predicated region
        $region125: #{tpu_custom_call.1} parent=71 // pred_check
          %p1523 = pneg %p337
        $region126: #{tpu_custom_call.1} parent=71 // pred_check_branch
          %1525 = sbr.rel (%p1523) target = $region128
        $region127: #{tpu_custom_call.1} parent=71 // pred_region
          %s1527 = ssub.s32 128, 128
          %1528 = vsyncadd %s1514, %s1527
          %s1529 = smul.addr %s41, 128
          %s1530 = scalar_lea.hbm %s13, %s1529
          %s1532 = sshll.u32 %s1517, 4
          %s1533 = int_to_ptr.vmem [resolvable:$true] %s1532
          %1535 = dma.vmem_to_hbm [thread:$0]  %s1533, 128, %s1530, %s1514
        $region128: #{tpu_custom_call.1} parent=71 // pred_fallthru
          _
        // Predicated region
        $region129: #{tpu_custom_call.1} parent=71 // pred_check
          %p1536 = pneg %p363
        $region130: #{tpu_custom_call.1} parent=71 // pred_check_branch
          %1538 = sbr.rel (%p1536) target = $region132
        $region131: #{tpu_custom_call.1} parent=71 // pred_region
          %s1540 = ssub.s32 128, 128
          %1541 = vsyncadd %s1519, %s1540
          %s1542 = smul.addr %s41, 128
          %s1543 = scalar_lea.hbm %s14, %s1542
          %s1545 = sshll.u32 %s1522, 4
          %s1546 = int_to_ptr.vmem [resolvable:$true] %s1545
          %1548 = dma.vmem_to_hbm [thread:$0]  %s1546, 128, %s1543, %s1519
        $region132: #{tpu_custom_call.1} parent=71 // pred_fallthru
          _
      $region72: #{tpu_custom_call.1} parent=5 // pred_fallthru
        _
      %p1549 = scmp.le.s32.totalorder 2, %s36
      // Predicated region
      $region133: #{tpu_custom_call.1} parent=5 // pred_check
        %p1550 = pneg %p1549
      $region134: #{tpu_custom_call.1} parent=5 // pred_check_branch
        %1552 = sbr.rel (%p1550) target = $region136
      $region135: #{tpu_custom_call.1} parent=5 // pred_region
        %s1553 = ssub.s32 %s36, 2
        // Predicated region
        $region137: #{tpu_custom_call.1} parent=135 // pred_check
          %p1554 = pneg %p343
        $region138: #{tpu_custom_call.1} parent=135 // pred_check_branch
          %1556 = sbr.rel (%p1554) target = $region140
        $region139: #{tpu_custom_call.1} parent=135 // pred_region
          %s1557 = sand.u32 %s328, 1
          %s1558 = scalar_lea.sflag [#allocation5], %s1557
          %s1559 = sand.u32 %s328, 1
          %s1560 = smul.addr %s1559, 8
          %s1561 = scalar_lea.vmem [#allocation24], %s1560
          %1562 = dma.done %s1558, 128
        $region140: #{tpu_custom_call.1} parent=135 // pred_fallthru
          _
        // Predicated region
        $region141: #{tpu_custom_call.1} parent=135 // pred_check
          %p1563 = pneg %p369
        $region142: #{tpu_custom_call.1} parent=135 // pred_check_branch
          %1565 = sbr.rel (%p1563) target = $region144
        $region143: #{tpu_custom_call.1} parent=135 // pred_region
          %s1566 = sand.u32 %s354, 1
          %s1567 = scalar_lea.sflag [#allocation26], %s1566
          %s1568 = sand.u32 %s354, 1
          %s1569 = smul.addr %s1568, 8
          %s1570 = scalar_lea.vmem [#allocation25], %s1569
          %1571 = dma.done %s1567, 128
        $region144: #{tpu_custom_call.1} parent=135 // pred_fallthru
          _
      $region136: #{tpu_custom_call.1} parent=5 // pred_fallthru
        _
    $region6: #{tpu_custom_call.1} parent=1 // loop_footer
      %s40 = sadd.s32 1, %s36
    $region7: #{tpu_custom_call.1} parent=1 // loop_footer_branch
      %35 = sbr.rel target = $region3
    $region8: #{tpu_custom_call.1} parent=1 // loop_exit
      _
    %1572 = vsyncpa [#allocation4], 1
    %s1573 = scalar_lea.sflag [#allocation4], 1
    %1574 = vsyncpa %s1573, 1
    %1575 = vsyncpa [#allocation7], 1
    %1576 = vsyncpa [#allocation10], 1
    %1577 = vsyncpa [#allocation13], 1
    %1578 = vsyncpa [#allocation16], 1
    %1579 = vsyncpa [#allocation19], 1
    %1580 = vsyncpa [#allocation22], 1
    %1581 = vsyncpa [#allocation5], 1
    %s1582 = scalar_lea.sflag [#allocation5], 1
    %1583 = vsyncpa %s1582, 1
    %1584 = vsyncpa [#allocation26], 1
    %s1585 = scalar_lea.sflag [#allocation26], 1
    %1586 = vsyncpa %s1585, 1

// kernel: tpu_custom_call.1
$region0: #{tpu_custom_call.1}
  #allocation0 [shape = 'u32[]', space=smem, size = 0x4, offset = 0x4, fixed_abs, tag = 'smem constant byte address 0x4 - core index']
  #allocation1 [shape = 'u32[144,128]{1,0:T(1,128)}', space=vmem, size = 0x12000, scoped, tag = 'internal scratch']
  #allocation2 [shape = 'f32[8,32]{1,0:T(8,128)}', space=vmem, size = 0x1000, scoped, tag = 'scratch operand']
  %s0 = inlined_call_operand.hbm [shape: f32[2,8,32], index: 0, kind: input, shape index: {}]
  %s1 = inlined_call_operand.hbm [shape: f32[1,32], index: 1, kind: input, shape index: {}]
  %s2 = inlined_call_operand.hbm [shape: f32[1,32], index: 2, kind: input, shape index: {}]
  %s3 = inlined_call_operand.hbm [shape: bf16[32,96], index: 3, kind: input, shape index: {}]
  %s4 = inlined_call_operand.hbm [shape: f32[1,96], index: 4, kind: input, shape index: {}]
  %s5 = inlined_call_operand.hbm [shape: bf16[32,32], index: 5, kind: input, shape index: {}]
  %s6 = inlined_call_operand.hbm [shape: f32[1,32], index: 6, kind: input, shape index: {}]
  %s7 = inlined_call_operand.hbm [shape: f32[1,32], index: 7, kind: input, shape index: {}]
  %s8 = inlined_call_operand.hbm [shape: f32[1,32], index: 8, kind: input, shape index: {}]
  %s9 = inlined_call_operand.hbm [shape: bf16[32,64], index: 9, kind: input, shape index: {}]
  %s10 = inlined_call_operand.hbm [shape: f32[1,64], index: 10, kind: input, shape index: {}]
  %s11 = inlined_call_operand.hbm [shape: bf16[64,32], index: 11, kind: input, shape index: {}]
  %s12 = inlined_call_operand.hbm [shape: f32[1,32], index: 12, kind: input, shape index: {}]
  %s13 = inlined_call_operand.hbm [shape: f32[2,8,32], index: 13, kind: output, shape index: {0}]
  %s14 = inlined_call_operand.hbm [shape: f32[2,8,8], index: 14, kind: output, shape index: {1}]
  %15 = xla_tuple %s13, %s14
  %s16 = sld [smem:[#allocation0]]
  $region145: #{tpu_custom_call.1} parent=0
    _
  %s18 = ssub.s32 1, %s16
  %s19 = scalar_select 0, %s18, %s16
  $region1: #{tpu_custom_call.1} parent=0
    #allocation3 [shape = 'u8[8192]{0}', space=vmem, size = 0x2000, scoped, tag = 'input window, operand 0']
    #allocation4 [shape = 's32[2]{0}', space=sflag, size = 0x8, scoped, tag = 'scoped memory for tpu_custom_call.1']
    #allocation5 [shape = 's32[2]{0}', space=sflag, size = 0x8, scoped, tag = 'scoped memory for tpu_custom_call.1']
    #allocation6 [shape = 'u8[512]{0}', space=vmem, size = 0x400, scoped, tag = 'input window, operand 1, single buffered']
    #allocation7 [shape = 's32[1]{0}', space=sflag, size = 0x4, scoped, tag = 'scoped memory for tpu_custom_call.1']
    #allocation8 [shape = 'u8[512]{0}', space=vmem, size = 0x400, scoped, tag = 'input window, operand 2, single buffered']
    #allocation9 [shape = 'u8[8192]{0}', space=vmem, size = 0x2000, scoped, tag = 'input window, operand 3, single buffered']
    #allocation10 [shape = 's32[1]{0}', space=sflag, size = 0x4, scoped, tag = 'scoped memory for tpu_custom_call.1']
    #allocation11 [shape = 'u8[512]{0}', space=vmem, size = 0x400, scoped, tag = 'input window, operand 4, single buffered']
    #allocation12 [shape = 'u8[8192]{0}', space=vmem, size = 0x2000, scoped, tag = 'input window, operand 5, single buffered']
    #allocation13 [shape = 's32[1]{0}', space=sflag, size = 0x4, scoped, tag = 'scoped memory for tpu_custom_call.1']
    #allocation14 [shape = 'u8[512]{0}', space=vmem, size = 0x400, scoped, tag = 'input window, operand 6, single buffered']
    #allocation15 [shape = 'u8[512]{0}', space=vmem, size = 0x400, scoped, tag = 'input window, operand 7, single buffered']
    #allocation16 [shape = 's32[1]{0}', space=sflag, size = 0x4, scoped, tag = 'scoped memory for tpu_custom_call.1']
    #allocation17 [shape = 'u8[512]{0}', space=vmem, size = 0x400, scoped, tag = 'input window, operand 8, single buffered']
    #allocation18 [shape = 'u8[8192]{0}', space=vmem, size = 0x2000, scoped, tag = 'input window, operand 9, single buffered']
    #allocation19 [shape = 's32[1]{0}', space=sflag, size = 0x4, scoped, tag = 'scoped memory for tpu_custom_call.1']
    #allocation20 [shape = 'u8[512]{0}', space=vmem, size = 0x400, scoped, tag = 'input window, operand 10, single buffered']
    #allocation21 [shape = 'u8[16384]{0}', space=vmem, size = 0x4000, scoped, tag = 'input window, operand 11, single buffered']
    #allocation22 [shape = 's32[1]{0}', space=sflag, size = 0x4, scoped, tag = 'scoped memory for tpu_custom_call.1']
    #allocation23 [shape = 'u8[512]{0}', space=vmem, size = 0x400, scoped, tag = 'input window, operand 12, single buffered']
    #allocation24 [shape = 'u8[8192]{0}', space=vmem, size = 0x2000, scoped, tag = 'output window, operand 0']
    #allocation25 [shape = 'u8[8192]{0}', space=vmem, size = 0x2000, scoped, tag = 'output window, operand 1']
    #allocation26 [shape = 's32[2]{0}', space=sflag, size = 0x8, scoped, tag = 'scoped memory for tpu_custom_call.1']
    %20 = vsyncpa [#allocation4], 0
    %s21 = scalar_lea.sflag [#allocation4], 1
    %22 = vsyncpa %s21, 0
    %23 = vsyncpa [#allocation7], 0
    %24 = vsyncpa [#allocation10], 0
    %25 = vsyncpa [#allocation13], 0
    %26 = vsyncpa [#allocation16], 0
    %27 = vsyncpa [#allocation19], 0
    %28 = vsyncpa [#allocation22], 0
    %29 = vsyncpa [#allocation5], 0
    %s30 = scalar_lea.sflag [#allocation5], 1
    %31 = vsyncpa %s30, 0
    %32 = vsyncpa [#allocation26], 0
    %s33 = scalar_lea.sflag [#allocation26], 1
    %34 = vsyncpa %s33, 0
    loop: start=0, step=1, limit=4
    $region2: #{tpu_custom_call.1} parent=1 // loop_pre_header
      _
    $region3: #{tpu_custom_call.1} parent=1 // loop_header
      %s36 = sphi 0, %s40
      %p37 = scmp.ge.s32.totalorder %s36, 4
      %s46 = sphi 0, %s48
      %s49 = sphi 0, %s46
      %s50 = sphi 0, %s49
      %s66 = sphi 0, %s50
      %s70 = sphi 0, %s70
      %s72 = sphi 0, %s70
      %s73 = sphi 0, %s72
      %s87 = sphi 0, %s73
      %s91 = sphi 0, %s91
      %s93 = sphi 0, %s91
      %s94 = sphi 0, %s93
      %s108 = sphi 0, %s94
      %s112 = sphi 0, %s112
      %s114 = sphi 0, %s112
      %s115 = sphi 0, %s114
      %s129 = sphi 0, %s115
      %s133 = sphi 0, %s133
      %s135 = sphi 0, %s133
      %s136 = sphi 0, %s135
      %s150 = sphi 0, %s136
      %s154 = sphi 0, %s154
      %s156 = sphi 0, %s154
      %s157 = sphi 0, %s156
      %s171 = sphi 0, %s157
      %s175 = sphi 0, %s175
      %s177 = sphi 0, %s175
      %s178 = sphi 0, %s177
      %s192 = sphi 0, %s178
      %s196 = sphi 0, %s196
      %s198 = sphi 0, %s196
      %s199 = sphi 0, %s198
      %s213 = sphi 0, %s199
      %s217 = sphi 0, %s217
      %s219 = sphi 0, %s217
      %s220 = sphi 0, %s219
      %s234 = sphi 0, %s220
      %s238 = sphi 0, %s238
      %s240 = sphi 0, %s238
      %s241 = sphi 0, %s240
      %s255 = sphi 0, %s241
      %s259 = sphi 0, %s259
      %s261 = sphi 0, %s259
      %s262 = sphi 0, %s261
      %s276 = sphi 0, %s262
      %s280 = sphi 0, %s280
      %s282 = sphi 0, %s280
      %s283 = sphi 0, %s282
      %s297 = sphi 0, %s283
      %s301 = sphi 0, %s301
      %s303 = sphi 0, %s301
      %s304 = sphi 0, %s303
      %s318 = sphi 0, %s304
      %s324 = sphi 0, %s326
      %s327 = sphi 0, %s324
      %s328 = sphi 0, %s327
      %s344 = sphi 0, %s328
      %s350 = sphi 0, %s352
      %s353 = sphi 0, %s350
      %s354 = sphi 0, %s353
      %s370 = sphi 0, %s354
    $region4: #{tpu_custom_call.1} parent=1 // loop_header_branch
      %39 = sbr.rel (%p37) target = $region8
    $region5: #{tpu_custom_call.1} parent=1 // loop_body
      %s41 = ssub.s32 %s36, 1
      %s42 = ssub.s32 %s36, 2
      %s43 = sadd.s32 %s36, 1
      %s44 = ssub.s32 %s36, %s43
      %p45 = scmp.eq.s32.totalorder %s44, 0
      %s47 = sadd.s32 %s46, 1
      %s48 = scalar_select %p45, %s46, %s47
      %p51 = pneg %p45
      %p52 = scmp.eq.s32.totalorder %s36, 1
      %p53 = por %p51, %p52
      %p54 = scmp.ne.s32.totalorder %s46, %s49
      %p55 = scmp.eq.s32.totalorder %s36, 0
      %p56 = por %p54, %p55
      %p57 = scmp.ne.s32.totalorder %s46, %s49
      %p58 = scmp.eq.s32.totalorder %s41, 1
      %p59 = por %p57, %p58
      %p60 = scmp.ne.s32.totalorder %s49, %s50
      %p61 = scmp.eq.s32.totalorder %s41, 0
      %p62 = por %p60, %p61
      %p63 = scmp.ne.s32.totalorder %s49, %s50
      %p64 = scmp.eq.s32.totalorder %s42, 1
      %p65 = por %p63, %p64
      %p67 = scmp.ne.s32.totalorder %s50, %s66
      %p68 = scmp.eq.s32.totalorder %s42, 0
      %p69 = por %p67, %p68
      %s71 = sadd.s32 %s70, 1
      %p74 = scmp.eq.s32.totalorder %s36, 1
      %p75 = scmp.ne.s32.totalorder %s70, %s72
      %p76 = scmp.eq.s32.totalorder %s36, 0
      %p77 = por %p75, %p76
      %p78 = scmp.ne.s32.totalorder %s70, %s72
      %p79 = scmp.eq.s32.totalorder %s41, 1
      %p80 = por %p78, %p79
      %p81 = scmp.ne.s32.totalorder %s72, %s73
      %p82 = scmp.eq.s32.totalorder %s41, 0
      %p83 = por %p81, %p82
      %p84 = scmp.ne.s32.totalorder %s72, %s73
      %p85 = scmp.eq.s32.totalorder %s42, 1
      %p86 = por %p84, %p85
      %p88 = scmp.ne.s32.totalorder %s73, %s87
      %p89 = scmp.eq.s32.totalorder %s42, 0
      %p90 = por %p88, %p89
      %s92 = sadd.s32 %s91, 1
      %p95 = scmp.eq.s32.totalorder %s36, 1
      %p96 = scmp.ne.s32.totalorder %s91, %s93
      %p97 = scmp.eq.s32.totalorder %s36, 0
      %p98 = por %p96, %p97
      %p99 = scmp.ne.s32.totalorder %s91, %s93
      %p100 = scmp.eq.s32.totalorder %s41, 1
      %p101 = por %p99, %p100
      %p102 = scmp.ne.s32.totalorder %s93, %s94
      %p103 = scmp.eq.s32.totalorder %s41, 0
      %p104 = por %p102, %p103
      %p105 = scmp.ne.s32.totalorder %s93, %s94
      %p106 = scmp.eq.s32.totalorder %s42, 1
      %p107 = por %p105, %p106
      %p109 = scmp.ne.s32.totalorder %s94, %s108
      %p110 = scmp.eq.s32.totalorder %s42, 0
      %p111 = por %p109, %p110
      %s113 = sadd.s32 %s112, 1
      %p116 = scmp.eq.s32.totalorder %s36, 1
      %p117 = scmp.ne.s32.totalorder %s112, %s114
      %p118 = scmp.eq.s32.totalorder %s36, 0
      %p119 = por %p117, %p118
      %p120 = scmp.ne.s32.totalorder %s112, %s114
      %p121 = scmp.eq.s32.totalorder %s41, 1
      %p122 = por %p120, %p121
      %p123 = scmp.ne.s32.totalorder %s114, %s115
      %p124 = scmp.eq.s32.totalorder %s41, 0
      %p125 = por %p123, %p124
      %p126 = scmp.ne.s32.totalorder %s114, %s115
      %p127 = scmp.eq.s32.totalorder %s42, 1
      %p128 = por %p126, %p127
      %p130 = scmp.ne.s32.totalorder %s115, %s129
      %p131 = scmp.eq.s32.totalorder %s42, 0
      %p132 = por %p130, %p131
      %s134 = sadd.s32 %s133, 1
      %p137 = scmp.eq.s32.totalorder %s36, 1
      %p138 = scmp.ne.s32.totalorder %s133, %s135
      %p139 = scmp.eq.s32.totalorder %s36, 0
      %p140 = por %p138, %p139
      %p141 = scmp.ne.s32.totalorder %s133, %s135
      %p142 = scmp.eq.s32.totalorder %s41, 1
      %p143 = por %p141, %p142
      %p144 = scmp.ne.s32.totalorder %s135, %s136
      %p145 = scmp.eq.s32.totalorder %s41, 0
      %p146 = por %p144, %p145
      %p147 = scmp.ne.s32.totalorder %s135, %s136
      %p148 = scmp.eq.s32.totalorder %s42, 1
      %p149 = por %p147, %p148
      %p151 = scmp.ne.s32.totalorder %s136, %s150
      %p152 = scmp.eq.s32.totalorder %s42, 0
      %p153 = por %p151, %p152
      %s155 = sadd.s32 %s154, 1
      %p158 = scmp.eq.s32.totalorder %s36, 1
      %p159 = scmp.ne.s32.totalorder %s154, %s156
      %p160 = scmp.eq.s32.totalorder %s36, 0
      %p161 = por %p159, %p160
      %p162 = scmp.ne.s32.totalorder %s154, %s156
      %p163 = scmp.eq.s32.totalorder %s41, 1
      %p164 = por %p162, %p163
      %p165 = scmp.ne.s32.totalorder %s156, %s157
      %p166 = scmp.eq.s32.totalorder %s41, 0
      %p167 = por %p165, %p166
      %p168 = scmp.ne.s32.totalorder %s156, %s157
      %p169 = scmp.eq.s32.totalorder %s42, 1
      %p170 = por %p168, %p169
      %p172 = scmp.ne.s32.totalorder %s157, %s171
      %p173 = scmp.eq.s32.totalorder %s42, 0
      %p174 = por %p172, %p173
      %s176 = sadd.s32 %s175, 1
      %p179 = scmp.eq.s32.totalorder %s36, 1
      %p180 = scmp.ne.s32.totalorder %s175, %s177
      %p181 = scmp.eq.s32.totalorder %s36, 0
      %p182 = por %p180, %p181
      %p183 = scmp.ne.s32.totalorder %s175, %s177
      %p184 = scmp.eq.s32.totalorder %s41, 1
      %p185 = por %p183, %p184
      %p186 = scmp.ne.s32.totalorder %s177, %s178
      %p187 = scmp.eq.s32.totalorder %s41, 0
      %p188 = por %p186, %p187
      %p189 = scmp.ne.s32.totalorder %s177, %s178
      %p190 = scmp.eq.s32.totalorder %s42, 1
      %p191 = por %p189, %p190
      %p193 = scmp.ne.s32.totalorder %s178, %s192
      %p194 = scmp.eq.s32.totalorder %s42, 0
      %p195 = por %p193, %p194
      %s197 = sadd.s32 %s196, 1
      %p200 = scmp.eq.s32.totalorder %s36, 1
      %p201 = scmp.ne.s32.totalorder %s196, %s198
      %p202 = scmp.eq.s32.totalorder %s36, 0
      %p203 = por %p201, %p202
      %p204 = scmp.ne.s32.totalorder %s196, %s198
      %p205 = scmp.eq.s32.totalorder %s41, 1
      %p206 = por %p204, %p205
      %p207 = scmp.ne.s32.totalorder %s198, %s199
      %p208 = scmp.eq.s32.totalorder %s41, 0
      %p209 = por %p207, %p208
      %p210 = scmp.ne.s32.totalorder %s198, %s199
      %p211 = scmp.eq.s32.totalorder %s42, 1
      %p212 = por %p210, %p211
      %p214 = scmp.ne.s32.totalorder %s199, %s213
      %p215 = scmp.eq.s32.totalorder %s42, 0
      %p216 = por %p214, %p215
      %s218 = sadd.s32 %s217, 1
      %p221 = scmp.eq.s32.totalorder %s36, 1
      %p222 = scmp.ne.s32.totalorder %s217, %s219
      %p223 = scmp.eq.s32.totalorder %s36, 0
      %p224 = por %p222, %p223
      %p225 = scmp.ne.s32.totalorder %s217, %s219
      %p226 = scmp.eq.s32.totalorder %s41, 1
      %p227 = por %p225, %p226
      %p228 = scmp.ne.s32.totalorder %s219, %s220
      %p229 = scmp.eq.s32.totalorder %s41, 0
      %p230 = por %p228, %p229
      %p231 = scmp.ne.s32.totalorder %s219, %s220
      %p232 = scmp.eq.s32.totalorder %s42, 1
      %p233 = por %p231, %p232
      %p235 = scmp.ne.s32.totalorder %s220, %s234
      %p236 = scmp.eq.s32.totalorder %s42, 0
      %p237 = por %p235, %p236
      %s239 = sadd.s32 %s238, 1
      %p242 = scmp.eq.s32.totalorder %s36, 1
      %p243 = scmp.ne.s32.totalorder %s238, %s240
      %p244 = scmp.eq.s32.totalorder %s36, 0
      %p245 = por %p243, %p244
      %p246 = scmp.ne.s32.totalorder %s238, %s240
      %p247 = scmp.eq.s32.totalorder %s41, 1
      %p248 = por %p246, %p247
      %p249 = scmp.ne.s32.totalorder %s240, %s241
      %p250 = scmp.eq.s32.totalorder %s41, 0
      %p251 = por %p249, %p250
      %p252 = scmp.ne.s32.totalorder %s240, %s241
      %p253 = scmp.eq.s32.totalorder %s42, 1
      %p254 = por %p252, %p253
      %p256 = scmp.ne.s32.totalorder %s241, %s255
      %p257 = scmp.eq.s32.totalorder %s42, 0
      %p258 = por %p256, %p257
      %s260 = sadd.s32 %s259, 1
      %p263 = scmp.eq.s32.totalorder %s36, 1
      %p264 = scmp.ne.s32.totalorder %s259, %s261
      %p265 = scmp.eq.s32.totalorder %s36, 0
      %p266 = por %p264, %p265
      %p267 = scmp.ne.s32.totalorder %s259, %s261
      %p268 = scmp.eq.s32.totalorder %s41, 1
      %p269 = por %p267, %p268
      %p270 = scmp.ne.s32.totalorder %s261, %s262
      %p271 = scmp.eq.s32.totalorder %s41, 0
      %p272 = por %p270, %p271
      %p273 = scmp.ne.s32.totalorder %s261, %s262
      %p274 = scmp.eq.s32.totalorder %s42, 1
      %p275 = por %p273, %p274
      %p277 = scmp.ne.s32.totalorder %s262, %s276
      %p278 = scmp.eq.s32.totalorder %s42, 0
      %p279 = por %p277, %p278
      %s281 = sadd.s32 %s280, 1
      %p284 = scmp.eq.s32.totalorder %s36, 1
      %p285 = scmp.ne.s32.totalorder %s280, %s282
      %p286 = scmp.eq.s32.totalorder %s36, 0
      %p287 = por %p285, %p286
      %p288 = scmp.ne.s32.totalorder %s280, %s282
      %p289 = scmp.eq.s32.totalorder %s41, 1
      %p290 = por %p288, %p289
      %p291 = scmp.ne.s32.totalorder %s282, %s283
      %p292 = scmp.eq.s32.totalorder %s41, 0
      %p293 = por %p291, %p292
      %p294 = scmp.ne.s32.totalorder %s282, %s283
      %p295 = scmp.eq.s32.totalorder %s42, 1
      %p296 = por %p294, %p295
      %p298 = scmp.ne.s32.totalorder %s283, %s297
      %p299 = scmp.eq.s32.totalorder %s42, 0
      %p300 = por %p298, %p299
      %s302 = sadd.s32 %s301, 1
      %p305 = scmp.eq.s32.totalorder %s36, 1
      %p306 = scmp.ne.s32.totalorder %s301, %s303
      %p307 = scmp.eq.s32.totalorder %s36, 0
      %p308 = por %p306, %p307
      %p309 = scmp.ne.s32.totalorder %s301, %s303
      %p310 = scmp.eq.s32.totalorder %s41, 1
      %p311 = por %p309, %p310
      %p312 = scmp.ne.s32.totalorder %s303, %s304
      %p313 = scmp.eq.s32.totalorder %s41, 0
      %p314 = por %p312, %p313
      %p315 = scmp.ne.s32.totalorder %s303, %s304
      %p316 = scmp.eq.s32.totalorder %s42, 1
      %p317 = por %p315, %p316
      %p319 = scmp.ne.s32.totalorder %s304, %s318
      %p320 = scmp.eq.s32.totalorder %s42, 0
      %p321 = por %p319, %p320
      %s322 = ssub.s32 %s36, %s43
      %p323 = scmp.eq.s32.totalorder %s322, 0
      %s325 = sadd.s32 %s324, 1
      %s326 = scalar_select %p323, %s324, %s325
      %p329 = pneg %p323
      %p330 = scmp.eq.s32.totalorder %s36, 1
      %p331 = por %p329, %p330
      %p332 = scmp.ne.s32.totalorder %s324, %s327
      %p333 = scmp.eq.s32.totalorder %s36, 0
      %p334 = por %p332, %p333
      %p335 = scmp.ne.s32.totalorder %s324, %s327
      %p336 = scmp.eq.s32.totalorder %s41, 1
      %p337 = por %p335, %p336
      %p338 = scmp.ne.s32.totalorder %s327, %s328
      %p339 = scmp.eq.s32.totalorder %s41, 0
      %p340 = por %p338, %p339
      %p341 = scmp.ne.s32.totalorder %s327, %s328
      %p342 = scmp.eq.s32.totalorder %s42, 1
      %p343 = por %p341, %p342
      %p345 = scmp.ne.s32.totalorder %s328, %s344
      %p346 = scmp.eq.s32.totalorder %s42, 0
      %p347 = por %p345, %p346
      %s348 = ssub.s32 %s36, %s43
      %p349 = scmp.eq.s32.totalorder %s348, 0
      %s351 = sadd.s32 %s350, 1
      %s352 = scalar_select %p349, %s350, %s351
      %p355 = pneg %p349
      %p356 = scmp.eq.s32.totalorder %s36, 1
      %p357 = por %p355, %p356
      %p358 = scmp.ne.s32.totalorder %s350, %s353
      %p359 = scmp.eq.s32.totalorder %s36, 0
      %p360 = por %p358, %p359
      %p361 = scmp.ne.s32.totalorder %s350, %s353
      %p362 = scmp.eq.s32.totalorder %s41, 1
      %p363 = por %p361, %p362
      %p364 = scmp.ne.s32.totalorder %s353, %s354
      %p365 = scmp.eq.s32.totalorder %s41, 0
      %p366 = por %p364, %p365
      %p367 = scmp.ne.s32.totalorder %s353, %s354
      %p368 = scmp.eq.s32.totalorder %s42, 1
      %p369 = por %p367, %p368
      %p371 = scmp.ne.s32.totalorder %s354, %s370
      %p372 = scmp.eq.s32.totalorder %s42, 0
      %p373 = por %p371, %p372
      %p374 = scmp.le.s32.totalorder 1, %s36
      %p375 = scmp.lt.s32.totalorder %s36, 3
      %p376 = pnand %p374, %p375
      %p377 = pneg %p376
      // Predicated region
      $region9: #{tpu_custom_call.1} parent=5 // pred_check
        _
      $region10: #{tpu_custom_call.1} parent=5 // pred_check_branch
        %379 = sbr.rel (%p376) target = $region12
      $region11: #{tpu_custom_call.1} parent=5 // pred_region
        %s380 = ssub.s32 %s36, 1
        // Predicated region
        $region13: #{tpu_custom_call.1} parent=11 // pred_check
          %p381 = pneg %p83
        $region14: #{tpu_custom_call.1} parent=11 // pred_check_branch
          %383 = sbr.rel (%p381) target = $region16
        $region15: #{tpu_custom_call.1} parent=11 // pred_region
          %s385 = ssub.s32 16, 16
          %386 = vsyncadd [#allocation7], %s385
          %s388 = sshll.u32 [#allocation6], 4
          %s389 = int_to_ptr.vmem [resolvable:$true] %s388
          %391 = dma.hbm_to_vmem [thread:$0]  %s1, 16, %s389, [#allocation7]
        $region16: #{tpu_custom_call.1} parent=11 // pred_fallthru
          _
        // Predicated region
        $region17: #{tpu_custom_call.1} parent=11 // pred_check
          %p392 = pneg %p104
        $region18: #{tpu_custom_call.1} parent=11 // pred_check_branch
          %394 = sbr.rel (%p392) target = $region20
        $region19: #{tpu_custom_call.1} parent=11 // pred_region
          %s396 = ssub.s32 16, 16
          %397 = vsyncadd [#allocation7], %s396
          %s399 = sshll.u32 [#allocation8], 4
          %s400 = int_to_ptr.vmem [resolvable:$true] %s399
          %402 = dma.hbm_to_vmem [thread:$0]  %s2, 16, %s400, [#allocation7]
        $region20: #{tpu_custom_call.1} parent=11 // pred_fallthru
          _
        // Predicated region
        $region21: #{tpu_custom_call.1} parent=11 // pred_check
          %p403 = pneg %p125
        $region22: #{tpu_custom_call.1} parent=11 // pred_check_branch
          %405 = sbr.rel (%p403) target = $region24
        $region23: #{tpu_custom_call.1} parent=11 // pred_region
          %s407 = ssub.s32 256, 256
          %408 = vsyncadd [#allocation10], %s407
          %s409 = sshll.u32 [#allocation9], 4
          %s410 = int_to_ptr.vmem [resolvable:$true] %s409
          %415 = dma.hbm_to_vmem [thread:$0]  %s3, 256, %s410, [#allocation10], 64, 64, 4
        $region24: #{tpu_custom_call.1} parent=11 // pred_fallthru
          _
        // Predicated region
        $region25: #{tpu_custom_call.1} parent=11 // pred_check
          %p416 = pneg %p146
        $region26: #{tpu_custom_call.1} parent=11 // pred_check_branch
          %418 = sbr.rel (%p416) target = $region28
        $region27: #{tpu_custom_call.1} parent=11 // pred_region
          %s420 = ssub.s32 16, 16
          %421 = vsyncadd [#allocation10], %s420
          %s423 = sshll.u32 [#allocation11], 4
          %s424 = int_to_ptr.vmem [resolvable:$true] %s423
          %426 = dma.hbm_to_vmem [thread:$0]  %s4, 16, %s424, [#allocation10]
        $region28: #{tpu_custom_call.1} parent=11 // pred_fallthru
          _
        // Predicated region
        $region29: #{tpu_custom_call.1} parent=11 // pred_check
          %p427 = pneg %p167
        $region30: #{tpu_custom_call.1} parent=11 // pred_check_branch
          %429 = sbr.rel (%p427) target = $region32
        $region31: #{tpu_custom_call.1} parent=11 // pred_region
          %s431 = ssub.s32 256, 256
          %432 = vsyncadd [#allocation13], %s431
          %s433 = sshll.u32 [#allocation12], 4
          %s434 = int_to_ptr.vmem [resolvable:$true] %s433
          %439 = dma.hbm_to_vmem [thread:$0]  %s5, 256, %s434, [#allocation13], 64, 64, 4
        $region32: #{tpu_custom_call.1} parent=11 // pred_fallthru
          _
        // Predicated region
        $region33: #{tpu_custom_call.1} parent=11 // pred_check
          %p440 = pneg %p188
        $region34: #{tpu_custom_call.1} parent=11 // pred_check_branch
          %442 = sbr.rel (%p440) target = $region36
        $region35: #{tpu_custom_call.1} parent=11 // pred_region
          %s444 = ssub.s32 16, 16
          %445 = vsyncadd [#allocation13], %s444
          %s447 = sshll.u32 [#allocation14], 4
          %s448 = int_to_ptr.vmem [resolvable:$true] %s447
          %450 = dma.hbm_to_vmem [thread:$0]  %s6, 16, %s448, [#allocation13]
        $region36: #{tpu_custom_call.1} parent=11 // pred_fallthru
          _
        // Predicated region
        $region37: #{tpu_custom_call.1} parent=11 // pred_check
          %p451 = pneg %p209
        $region38: #{tpu_custom_call.1} parent=11 // pred_check_branch
          %453 = sbr.rel (%p451) target = $region40
        $region39: #{tpu_custom_call.1} parent=11 // pred_region
          %s455 = ssub.s32 16, 16
          %456 = vsyncadd [#allocation16], %s455
          %s458 = sshll.u32 [#allocation15], 4
          %s459 = int_to_ptr.vmem [resolvable:$true] %s458
          %461 = dma.hbm_to_vmem [thread:$0]  %s7, 16, %s459, [#allocation16]
        $region40: #{tpu_custom_call.1} parent=11 // pred_fallthru
          _
        // Predicated region
        $region41: #{tpu_custom_call.1} parent=11 // pred_check
          %p462 = pneg %p230
        $region42: #{tpu_custom_call.1} parent=11 // pred_check_branch
          %464 = sbr.rel (%p462) target = $region44
        $region43: #{tpu_custom_call.1} parent=11 // pred_region
          %s466 = ssub.s32 16, 16
          %467 = vsyncadd [#allocation16], %s466
          %s469 = sshll.u32 [#allocation17], 4
          %s470 = int_to_ptr.vmem [resolvable:$true] %s469
          %472 = dma.hbm_to_vmem [thread:$0]  %s8, 16, %s470, [#allocation16]
        $region44: #{tpu_custom_call.1} parent=11 // pred_fallthru
          _
        // Predicated region
        $region45: #{tpu_custom_call.1} parent=11 // pred_check
          %p473 = pneg %p251
        $region46: #{tpu_custom_call.1} parent=11 // pred_check_branch
          %475 = sbr.rel (%p473) target = $region48
        $region47: #{tpu_custom_call.1} parent=11 // pred_region
          %s477 = ssub.s32 256, 256
          %478 = vsyncadd [#allocation19], %s477
          %s479 = sshll.u32 [#allocation18], 4
          %s480 = int_to_ptr.vmem [resolvable:$true] %s479
          %485 = dma.hbm_to_vmem [thread:$0]  %s9, 256, %s480, [#allocation19], 64, 64, 4
        $region48: #{tpu_custom_call.1} parent=11 // pred_fallthru
          _
        // Predicated region
        $region49: #{tpu_custom_call.1} parent=11 // pred_check
          %p486 = pneg %p272
        $region50: #{tpu_custom_call.1} parent=11 // pred_check_branch
          %488 = sbr.rel (%p486) target = $region52
        $region51: #{tpu_custom_call.1} parent=11 // pred_region
          %s490 = ssub.s32 16, 16
          %491 = vsyncadd [#allocation19], %s490
          %s493 = sshll.u32 [#allocation20], 4
          %s494 = int_to_ptr.vmem [resolvable:$true] %s493
          %496 = dma.hbm_to_vmem [thread:$0]  %s10, 16, %s494, [#allocation19]
        $region52: #{tpu_custom_call.1} parent=11 // pred_fallthru
          _
        // Predicated region
        $region53: #{tpu_custom_call.1} parent=11 // pred_check
          %p497 = pneg %p293
        $region54: #{tpu_custom_call.1} parent=11 // pred_check_branch
          %499 = sbr.rel (%p497) target = $region56
        $region55: #{tpu_custom_call.1} parent=11 // pred_region
          %s501 = ssub.s32 512, 512
          %502 = vsyncadd [#allocation22], %s501
          %s503 = sshll.u32 [#allocation21], 4
          %s504 = int_to_ptr.vmem [resolvable:$true] %s503
          %509 = dma.hbm_to_vmem [thread:$0]  %s11, 512, %s504, [#allocation22], 64, 64, 4
        $region56: #{tpu_custom_call.1} parent=11 // pred_fallthru
          _
        // Predicated region
        $region57: #{tpu_custom_call.1} parent=11 // pred_check
          %p510 = pneg %p314
        $region58: #{tpu_custom_call.1} parent=11 // pred_check_branch
          %512 = sbr.rel (%p510) target = $region60
        $region59: #{tpu_custom_call.1} parent=11 // pred_region
          %s514 = ssub.s32 16, 16
          %515 = vsyncadd [#allocation22], %s514
          %s517 = sshll.u32 [#allocation23], 4
          %s518 = int_to_ptr.vmem [resolvable:$true] %s517
          %520 = dma.hbm_to_vmem [thread:$0]  %s12, 16, %s518, [#allocation22]
        $region60: #{tpu_custom_call.1} parent=11 // pred_fallthru
          _
      $region12: #{tpu_custom_call.1} parent=5 // pred_fallthru
        _
      %p521 = scmp.lt.s32.totalorder %s36, 2
      // Predicated region
      $region61: #{tpu_custom_call.1} parent=5 // pred_check
        %p522 = pneg %p521
      $region62: #{tpu_custom_call.1} parent=5 // pred_check_branch
        %524 = sbr.rel (%p522) target = $region64
      $region63: #{tpu_custom_call.1} parent=5 // pred_region
        // Predicated region
        $region65: #{tpu_custom_call.1} parent=63 // pred_check
          %p525 = pneg %p56
        $region66: #{tpu_custom_call.1} parent=63 // pred_check_branch
          %527 = sbr.rel (%p525) target = $region68
        $region67: #{tpu_custom_call.1} parent=63 // pred_region
          %s528 = sand.u32 %s46, 1
          %s529 = scalar_lea.sflag [#allocation4], %s528
          %s530 = sand.u32 %s46, 1
          %s531 = smul.addr %s530, 8
          %s532 = scalar_lea.vmem [#allocation3], %s531
          %s534 = ssub.s32 128, 128
          %535 = vsyncadd %s529, %s534
          %s536 = smul.addr %s36, 128
          %s537 = scalar_lea.hbm %s0, %s536
          %s539 = sshll.u32 %s532, 4
          %s540 = int_to_ptr.vmem [resolvable:$true] %s539
          %542 = dma.hbm_to_vmem [thread:$0]  %s537, 128, %s540, %s529
        $region68: #{tpu_custom_call.1} parent=63 // pred_fallthru
          _
      $region64: #{tpu_custom_call.1} parent=5 // pred_fallthru
        _
      %p543 = scmp.le.s32.totalorder 1, %s36
      %p544 = scmp.lt.s32.totalorder %s36, 3
      %p545 = pnand %p543, %p544
      %p546 = pneg %p545
      // Predicated region
      $region69: #{tpu_custom_call.1} parent=5 // pred_check
        _
      $region70: #{tpu_custom_call.1} parent=5 // pred_check_branch
        %548 = sbr.rel (%p545) target = $region72
      $region71: #{tpu_custom_call.1} parent=5 // pred_region
        %s549 = ssub.s32 %s36, 1
        %s550 = sand.u32 %s49, 1
        %s551 = scalar_lea.sflag [#allocation4], %s550
        %s552 = sand.u32 %s49, 1
        %s553 = smul.addr %s552, 8
        %s554 = scalar_lea.vmem [#allocation3], %s553
        // Predicated region
        $region73: #{tpu_custom_call.1} parent=71 // pred_check
          %p555 = pneg %p62
        $region74: #{tpu_custom_call.1} parent=71 // pred_check_branch
          %557 = sbr.rel (%p555) target = $region76
        $region75: #{tpu_custom_call.1} parent=71 // pred_region
          %558 = dma.done %s551, 128
        $region76: #{tpu_custom_call.1} parent=71 // pred_fallthru
          _
        // Predicated region
        $region77: #{tpu_custom_call.1} parent=71 // pred_check
          %p559 = pneg %p83
        $region78: #{tpu_custom_call.1} parent=71 // pred_check_branch
          %561 = sbr.rel (%p559) target = $region80
        $region79: #{tpu_custom_call.1} parent=71 // pred_region
          %562 = dma.done [#allocation7], 16
        $region80: #{tpu_custom_call.1} parent=71 // pred_fallthru
          _
        // Predicated region
        $region81: #{tpu_custom_call.1} parent=71 // pred_check
          %p563 = pneg %p104
        $region82: #{tpu_custom_call.1} parent=71 // pred_check_branch
          %565 = sbr.rel (%p563) target = $region84
        $region83: #{tpu_custom_call.1} parent=71 // pred_region
          %566 = dma.done [#allocation7], 16
        $region84: #{tpu_custom_call.1} parent=71 // pred_fallthru
          _
        // Predicated region
        $region85: #{tpu_custom_call.1} parent=71 // pred_check
          %p567 = pneg %p125
        $region86: #{tpu_custom_call.1} parent=71 // pred_check_branch
          %569 = sbr.rel (%p567) target = $region88
        $region87: #{tpu_custom_call.1} parent=71 // pred_region
          %570 = dma.done [#allocation10], 256
        $region88: #{tpu_custom_call.1} parent=71 // pred_fallthru
          _
        // Predicated region
        $region89: #{tpu_custom_call.1} parent=71 // pred_check
          %p571 = pneg %p146
        $region90: #{tpu_custom_call.1} parent=71 // pred_check_branch
          %573 = sbr.rel (%p571) target = $region92
        $region91: #{tpu_custom_call.1} parent=71 // pred_region
          %574 = dma.done [#allocation10], 16
        $region92: #{tpu_custom_call.1} parent=71 // pred_fallthru
          _
        // Predicated region
        $region93: #{tpu_custom_call.1} parent=71 // pred_check
          %p575 = pneg %p167
        $region94: #{tpu_custom_call.1} parent=71 // pred_check_branch
          %577 = sbr.rel (%p575) target = $region96
        $region95: #{tpu_custom_call.1} parent=71 // pred_region
          %578 = dma.done [#allocation13], 256
        $region96: #{tpu_custom_call.1} parent=71 // pred_fallthru
          _
        // Predicated region
        $region97: #{tpu_custom_call.1} parent=71 // pred_check
          %p579 = pneg %p188
        $region98: #{tpu_custom_call.1} parent=71 // pred_check_branch
          %581 = sbr.rel (%p579) target = $region100
        $region99: #{tpu_custom_call.1} parent=71 // pred_region
          %582 = dma.done [#allocation13], 16
        $region100: #{tpu_custom_call.1} parent=71 // pred_fallthru
          _
        // Predicated region
        $region101: #{tpu_custom_call.1} parent=71 // pred_check
          %p583 = pneg %p209
        $region102: #{tpu_custom_call.1} parent=71 // pred_check_branch
          %585 = sbr.rel (%p583) target = $region104
        $region103: #{tpu_custom_call.1} parent=71 // pred_region
          %586 = dma.done [#allocation16], 16
        $region104: #{tpu_custom_call.1} parent=71 // pred_fallthru
          _
        // Predicated region
        $region105: #{tpu_custom_call.1} parent=71 // pred_check
          %p587 = pneg %p230
        $region106: #{tpu_custom_call.1} parent=71 // pred_check_branch
          %589 = sbr.rel (%p587) target = $region108
        $region107: #{tpu_custom_call.1} parent=71 // pred_region
          %590 = dma.done [#allocation16], 16
        $region108: #{tpu_custom_call.1} parent=71 // pred_fallthru
          _
        // Predicated region
        $region109: #{tpu_custom_call.1} parent=71 // pred_check
          %p591 = pneg %p251
        $region110: #{tpu_custom_call.1} parent=71 // pred_check_branch
          %593 = sbr.rel (%p591) target = $region112
        $region111: #{tpu_custom_call.1} parent=71 // pred_region
          %594 = dma.done [#allocation19], 256
        $region112: #{tpu_custom_call.1} parent=71 // pred_fallthru
          _
        // Predicated region
        $region113: #{tpu_custom_call.1} parent=71 // pred_check
          %p595 = pneg %p272
        $region114: #{tpu_custom_call.1} parent=71 // pred_check_branch
          %597 = sbr.rel (%p595) target = $region116
        $region115: #{tpu_custom_call.1} parent=71 // pred_region
          %598 = dma.done [#allocation19], 16
        $region116: #{tpu_custom_call.1} parent=71 // pred_fallthru
          _
        // Predicated region
        $region117: #{tpu_custom_call.1} parent=71 // pred_check
          %p599 = pneg %p293
        $region118: #{tpu_custom_call.1} parent=71 // pred_check_branch
          %601 = sbr.rel (%p599) target = $region120
        $region119: #{tpu_custom_call.1} parent=71 // pred_region
          %602 = dma.done [#allocation22], 512
        $region120: #{tpu_custom_call.1} parent=71 // pred_fallthru
          _
        // Predicated region
        $region121: #{tpu_custom_call.1} parent=71 // pred_check
          %p603 = pneg %p314
        $region122: #{tpu_custom_call.1} parent=71 // pred_check_branch
          %605 = sbr.rel (%p603) target = $region124
        $region123: #{tpu_custom_call.1} parent=71 // pred_region
          %606 = dma.done [#allocation22], 16
        $region124: #{tpu_custom_call.1} parent=71 // pred_fallthru
          _
        %s607 = sand.u32 %s49, 1
        %s608 = scalar_lea.sflag [#allocation4], %s607
        %s609 = sand.u32 %s49, 1
        %s610 = smul.addr %s609, 8
        %s611 = scalar_lea.vmem [#allocation3], %s610
        %p612 = pneg %p62
        %p613 = pneg %p59
        %p614 = pneg %p83
        %p615 = pneg %p80
        %p616 = pneg %p104
        %p617 = pneg %p101
        %p618 = pneg %p125
        %p619 = pneg %p122
        %p620 = pneg %p146
        %p621 = pneg %p143
        %p622 = pneg %p167
        %p623 = pneg %p164
        %p624 = pneg %p188
        %p625 = pneg %p185
        %p626 = pneg %p209
        %p627 = pneg %p206
        %p628 = pneg %p230
        %p629 = pneg %p227
        %p630 = pneg %p251
        %p631 = pneg %p248
        %p632 = pneg %p272
        %p633 = pneg %p269
        %p634 = pneg %p293
        %p635 = pneg %p290
        %p636 = pneg %p314
        %p637 = pneg %p311
        %p638 = pneg %p340
        %p639 = pneg %p337
        %s640 = sand.u32 %s327, 1
        %s641 = scalar_lea.sflag [#allocation5], %s640
        %s642 = sand.u32 %s327, 1
        %s643 = smul.addr %s642, 8
        %s644 = scalar_lea.vmem [#allocation24], %s643
        %p645 = pneg %p366
        %p646 = pneg %p363
        %s647 = sand.u32 %s353, 1
        %s648 = scalar_lea.sflag [#allocation26], %s647
        %s649 = sand.u32 %s353, 1
        %s650 = smul.addr %s649, 8
        %s651 = scalar_lea.vmem [#allocation25], %s650
        %v653 = vld [vmem:[%s554] sm:$0xff]
        %v654 = vld [vmem:[#allocation6] sm:$0x1]
        %v655 = vld [vmem:[#allocation8] sm:$0x1]
        %vm656 = vcmask 261120
        %v657 = vsel %vm656, %v653, 0.0
        %658 = vadd.xlane.f32.xlu0 %v657
        %v659 = vpop.xlane.xlu0 %658
        %v660 = vrcp.pop 32.0
        %v661 = vmul.f32 %v659, %v660
        %v662 = vmul.f32 %v653, %v653
        %v663 = vsel %vm656, %v662, 0.0
        %664 = vadd.xlane.f32.xlu0 %v663
        %v665 = vpop.xlane.xlu0 %664
        %v666 = vmul.f32 %v665, %v660
        %v667 = vmul.f32 %v661, %v661
        %v668 = vsub.f32 %v666, %v667
        %v669 = vmax.f32 %v668, 0.0
        %v670 = vsub.f32 %v653, %v661
        %v671 = vadd.f32 %v669, 1e-06
        %v672 = vrsqrt.pop %v671
        %v673 = vmul.f32 %v670, %v672
        %v675 = vlaneseq
        %v676 = vshrl.u32 %v675, 7
        %v677 = vsub.s32 0, %v676
        %v678 = vrot.slane %v654, %v677
        %v680 = vmul.f32 %v673, %v678
        %v682 = vlaneseq
        %v683 = vshrl.u32 %v682, 7
        %v684 = vsub.s32 0, %v683
        %v685 = vrot.slane %v655, %v684
        %v687 = vadd.f32 %v680, %v685
        %v688 = vpack.c.bf16 %v687, %v687
        %v689 = vld [vmem:[#allocation9] sm:$0xf]
        %v690 = vld [vmem:[#allocation9 + $0x4] sm:$0xf]
        %v691 = vld [vmem:[#allocation9 + $0x8] sm:$0xf]
        %v692 = vld [vmem:[#allocation9 + $0xc] sm:$0xf]
        %v693 = vld [vmem:[#allocation11] sm:$0x1]
        %v695 = vlaneseq
        %v696 = vshrl.u32 %v695, 7
        %v697 = vsub.s32 0, %v696
        %v698 = vrot.slane %v693, %v697
        %v704 = vunpack.c.l.b16 %v689
        %v705 = vunpack.c.l.b16 %v690
        %v706 = vunpack.c.l.b16 %v691
        %v707 = vunpack.c.l.b16 %v692
        %v708 = vpack.c.b16 %v705, %v704
        %v709 = vpack.c.b16 %v707, %v706
        %v713 = vsel %vm656, %v688, 0
        %715 = vmatprep.subr.bf16.mxu0 0
        %716 = vmatpush1.bf16.msra.mxu0 %v708
        %717 = vmatprep.subr.bf16.mxu0 0
        %718 = vmatpush1.bf16.msra.mxu0 %v709
        %719 = vmatprep.subr.bf16.mxu0 0
        %720 = vmatpush1.bf16.msra.mxu0 0
        %721 = vmatprep.subr.bf16.mxu0 0
        %722 = vmatpush1.bf16.msra.mxu0 0
        %723 = vmatprep.subr.bf16.mxu0 0
        %724 = vmatpush1.bf16.msra.mxu0 0
        %725 = vmatprep.subr.bf16.mxu0 0
        %726 = vmatpush1.bf16.msra.mxu0 0
        %727 = vmatprep.subr.bf16.mxu0 0
        %728 = vmatpush1.bf16.msra.mxu0 0
        %729 = vmatprep.subr.bf16.mxu0 0
        %730 = vmatpush1.bf16.msra.mxu0 0
        %731 = vmatprep.subr.bf16.mxu0 0
        %732 = vmatpush1.bf16.msra.mxu0 0
        %733 = vmatprep.subr.bf16.mxu0 0
        %734 = vmatpush1.bf16.msra.mxu0 0
        %735 = vmatprep.subr.bf16.mxu0 0
        %736 = vmatpush1.bf16.msra.mxu0 0
        %737 = vmatprep.subr.bf16.mxu0 0
        %738 = vmatpush1.bf16.msra.mxu0 0
        %739 = vmatprep.subr.bf16.mxu0 0
        %740 = vmatpush1.bf16.msra.mxu0 0
        %741 = vmatprep.subr.bf16.mxu0 0
        %742 = vmatpush1.bf16.msra.mxu0 0
        %743 = vmatprep.subr.bf16.mxu0 0
        %744 = vmatpush1.bf16.msra.mxu0 0
        %745 = vmatprep.subr.bf16.mxu0 0
        %746 = vmatpush1.bf16.msra.mxu0 0
        %747 = vmatprep.mubr.bf16.mxu0 0
        %748 = vmatmul.mubr.bf16.gmra.mrb[0].mxu0 %v713
        %v749 = vpop.f32.mrb[0].mxu0
        %v750 = vadd.f32 %v698, %v749
        %v751 = vpop.f32.mrb[0].mxu0
        %v752 = vpop.f32.mrb[0].mxu0
        %v753 = vpop.f32.mrb[0].mxu0
        %754 = vdwg.mxu0
        %v755 = vpack.c.bf16 %v750, %v750
        %vm756 = vcmask 64512
        %757 = vst.msk [vmem:[%s651] sm:$0xff] %vm756, 0.0
        %759 = vrot.lane.b32.xlu0 %v755, 96
        %v760 = vpop.permute.xlu0 %759
        %v762 = vsel %vm756, %v755, 0
        %v765 = vsel %vm756, %v760, 0
        %767 = vmatprep.subr.bf16.mxu0 0
        %768 = vmatpush1.bf16.xpose.msra.mxu0 %v765
        %769 = vmatprep.subr.bf16.mxu0 0
        %770 = vmatpush1.bf16.xpose.msra.mxu0 0
        %771 = vmatprep.subr.bf16.mxu0 0
        %772 = vmatpush1.bf16.xpose.msra.mxu0 0
        %773 = vmatprep.subr.bf16.mxu0 0
        %774 = vmatpush1.bf16.xpose.msra.mxu0 0
        %775 = vmatprep.subr.bf16.mxu0 0
        %776 = vmatpush1.bf16.xpose.msra.mxu0 0
        %777 = vmatprep.subr.bf16.mxu0 0
        %778 = vmatpush1.bf16.xpose.msra.mxu0 0
        %779 = vmatprep.subr.bf16.mxu0 0
        %780 = vmatpush1.bf16.xpose.msra.mxu0 0
        %781 = vmatprep.subr.bf16.mxu0 0
        %782 = vmatpush1.bf16.xpose.msra.mxu0 0
        %783 = vmatprep.subr.bf16.mxu0 0
        %784 = vmatpush1.bf16.xpose.msra.mxu0 0
        %785 = vmatprep.subr.bf16.mxu0 0
        %786 = vmatpush1.bf16.xpose.msra.mxu0 0
        %787 = vmatprep.subr.bf16.mxu0 0
        %788 = vmatpush1.bf16.xpose.msra.mxu0 0
        %789 = vmatprep.subr.bf16.mxu0 0
        %790 = vmatpush1.bf16.xpose.msra.mxu0 0
        %791 = vmatprep.subr.bf16.mxu0 0
        %792 = vmatpush1.bf16.xpose.msra.mxu0 0
        %793 = vmatprep.subr.bf16.mxu0 0
        %794 = vmatpush1.bf16.xpose.msra.mxu0 0
        %795 = vmatprep.subr.bf16.mxu0 0
        %796 = vmatpush1.bf16.xpose.msra.mxu0 0
        %797 = vmatprep.subr.bf16.mxu0 0
        %798 = vmatpush1.bf16.xpose.msra.mxu0 0
        %799 = vmatprep.mubr.bf16.mxu0 0
        %800 = vmatmul.mubr.bf16.gmra.mrb[0].mxu0 %v762
        %v801 = vpop.f32.mrb[0].mxu0
        %v802 = vadd.f32 0.0, %v801
        %v803 = vpop.f32.mrb[0].mxu0
        %v804 = vpop.f32.mrb[0].mxu0
        %v805 = vpop.f32.mrb[0].mxu0
        %806 = vdwg.mxu0
        %v807 = vsel %vm756, %v802, -inf
        %808 = vmax.xlane.f32.xlu0 %v807
        %v809 = vpop.xlane.xlu0 %808
        %v810 = vsub.f32 %v802, %v809
        %v811 = vmul.f32 %v810, 1.442695
        %v812 = vpow.pop %v811
        %v813 = vsel %vm756, %v812, 0.0
        %814 = vadd.xlane.f32.xlu0 %v813
        %v815 = vpop.xlane.xlu0 %814
        %v816 = vrcp.pop %v815
        %v817 = vmul.f32 %v812, %v816
        %v818 = vld [vmem:[%s651] sm:$0xff]
        %v819 = vadd.f32 %v818, %v817
        %820 = vst.msk [vmem:[%s651] sm:$0xff] %vm756, %v819
        %v821 = vpack.c.bf16 %v817, %v817
        %822 = vrot.lane.b32.xlu0 %v755, 64
        %v823 = vpop.permute.xlu0 %822
        %v825 = vsel %vm756, %v821, 0
        %vm827 = vcmask 1043456
        %v829 = vsel %vm827, %v823, 0
        %831 = vmatprep.subr.bf16.mxu0 0
        %832 = vmatpush1.bf16.msra.mxu0 %v829
        %833 = vmatprep.subr.bf16.mxu0 0
        %834 = vmatpush1.bf16.msra.mxu0 0
        %835 = vmatprep.subr.bf16.mxu0 0
        %836 = vmatpush1.bf16.msra.mxu0 0
        %837 = vmatprep.subr.bf16.mxu0 0
        %838 = vmatpush1.bf16.msra.mxu0 0
        %839 = vmatprep.subr.bf16.mxu0 0
        %840 = vmatpush1.bf16.msra.mxu0 0
        %841 = vmatprep.subr.bf16.mxu0 0
        %842 = vmatpush1.bf16.msra.mxu0 0
        %843 = vmatprep.subr.bf16.mxu0 0
        %844 = vmatpush1.bf16.msra.mxu0 0
        %845 = vmatprep.subr.bf16.mxu0 0
        %846 = vmatpush1.bf16.msra.mxu0 0
        %847 = vmatprep.subr.bf16.mxu0 0
        %848 = vmatpush1.bf16.msra.mxu0 0
        %849 = vmatprep.subr.bf16.mxu0 0
        %850 = vmatpush1.bf16.msra.mxu0 0
        %851 = vmatprep.subr.bf16.mxu0 0
        %852 = vmatpush1.bf16.msra.mxu0 0
        %853 = vmatprep.subr.bf16.mxu0 0
        %854 = vmatpush1.bf16.msra.mxu0 0
        %855 = vmatprep.subr.bf16.mxu0 0
        %856 = vmatpush1.bf16.msra.mxu0 0
        %857 = vmatprep.subr.bf16.mxu0 0
        %858 = vmatpush1.bf16.msra.mxu0 0
        %859 = vmatprep.subr.bf16.mxu0 0
        %860 = vmatpush1.bf16.msra.mxu0 0
        %861 = vmatprep.subr.bf16.mxu0 0
        %862 = vmatpush1.bf16.msra.mxu0 0
        %863 = vmatprep.mubr.bf16.mxu0 0
        %864 = vmatmul.mubr.bf16.gmra.mrb[0].mxu0 %v825
        %v865 = vpop.f32.mrb[0].mxu0
        %v866 = vadd.f32 0.0, %v865
        %v867 = vpop.f32.mrb[0].mxu0
        %v868 = vpop.f32.mrb[0].mxu0
        %v869 = vpop.f32.mrb[0].mxu0
        %870 = vdwg.mxu0
        %871 = vst.msk [vmem:[#allocation2] sm:$0xff] %vm756, %v866
        %872 = vrot.lane.b32.xlu0 %v755, 120
        %v873 = vpop.permute.xlu0 %872
        %874 = vrot.lane.b32.xlu0 %v755, 88
        %v875 = vpop.permute.xlu0 %874
        %v877 = vsel %vm756, %v873, 0
        %v880 = vsel %vm756, %v875, 0
        %882 = vmatprep.subr.bf16.mxu0 0
        %883 = vmatpush1.bf16.xpose.msra.mxu0 %v880
        %884 = vmatprep.subr.bf16.mxu0 0
        %885 = vmatpush1.bf16.xpose.msra.mxu0 0
        %886 = vmatprep.subr.bf16.mxu0 0
        %887 = vmatpush1.bf16.xpose.msra.mxu0 0
        %888 = vmatprep.subr.bf16.mxu0 0
        %889 = vmatpush1.bf16.xpose.msra.mxu0 0
        %890 = vmatprep.subr.bf16.mxu0 0
        %891 = vmatpush1.bf16.xpose.msra.mxu0 0
        %892 = vmatprep.subr.bf16.mxu0 0
        %893 = vmatpush1.bf16.xpose.msra.mxu0 0
        %894 = vmatprep.subr.bf16.mxu0 0
        %895 = vmatpush1.bf16.xpose.msra.mxu0 0
        %896 = vmatprep.subr.bf16.mxu0 0
        %897 = vmatpush1.bf16.xpose.msra.mxu0 0
        %898 = vmatprep.subr.bf16.mxu0 0
        %899 = vmatpush1.bf16.xpose.msra.mxu0 0
        %900 = vmatprep.subr.bf16.mxu0 0
        %901 = vmatpush1.bf16.xpose.msra.mxu0 0
        %902 = vmatprep.subr.bf16.mxu0 0
        %903 = vmatpush1.bf16.xpose.msra.mxu0 0
        %904 = vmatprep.subr.bf16.mxu0 0
        %905 = vmatpush1.bf16.xpose.msra.mxu0 0
        %906 = vmatprep.subr.bf16.mxu0 0
        %907 = vmatpush1.bf16.xpose.msra.mxu0 0
        %908 = vmatprep.subr.bf16.mxu0 0
        %909 = vmatpush1.bf16.xpose.msra.mxu0 0
        %910 = vmatprep.subr.bf16.mxu0 0
        %911 = vmatpush1.bf16.xpose.msra.mxu0 0
        %912 = vmatprep.subr.bf16.mxu0 0
        %913 = vmatpush1.bf16.xpose.msra.mxu0 0
        %914 = vmatprep.mubr.bf16.mxu0 0
        %915 = vmatmul.mubr.bf16.gmra.mrb[0].mxu0 %v877
        %v916 = vpop.f32.mrb[0].mxu0
        %v917 = vadd.f32 0.0, %v916
        %v918 = vpop.f32.mrb[0].mxu0
        %v919 = vpop.f32.mrb[0].mxu0
        %v920 = vpop.f32.mrb[0].mxu0
        %921 = vdwg.mxu0
        %v922 = vsel %vm756, %v917, -inf
        %923 = vmax.xlane.f32.xlu0 %v922
        %v924 = vpop.xlane.xlu0 %923
        %v925 = vsub.f32 %v917, %v924
        %v926 = vmul.f32 %v925, 1.442695
        %v927 = vpow.pop %v926
        %v928 = vsel %vm756, %v927, 0.0
        %929 = vadd.xlane.f32.xlu0 %v928
        %v930 = vpop.xlane.xlu0 %929
        %v931 = vrcp.pop %v930
        %v932 = vmul.f32 %v927, %v931
        %v933 = vld [vmem:[%s651] sm:$0xff]
        %v934 = vadd.f32 %v933, %v932
        %935 = vst.msk [vmem:[%s651] sm:$0xff] %vm756, %v934
        %v936 = vpack.c.bf16 %v932, %v932
        %937 = vrot.lane.b32.xlu0 %v755, 56
        %v938 = vpop.permute.xlu0 %937
        %v940 = vsel %vm756, %v936, 0
        %v943 = vsel %vm827, %v938, 0
        %945 = vmatprep.subr.bf16.mxu0 0
        %946 = vmatpush1.bf16.msra.mxu0 %v943
        %947 = vmatprep.subr.bf16.mxu0 0
        %948 = vmatpush1.bf16.msra.mxu0 0
        %949 = vmatprep.subr.bf16.mxu0 0
        %950 = vmatpush1.bf16.msra.mxu0 0
        %951 = vmatprep.subr.bf16.mxu0 0
        %952 = vmatpush1.bf16.msra.mxu0 0
        %953 = vmatprep.subr.bf16.mxu0 0
        %954 = vmatpush1.bf16.msra.mxu0 0
        %955 = vmatprep.subr.bf16.mxu0 0
        %956 = vmatpush1.bf16.msra.mxu0 0
        %957 = vmatprep.subr.bf16.mxu0 0
        %958 = vmatpush1.bf16.msra.mxu0 0
        %959 = vmatprep.subr.bf16.mxu0 0
        %960 = vmatpush1.bf16.msra.mxu0 0
        %961 = vmatprep.subr.bf16.mxu0 0
        %962 = vmatpush1.bf16.msra.mxu0 0
        %963 = vmatprep.subr.bf16.mxu0 0
        %964 = vmatpush1.bf16.msra.mxu0 0
        %965 = vmatprep.subr.bf16.mxu0 0
        %966 = vmatpush1.bf16.msra.mxu0 0
        %967 = vmatprep.subr.bf16.mxu0 0
        %968 = vmatpush1.bf16.msra.mxu0 0
        %969 = vmatprep.subr.bf16.mxu0 0
        %970 = vmatpush1.bf16.msra.mxu0 0
        %971 = vmatprep.subr.bf16.mxu0 0
        %972 = vmatpush1.bf16.msra.mxu0 0
        %973 = vmatprep.subr.bf16.mxu0 0
        %974 = vmatpush1.bf16.msra.mxu0 0
        %975 = vmatprep.subr.bf16.mxu0 0
        %976 = vmatpush1.bf16.msra.mxu0 0
        %977 = vmatprep.mubr.bf16.mxu0 0
        %978 = vmatmul.mubr.bf16.gmra.mrb[0].mxu0 %v940
        %v979 = vpop.f32.mrb[0].mxu0
        %v980 = vadd.f32 0.0, %v979
        %v981 = vpop.f32.mrb[0].mxu0
        %v982 = vpop.f32.mrb[0].mxu0
        %v983 = vpop.f32.mrb[0].mxu0
        %984 = vdwg.mxu0
        %986 = vrot.lane.b32.xlu0 %v980, 8
        %v987 = vpop.permute.xlu0 %986
        %vm989 = vcmask 130112
        %990 = vst.msk [vmem:[#allocation2] sm:$0xff] %vm989, %v987
        %991 = vrot.lane.b32.xlu0 %v755, 112
        %v992 = vpop.permute.xlu0 %991
        %993 = vrot.lane.b32.xlu0 %v755, 80
        %v994 = vpop.permute.xlu0 %993
        %v996 = vsel %vm756, %v992, 0
        %v999 = vsel %vm756, %v994, 0
        %1001 = vmatprep.subr.bf16.mxu0 0
        %1002 = vmatpush1.bf16.xpose.msra.mxu0 %v999
        %1003 = vmatprep.subr.bf16.mxu0 0
        %1004 = vmatpush1.bf16.xpose.msra.mxu0 0
        %1005 = vmatprep.subr.bf16.mxu0 0
        %1006 = vmatpush1.bf16.xpose.msra.mxu0 0
        %1007 = vmatprep.subr.bf16.mxu0 0
        %1008 = vmatpush1.bf16.xpose.msra.mxu0 0
        %1009 = vmatprep.subr.bf16.mxu0 0
        %1010 = vmatpush1.bf16.xpose.msra.mxu0 0
        %1011 = vmatprep.subr.bf16.mxu0 0
        %1012 = vmatpush1.bf16.xpose.msra.mxu0 0
        %1013 = vmatprep.subr.bf16.mxu0 0
        %1014 = vmatpush1.bf16.xpose.msra.mxu0 0
        %1015 = vmatprep.subr.bf16.mxu0 0
        %1016 = vmatpush1.bf16.xpose.msra.mxu0 0
        %1017 = vmatprep.subr.bf16.mxu0 0
        %1018 = vmatpush1.bf16.xpose.msra.mxu0 0
        %1019 = vmatprep.subr.bf16.mxu0 0
        %1020 = vmatpush1.bf16.xpose.msra.mxu0 0
        %1021 = vmatprep.subr.bf16.mxu0 0
        %1022 = vmatpush1.bf16.xpose.msra.mxu0 0
        %1023 = vmatprep.subr.bf16.mxu0 0
        %1024 = vmatpush1.bf16.xpose.msra.mxu0 0
        %1025 = vmatprep.subr.bf16.mxu0 0
        %1026 = vmatpush1.bf16.xpose.msra.mxu0 0
        %1027 = vmatprep.subr.bf16.mxu0 0
        %1028 = vmatpush1.bf16.xpose.msra.mxu0 0
        %1029 = vmatprep.subr.bf16.mxu0 0
        %1030 = vmatpush1.bf16.xpose.msra.mxu0 0
        %1031 = vmatprep.subr.bf16.mxu0 0
        %1032 = vmatpush1.bf16.xpose.msra.mxu0 0
        %1033 = vmatprep.mubr.bf16.mxu0 0
        %1034 = vmatmul.mubr.bf16.gmra.mrb[0].mxu0 %v996
        %v1035 = vpop.f32.mrb[0].mxu0
        %v1036 = vadd.f32 0.0, %v1035
        %v1037 = vpop.f32.mrb[0].mxu0
        %v1038 = vpop.f32.mrb[0].mxu0
        %v1039 = vpop.f32.mrb[0].mxu0
        %1040 = vdwg.mxu0
        %v1041 = vsel %vm756, %v1036, -inf
        %1042 = vmax.xlane.f32.xlu0 %v1041
        %v1043 = vpop.xlane.xlu0 %1042
        %v1044 = vsub.f32 %v1036, %v1043
        %v1045 = vmul.f32 %v1044, 1.442695
        %v1046 = vpow.pop %v1045
        %v1047 = vsel %vm756, %v1046, 0.0
        %1048 = vadd.xlane.f32.xlu0 %v1047
        %v1049 = vpop.xlane.xlu0 %1048
        %v1050 = vrcp.pop %v1049
        %v1051 = vmul.f32 %v1046, %v1050
        %v1052 = vld [vmem:[%s651] sm:$0xff]
        %v1053 = vadd.f32 %v1052, %v1051
        %1054 = vst.msk [vmem:[%s651] sm:$0xff] %vm756, %v1053
        %v1055 = vpack.c.bf16 %v1051, %v1051
        %1056 = vrot.lane.b32.xlu0 %v755, 48
        %v1057 = vpop.permute.xlu0 %1056
        %v1059 = vsel %vm756, %v1055, 0
        %v1062 = vsel %vm827, %v1057, 0
        %1064 = vmatprep.subr.bf16.mxu0 0
        %1065 = vmatpush1.bf16.msra.mxu0 %v1062
        %1066 = vmatprep.subr.bf16.mxu0 0
        %1067 = vmatpush1.bf16.msra.mxu0 0
        %1068 = vmatprep.subr.bf16.mxu0 0
        %1069 = vmatpush1.bf16.msra.mxu0 0
        %1070 = vmatprep.subr.bf16.mxu0 0
        %1071 = vmatpush1.bf16.msra.mxu0 0
        %1072 = vmatprep.subr.bf16.mxu0 0
        %1073 = vmatpush1.bf16.msra.mxu0 0
        %1074 = vmatprep.subr.bf16.mxu0 0
        %1075 = vmatpush1.bf16.msra.mxu0 0
        %1076 = vmatprep.subr.bf16.mxu0 0
        %1077 = vmatpush1.bf16.msra.mxu0 0
        %1078 = vmatprep.subr.bf16.mxu0 0
        %1079 = vmatpush1.bf16.msra.mxu0 0
        %1080 = vmatprep.subr.bf16.mxu0 0
        %1081 = vmatpush1.bf16.msra.mxu0 0
        %1082 = vmatprep.subr.bf16.mxu0 0
        %1083 = vmatpush1.bf16.msra.mxu0 0
        %1084 = vmatprep.subr.bf16.mxu0 0
        %1085 = vmatpush1.bf16.msra.mxu0 0
        %1086 = vmatprep.subr.bf16.mxu0 0
        %1087 = vmatpush1.bf16.msra.mxu0 0
        %1088 = vmatprep.subr.bf16.mxu0 0
        %1089 = vmatpush1.bf16.msra.mxu0 0
        %1090 = vmatprep.subr.bf16.mxu0 0
        %1091 = vmatpush1.bf16.msra.mxu0 0
        %1092 = vmatprep.subr.bf16.mxu0 0
        %1093 = vmatpush1.bf16.msra.mxu0 0
        %1094 = vmatprep.subr.bf16.mxu0 0
        %1095 = vmatpush1.bf16.msra.mxu0 0
        %1096 = vmatprep.mubr.bf16.mxu0 0
        %1097 = vmatmul.mubr.bf16.gmra.mrb[0].mxu0 %v1059
        %v1098 = vpop.f32.mrb[0].mxu0
        %v1099 = vadd.f32 0.0, %v1098
        %v1100 = vpop.f32.mrb[0].mxu0
        %v1101 = vpop.f32.mrb[0].mxu0
        %v1102 = vpop.f32.mrb[0].mxu0
        %1103 = vdwg.mxu0
        %1105 = vrot.lane.b32.xlu0 %v1099, 16
        %v1106 = vpop.permute.xlu0 %1105
        %vm1108 = vcmask 195712
        %1109 = vst.msk [vmem:[#allocation2] sm:$0xff] %vm1108, %v1106
        %1110 = vrot.lane.b32.xlu0 %v755, 104
        %v1111 = vpop.permute.xlu0 %1110
        %1112 = vrot.lane.b32.xlu0 %v755, 72
        %v1113 = vpop.permute.xlu0 %1112
        %v1115 = vsel %vm756, %v1111, 0
        %v1118 = vsel %vm756, %v1113, 0
        %1120 = vmatprep.subr.bf16.mxu0 0
        %1121 = vmatpush1.bf16.xpose.msra.mxu0 %v1118
        %1122 = vmatprep.subr.bf16.mxu0 0
        %1123 = vmatpush1.bf16.xpose.msra.mxu0 0
        %1124 = vmatprep.subr.bf16.mxu0 0
        %1125 = vmatpush1.bf16.xpose.msra.mxu0 0
        %1126 = vmatprep.subr.bf16.mxu0 0
        %1127 = vmatpush1.bf16.xpose.msra.mxu0 0
        %1128 = vmatprep.subr.bf16.mxu0 0
        %1129 = vmatpush1.bf16.xpose.msra.mxu0 0
        %1130 = vmatprep.subr.bf16.mxu0 0
        %1131 = vmatpush1.bf16.xpose.msra.mxu0 0
        %1132 = vmatprep.subr.bf16.mxu0 0
        %1133 = vmatpush1.bf16.xpose.msra.mxu0 0
        %1134 = vmatprep.subr.bf16.mxu0 0
        %1135 = vmatpush1.bf16.xpose.msra.mxu0 0
        %1136 = vmatprep.subr.bf16.mxu0 0
        %1137 = vmatpush1.bf16.xpose.msra.mxu0 0
        %1138 = vmatprep.subr.bf16.mxu0 0
        %1139 = vmatpush1.bf16.xpose.msra.mxu0 0
        %1140 = vmatprep.subr.bf16.mxu0 0
        %1141 = vmatpush1.bf16.xpose.msra.mxu0 0
        %1142 = vmatprep.subr.bf16.mxu0 0
        %1143 = vmatpush1.bf16.xpose.msra.mxu0 0
        %1144 = vmatprep.subr.bf16.mxu0 0
        %1145 = vmatpush1.bf16.xpose.msra.mxu0 0
        %1146 = vmatprep.subr.bf16.mxu0 0
        %1147 = vmatpush1.bf16.xpose.msra.mxu0 0
        %1148 = vmatprep.subr.bf16.mxu0 0
        %1149 = vmatpush1.bf16.xpose.msra.mxu0 0
        %1150 = vmatprep.subr.bf16.mxu0 0
        %1151 = vmatpush1.bf16.xpose.msra.mxu0 0
        %1152 = vmatprep.mubr.bf16.mxu0 0
        %1153 = vmatmul.mubr.bf16.gmra.mrb[0].mxu0 %v1115
        %v1154 = vpop.f32.mrb[0].mxu0
        %v1155 = vadd.f32 0.0, %v1154
        %v1156 = vpop.f32.mrb[0].mxu0
        %v1157 = vpop.f32.mrb[0].mxu0
        %v1158 = vpop.f32.mrb[0].mxu0
        %1159 = vdwg.mxu0
        %v1160 = vsel %vm756, %v1155, -inf
        %1161 = vmax.xlane.f32.xlu0 %v1160
        %v1162 = vpop.xlane.xlu0 %1161
        %v1163 = vsub.f32 %v1155, %v1162
        %v1164 = vmul.f32 %v1163, 1.442695
        %v1165 = vpow.pop %v1164
        %v1166 = vsel %vm756, %v1165, 0.0
        %1167 = vadd.xlane.f32.xlu0 %v1166
        %v1168 = vpop.xlane.xlu0 %1167
        %v1169 = vrcp.pop %v1168
        %v1170 = vmul.f32 %v1165, %v1169
        %v1171 = vld [vmem:[%s651] sm:$0xff]
        %v1172 = vadd.f32 %v1171, %v1170
        %1173 = vst.msk [vmem:[%s651] sm:$0xff] %vm756, %v1172
        %v1174 = vpack.c.bf16 %v1170, %v1170
        %1175 = vrot.lane.b32.xlu0 %v755, 40
        %v1176 = vpop.permute.xlu0 %1175
        %v1178 = vsel %vm756, %v1174, 0
        %v1181 = vsel %vm827, %v1176, 0
        %1183 = vmatprep.subr.bf16.mxu0 0
        %1184 = vmatpush1.bf16.msra.mxu0 %v1181
        %1185 = vmatprep.subr.bf16.mxu0 0
        %1186 = vmatpush1.bf16.msra.mxu0 0
        %1187 = vmatprep.subr.bf16.mxu0 0
        %1188 = vmatpush1.bf16.msra.mxu0 0
        %1189 = vmatprep.subr.bf16.mxu0 0
        %1190 = vmatpush1.bf16.msra.mxu0 0
        %1191 = vmatprep.subr.bf16.mxu0 0
        %1192 = vmatpush1.bf16.msra.mxu0 0
        %1193 = vmatprep.subr.bf16.mxu0 0
        %1194 = vmatpush1.bf16.msra.mxu0 0
        %1195 = vmatprep.subr.bf16.mxu0 0
        %1196 = vmatpush1.bf16.msra.mxu0 0
        %1197 = vmatprep.subr.bf16.mxu0 0
        %1198 = vmatpush1.bf16.msra.mxu0 0
        %1199 = vmatprep.subr.bf16.mxu0 0
        %1200 = vmatpush1.bf16.msra.mxu0 0
        %1201 = vmatprep.subr.bf16.mxu0 0
        %1202 = vmatpush1.bf16.msra.mxu0 0
        %1203 = vmatprep.subr.bf16.mxu0 0
        %1204 = vmatpush1.bf16.msra.mxu0 0
        %1205 = vmatprep.subr.bf16.mxu0 0
        %1206 = vmatpush1.bf16.msra.mxu0 0
        %1207 = vmatprep.subr.bf16.mxu0 0
        %1208 = vmatpush1.bf16.msra.mxu0 0
        %1209 = vmatprep.subr.bf16.mxu0 0
        %1210 = vmatpush1.bf16.msra.mxu0 0
        %1211 = vmatprep.subr.bf16.mxu0 0
        %1212 = vmatpush1.bf16.msra.mxu0 0
        %1213 = vmatprep.subr.bf16.mxu0 0
        %1214 = vmatpush1.bf16.msra.mxu0 0
        %1215 = vmatprep.mubr.bf16.mxu0 0
        %1216 = vmatmul.mubr.bf16.gmra.mrb[0].mxu0 %v1178
        %v1217 = vpop.f32.mrb[0].mxu0
        %v1218 = vadd.f32 0.0, %v1217
        %v1219 = vpop.f32.mrb[0].mxu0
        %v1220 = vpop.f32.mrb[0].mxu0
        %v1221 = vpop.f32.mrb[0].mxu0
        %1222 = vdwg.mxu0
        %1224 = vrot.lane.b32.xlu0 %v1218, 24
        %v1225 = vpop.permute.xlu0 %1224
        %vm1227 = vcmask 261312
        %1228 = vst.msk [vmem:[#allocation2] sm:$0xff] %vm1227, %v1225
        %v1229 = vld [vmem:[#allocation2] sm:$0xff]
        %v1230 = vpack.c.bf16 %v1229, %v1229
        %v1231 = vld [vmem:[#allocation12] sm:$0xf]
        %v1232 = vld [vmem:[#allocation12 + $0x4] sm:$0xf]
        %v1233 = vld [vmem:[#allocation12 + $0x8] sm:$0xf]
        %v1234 = vld [vmem:[#allocation12 + $0xc] sm:$0xf]
        %v1235 = vld [vmem:[#allocation14] sm:$0x1]
        %v1237 = vlaneseq
        %v1238 = vshrl.u32 %v1237, 7
        %v1239 = vsub.s32 0, %v1238
        %v1240 = vrot.slane %v1235, %v1239
        %v1246 = vunpack.c.l.b16 %v1231
        %v1247 = vunpack.c.l.b16 %v1232
        %v1248 = vunpack.c.l.b16 %v1233
        %v1249 = vunpack.c.l.b16 %v1234
        %v1250 = vpack.c.b16 %v1247, %v1246
        %v1251 = vpack.c.b16 %v1249, %v1248
        %v1255 = vsel %vm656, %v1230, 0
        %1257 = vmatprep.subr.bf16.mxu0 0
        %1258 = vmatpush1.bf16.msra.mxu0 %v1250
        %1259 = vmatprep.subr.bf16.mxu0 0
        %1260 = vmatpush1.bf16.msra.mxu0 %v1251
        %1261 = vmatprep.subr.bf16.mxu0 0
        %1262 = vmatpush1.bf16.msra.mxu0 0
        %1263 = vmatprep.subr.bf16.mxu0 0
        %1264 = vmatpush1.bf16.msra.mxu0 0
        %1265 = vmatprep.subr.bf16.mxu0 0
        %1266 = vmatpush1.bf16.msra.mxu0 0
        %1267 = vmatprep.subr.bf16.mxu0 0
        %1268 = vmatpush1.bf16.msra.mxu0 0
        %1269 = vmatprep.subr.bf16.mxu0 0
        %1270 = vmatpush1.bf16.msra.mxu0 0
        %1271 = vmatprep.subr.bf16.mxu0 0
        %1272 = vmatpush1.bf16.msra.mxu0 0
        %1273 = vmatprep.subr.bf16.mxu0 0
        %1274 = vmatpush1.bf16.msra.mxu0 0
        %1275 = vmatprep.subr.bf16.mxu0 0
        %1276 = vmatpush1.bf16.msra.mxu0 0
        %1277 = vmatprep.subr.bf16.mxu0 0
        %1278 = vmatpush1.bf16.msra.mxu0 0
        %1279 = vmatprep.subr.bf16.mxu0 0
        %1280 = vmatpush1.bf16.msra.mxu0 0
        %1281 = vmatprep.subr.bf16.mxu0 0
        %1282 = vmatpush1.bf16.msra.mxu0 0
        %1283 = vmatprep.subr.bf16.mxu0 0
        %1284 = vmatpush1.bf16.msra.mxu0 0
        %1285 = vmatprep.subr.bf16.mxu0 0
        %1286 = vmatpush1.bf16.msra.mxu0 0
        %1287 = vmatprep.subr.bf16.mxu0 0
        %1288 = vmatpush1.bf16.msra.mxu0 0
        %1289 = vmatprep.mubr.bf16.mxu0 0
        %1290 = vmatmul.mubr.bf16.gmra.mrb[0].mxu0 %v1255
        %v1291 = vpop.f32.mrb[0].mxu0
        %v1292 = vadd.f32 %v1240, %v1291
        %v1293 = vpop.f32.mrb[0].mxu0
        %v1294 = vpop.f32.mrb[0].mxu0
        %v1295 = vpop.f32.mrb[0].mxu0
        %1296 = vdwg.mxu0
        %v1297 = vadd.f32 %v1292, %v653
        %v1298 = vld [vmem:[%s651] sm:$0xff]
        %v1299 = vmul.f32 %v1298, 250.0
        %1300 = vst.msk [vmem:[%s651] sm:$0xff] %vm756, %v1299
        %v1301 = vld [vmem:[#allocation15] sm:$0x1]
        %v1302 = vld [vmem:[#allocation17] sm:$0x1]
        %v1303 = vsel %vm656, %v1297, 0.0
        %1304 = vadd.xlane.f32.xlu0 %v1303
        %v1305 = vpop.xlane.xlu0 %1304
        %v1306 = vmul.f32 %v1305, %v660
        %v1307 = vmul.f32 %v1297, %v1297
        %v1308 = vsel %vm656, %v1307, 0.0
        %1309 = vadd.xlane.f32.xlu0 %v1308
        %v1310 = vpop.xlane.xlu0 %1309
        %v1311 = vmul.f32 %v1310, %v660
        %v1312 = vmul.f32 %v1306, %v1306
        %v1313 = vsub.f32 %v1311, %v1312
        %v1314 = vmax.f32 %v1313, 0.0
        %v1315 = vsub.f32 %v1297, %v1306
        %v1316 = vadd.f32 %v1314, 1e-06
        %v1317 = vrsqrt.pop %v1316
        %v1318 = vmul.f32 %v1315, %v1317
        %v1320 = vlaneseq
        %v1321 = vshrl.u32 %v1320, 7
        %v1322 = vsub.s32 0, %v1321
        %v1323 = vrot.slane %v1301, %v1322
        %v1325 = vmul.f32 %v1318, %v1323
        %v1327 = vlaneseq
        %v1328 = vshrl.u32 %v1327, 7
        %v1329 = vsub.s32 0, %v1328
        %v1330 = vrot.slane %v1302, %v1329
        %v1332 = vadd.f32 %v1325, %v1330
        %v1333 = vpack.c.bf16 %v1332, %v1332
        %v1334 = vld [vmem:[#allocation18] sm:$0xf]
        %v1335 = vld [vmem:[#allocation18 + $0x4] sm:$0xf]
        %v1336 = vld [vmem:[#allocation18 + $0x8] sm:$0xf]
        %v1337 = vld [vmem:[#allocation18 + $0xc] sm:$0xf]
        %v1338 = vld [vmem:[#allocation20] sm:$0x1]
        %v1340 = vlaneseq
        %v1341 = vshrl.u32 %v1340, 7
        %v1342 = vsub.s32 0, %v1341
        %v1343 = vrot.slane %v1338, %v1342
        %v1349 = vunpack.c.l.b16 %v1334
        %v1350 = vunpack.c.l.b16 %v1335
        %v1351 = vunpack.c.l.b16 %v1336
        %v1352 = vunpack.c.l.b16 %v1337
        %v1353 = vpack.c.b16 %v1350, %v1349
        %v1354 = vpack.c.b16 %v1352, %v1351
        %v1358 = vsel %vm656, %v1333, 0
        %1360 = vmatprep.subr.bf16.mxu0 0
        %1361 = vmatpush1.bf16.msra.mxu0 %v1353
        %1362 = vmatprep.subr.bf16.mxu0 0
        %1363 = vmatpush1.bf16.msra.mxu0 %v1354
        %1364 = vmatprep.subr.bf16.mxu0 0
        %1365 = vmatpush1.bf16.msra.mxu0 0
        %1366 = vmatprep.subr.bf16.mxu0 0
        %1367 = vmatpush1.bf16.msra.mxu0 0
        %1368 = vmatprep.subr.bf16.mxu0 0
        %1369 = vmatpush1.bf16.msra.mxu0 0
        %1370 = vmatprep.subr.bf16.mxu0 0
        %1371 = vmatpush1.bf16.msra.mxu0 0
        %1372 = vmatprep.subr.bf16.mxu0 0
        %1373 = vmatpush1.bf16.msra.mxu0 0
        %1374 = vmatprep.subr.bf16.mxu0 0
        %1375 = vmatpush1.bf16.msra.mxu0 0
        %1376 = vmatprep.subr.bf16.mxu0 0
        %1377 = vmatpush1.bf16.msra.mxu0 0
        %1378 = vmatprep.subr.bf16.mxu0 0
        %1379 = vmatpush1.bf16.msra.mxu0 0
        %1380 = vmatprep.subr.bf16.mxu0 0
        %1381 = vmatpush1.bf16.msra.mxu0 0
        %1382 = vmatprep.subr.bf16.mxu0 0
        %1383 = vmatpush1.bf16.msra.mxu0 0
        %1384 = vmatprep.subr.bf16.mxu0 0
        %1385 = vmatpush1.bf16.msra.mxu0 0
        %1386 = vmatprep.subr.bf16.mxu0 0
        %1387 = vmatpush1.bf16.msra.mxu0 0
        %1388 = vmatprep.subr.bf16.mxu0 0
        %1389 = vmatpush1.bf16.msra.mxu0 0
        %1390 = vmatprep.subr.bf16.mxu0 0
        %1391 = vmatpush1.bf16.msra.mxu0 0
        %1392 = vmatprep.mubr.bf16.mxu0 0
        %1393 = vmatmul.mubr.bf16.gmra.mrb[0].mxu0 %v1358
        %v1394 = vpop.f32.mrb[0].mxu0
        %v1395 = vadd.f32 %v1343, %v1394
        %v1396 = vpop.f32.mrb[0].mxu0
        %v1397 = vpop.f32.mrb[0].mxu0
        %v1398 = vpop.f32.mrb[0].mxu0
        %1399 = vdwg.mxu0
        %v1400 = vmul.f32 %v1395, 0.5
        %v1401 = vmul.f32 %v1395, 0.70710677
        %v1402 = vand.u32 2147483647, %v1401
        %v1403 = vmul.f32 %v1402, 0.3275911
        %v1404 = vadd.f32 %v1403, 1.0
        %v1405 = vrcp.pop %v1404
        %v1406 = vmul.f32 %v1405, 1.0614054
        %v1407 = vadd.f32 %v1406, -1.4531521
        %v1408 = vmul.f32 %v1407, %v1405
        %v1409 = vadd.f32 %v1408, 1.4214138
        %v1410 = vmul.f32 %v1409, %v1405
        %v1411 = vadd.f32 %v1410, -0.28449672
        %v1412 = vmul.f32 %v1411, %v1405
        %v1413 = vadd.f32 %v1412, 0.2548296
        %v1414 = vmul.f32 %v1413, %v1405
        %v1415 = vsub.f32 0.0, %v1402
        %v1416 = vmul.f32 %v1415, %v1402
        %v1417 = vmul.f32 %v1416, 1.442695
        %v1418 = vpow.pop %v1417
        %v1419 = vmul.f32 %v1414, %v1418
        %v1420 = vsub.f32 1.0, %v1419
        %vm1421 = vcmp.lt.f32.partialorder %v1401, 0.0
        %v1422 = vsub.f32 0.0, %v1420
        %v1423 = vsel %vm1421, %v1422, %v1420
        %v1424 = vadd.f32 %v1423, 1.0
        %v1425 = vmul.f32 %v1400, %v1424
        %v1426 = vpack.c.bf16 %v1425, %v1425
        %v1427 = vld [vmem:[#allocation21] sm:$0xf]
        %v1428 = vld [vmem:[#allocation21 + $0x4] sm:$0xf]
        %v1429 = vld [vmem:[#allocation21 + $0x8] sm:$0xf]
        %v1430 = vld [vmem:[#allocation21 + $0xc] sm:$0xf]
        %v1431 = vld [vmem:[#allocation21 + $0x10] sm:$0xf]
        %v1432 = vld [vmem:[#allocation21 + $0x14] sm:$0xf]
        %v1433 = vld [vmem:[#allocation21 + $0x18] sm:$0xf]
        %v1434 = vld [vmem:[#allocation21 + $0x1c] sm:$0xf]
        %v1443 = vunpack.c.l.b16 %v1427
        %v1444 = vunpack.c.l.b16 %v1428
        %v1445 = vunpack.c.l.b16 %v1429
        %v1446 = vunpack.c.l.b16 %v1430
        %v1447 = vunpack.c.l.b16 %v1431
        %v1448 = vunpack.c.l.b16 %v1432
        %v1449 = vunpack.c.l.b16 %v1433
        %v1450 = vunpack.c.l.b16 %v1434
        %v1451 = vpack.c.b16 %v1444, %v1443
        %v1452 = vpack.c.b16 %v1446, %v1445
        %v1453 = vpack.c.b16 %v1448, %v1447
        %v1454 = vpack.c.b16 %v1450, %v1449
        %vm1459 = vcmask 523264
        %v1461 = vsel %vm1459, %v1426, 0
        %1463 = vmatprep.subr.bf16.mxu0 0
        %1464 = vmatpush1.bf16.msra.mxu0 %v1451
        %1465 = vmatprep.subr.bf16.mxu0 0
        %1466 = vmatpush1.bf16.msra.mxu0 %v1452
        %1467 = vmatprep.subr.bf16.mxu0 0
        %1468 = vmatpush1.bf16.msra.mxu0 %v1453
        %1469 = vmatprep.subr.bf16.mxu0 0
        %1470 = vmatpush1.bf16.msra.mxu0 %v1454
        %1471 = vmatprep.subr.bf16.mxu0 0
        %1472 = vmatpush1.bf16.msra.mxu0 0
        %1473 = vmatprep.subr.bf16.mxu0 0
        %1474 = vmatpush1.bf16.msra.mxu0 0
        %1475 = vmatprep.subr.bf16.mxu0 0
        %1476 = vmatpush1.bf16.msra.mxu0 0
        %1477 = vmatprep.subr.bf16.mxu0 0
        %1478 = vmatpush1.bf16.msra.mxu0 0
        %1479 = vmatprep.subr.bf16.mxu0 0
        %1480 = vmatpush1.bf16.msra.mxu0 0
        %1481 = vmatprep.subr.bf16.mxu0 0
        %1482 = vmatpush1.bf16.msra.mxu0 0
        %1483 = vmatprep.subr.bf16.mxu0 0
        %1484 = vmatpush1.bf16.msra.mxu0 0
        %1485 = vmatprep.subr.bf16.mxu0 0
        %1486 = vmatpush1.bf16.msra.mxu0 0
        %1487 = vmatprep.subr.bf16.mxu0 0
        %1488 = vmatpush1.bf16.msra.mxu0 0
        %1489 = vmatprep.subr.bf16.mxu0 0
        %1490 = vmatpush1.bf16.msra.mxu0 0
        %1491 = vmatprep.subr.bf16.mxu0 0
        %1492 = vmatpush1.bf16.msra.mxu0 0
        %1493 = vmatprep.subr.bf16.mxu0 0
        %1494 = vmatpush1.bf16.msra.mxu0 0
        %1495 = vmatprep.mubr.bf16.mxu0 0
        %1496 = vmatmul.mubr.bf16.gmra.mrb[0].mxu0 %v1461
        %v1497 = vpop.f32.mrb[0].mxu0
        %v1498 = vadd.f32 0.0, %v1497
        %v1499 = vpop.f32.mrb[0].mxu0
        %v1500 = vpop.f32.mrb[0].mxu0
        %v1501 = vpop.f32.mrb[0].mxu0
        %1502 = vdwg.mxu0
        %v1503 = vadd.f32 %v1297, %v1498
        %v1504 = vld [vmem:[#allocation23] sm:$0x1]
        %v1506 = vlaneseq
        %v1507 = vshrl.u32 %v1506, 7
        %v1508 = vsub.s32 0, %v1507
        %v1509 = vrot.slane %v1504, %v1508
        %v1511 = vadd.f32 %v1503, %v1509
        %1512 = vst.msk [vmem:[%s644] sm:$0xff] %vm656, %v1511
        %s1513 = sand.u32 %s327, 1
        %s1514 = scalar_lea.sflag [#allocation5], %s1513
        %s1515 = sand.u32 %s327, 1
        %s1516 = smul.addr %s1515, 8
        %s1517 = scalar_lea.vmem [#allocation24], %s1516
        %s1518 = sand.u32 %s353, 1
        %s1519 = scalar_lea.sflag [#allocation26], %s1518
        %s1520 = sand.u32 %s353, 1
        %s1521 = smul.addr %s1520, 8
        %s1522 = scalar_lea.vmem [#allocation25], %s1521
        // Predicated region
        $region125: #{tpu_custom_call.1} parent=71 // pred_check
          %p1523 = pneg %p337
        $region126: #{tpu_custom_call.1} parent=71 // pred_check_branch
          %1525 = sbr.rel (%p1523) target = $region128
        $region127: #{tpu_custom_call.1} parent=71 // pred_region
          %s1527 = ssub.s32 128, 128
          %1528 = vsyncadd %s1514, %s1527
          %s1529 = smul.addr %s41, 128
          %s1530 = scalar_lea.hbm %s13, %s1529
          %s1532 = sshll.u32 %s1517, 4
          %s1533 = int_to_ptr.vmem [resolvable:$true] %s1532
          %1535 = dma.vmem_to_hbm [thread:$0]  %s1533, 128, %s1530, %s1514
        $region128: #{tpu_custom_call.1} parent=71 // pred_fallthru
          _
        // Predicated region
        $region129: #{tpu_custom_call.1} parent=71 // pred_check
          %p1536 = pneg %p363
        $region130: #{tpu_custom_call.1} parent=71 // pred_check_branch
          %1538 = sbr.rel (%p1536) target = $region132
        $region131: #{tpu_custom_call.1} parent=71 // pred_region
          %s1540 = ssub.s32 128, 128
          %1541 = vsyncadd %s1519, %s1540
          %s1542 = smul.addr %s41, 128
          %s1543 = scalar_lea.hbm %s14, %s1542
          %s1545 = sshll.u32 %s1522, 4
          %s1546 = int_to_ptr.vmem [resolvable:$true] %s1545
          %1548 = dma.vmem_to_hbm [thread:$0]  %s1546, 128, %s1543, %s1519
        $region132: #{tpu_custom_call.1} parent=71 // pred_fallthru
          _
      $region72: #{tpu_custom_call.1} parent=5 // pred_fallthru
        _
      %p1549 = scmp.le.s32.totalorder 2, %s36
      // Predicated region
      $region133: #{tpu_custom_call.1} parent=5 // pred_check
        %p1550 = pneg %p1549
      $region134: #{tpu_custom_call.1} parent=5 // pred_check_branch
        %1552 = sbr.rel (%p1550) target = $region136
      $region135: #{tpu_custom_call.1} parent=5 // pred_region
        %s1553 = ssub.s32 %s36, 2
        // Predicated region
        $region137: #{tpu_custom_call.1} parent=135 // pred_check
          %p1554 = pneg %p343
        $region138: #{tpu_custom_call.1} parent=135 // pred_check_branch
          %1556 = sbr.rel (%p1554) target = $region140
        $region139: #{tpu_custom_call.1} parent=135 // pred_region
          %s1557 = sand.u32 %s328, 1
          %s1558 = scalar_lea.sflag [#allocation5], %s1557
          %s1559 = sand.u32 %s328, 1
          %s1560 = smul.addr %s1559, 8
          %s1561 = scalar_lea.vmem [#allocation24], %s1560
          %1562 = dma.done %s1558, 128
        $region140: #{tpu_custom_call.1} parent=135 // pred_fallthru
          _
        // Predicated region
        $region141: #{tpu_custom_call.1} parent=135 // pred_check
          %p1563 = pneg %p369
        $region142: #{tpu_custom_call.1} parent=135 // pred_check_branch
          %1565 = sbr.rel (%p1563) target = $region144
        $region143: #{tpu_custom_call.1} parent=135 // pred_region
          %s1566 = sand.u32 %s354, 1
          %s1567 = scalar_lea.sflag [#allocation26], %s1566
          %s1568 = sand.u32 %s354, 1
          %s1569 = smul.addr %s1568, 8
          %s1570 = scalar_lea.vmem [#allocation25], %s1569
          %1571 = dma.done %s1567, 128
        $region144: #{tpu_custom_call.1} parent=135 // pred_fallthru
          _
      $region136: #{tpu_custom_call.1} parent=5 // pred_fallthru
        _
    $region6: #{tpu_custom_call.1} parent=1 // loop_footer
      %s40 = sadd.s32 1, %s36
    $region7: #{tpu_custom_call.1} parent=1 // loop_footer_branch
      %35 = sbr.rel target = $region3
    $region8: #{tpu_custom_call.1} parent=1 // loop_exit
      _
    %1572 = vsyncpa [#allocation4], 1
    %s1573 = scalar_lea.sflag [#allocation4], 1
    %1574 = vsyncpa %s1573, 1
    %1575 = vsyncpa [#allocation7], 1
    %1576 = vsyncpa [#allocation10], 1
    %1577 = vsyncpa [#allocation13], 1
    %1578 = vsyncpa [#allocation16], 1
    %1579 = vsyncpa [#allocation19], 1
    %1580 = vsyncpa [#allocation22], 1
    %1581 = vsyncpa [#allocation5], 1
    %s1582 = scalar_lea.sflag [#allocation5], 1
    %1583 = vsyncpa %s1582, 1
    %1584 = vsyncpa [#allocation26], 1
    %s1585 = scalar_lea.sflag [#allocation26], 1
    %1586 = vsyncpa %s1585, 1

</llo_original>
